<compile_context>
chip_gen: v5e
topology: v5e:2x2
jax: 0.10.0
libtpu: 0.0.40
codegen_flags: <defaults>
</compile_context>

<pallas_src>
import math
from functools import partial

import jax
import jax.numpy as jnp
from jax.experimental import pallas as pl
from jax.experimental.pallas import tpu as pltpu

RMS_EPS = 1.1920929e-07   # torch.finfo(float32).eps (F.rms_norm default when eps=None)
NEG_INF = -1e30           # underflows to exactly 0 after softmax (like -inf in torch)


# ------------------------------- small helpers --------------------------------

def _round_up(n, m):
    return ((n + m - 1) // m) * m


def _col_tile(n, target):
    """Column tile: full width if small, else an exact 128-multiple divisor."""
    if n <= target:
        return n
    for t in (target, 512, 256, 128):
        if n % t == 0:
            return t
    return n


def _kv_tile(skv, target=512):
    """KV tile: exact divisor (contraction over a ragged KV tile would be wrong)."""
    if skv <= target:
        return skv
    for t in range(target, 7, -1):
        if skv % t == 0 and t % 8 == 0:
            return t
    return skv


_VMEM_LIMIT = None


def _vmem_limit():
    """Explicit scoped-VMEM budget (v7x: 64 MiB physical; v5e default scope is 16 MiB)."""
    global _VMEM_LIMIT
    if _VMEM_LIMIT is None:
        cap = 64 * 1024 * 1024
        try:
            cap = int(getattr(pltpu.get_tpu_info(), "vmem_capacity_bytes", cap))
        except Exception:
            pass
        _VMEM_LIMIT = min((3 * cap) // 4, 96 * 1024 * 1024)
    return _VMEM_LIMIT


def _cparams(*dims):
    return pltpu.CompilerParams(dimension_semantics=tuple(dims),
                                vmem_limit_bytes=_vmem_limit())


def _qkv_layout(cfg):
    """True widths and 128-aligned offsets of the six fused TPA projection segments."""
    H, qr, r, hd = cfg["n_heads"], cfg["q_rank"], cfg["rank"], cfg["head_dim"]
    widths = [H * qr, H * r, H * r, qr * hd, r * hd, r * hd]
    offs, off = [], 0
    for w in widths:
        offs.append(off)
        off += _round_up(w, 128)
    return widths, offs, off


# ------------------------------- linear kernel --------------------------------

def _linear_kernel(x_ref, w_ref, o_ref, *, fuse_rms):
    x = x_ref[...].astype(jnp.float32)
    if fuse_rms:
        x = x * jax.lax.rsqrt(jnp.mean(x * x, axis=-1, keepdims=True) + RMS_EPS)
    o_ref[...] = jnp.dot(x.astype(jnp.bfloat16), w_ref[...],
                         preferred_element_type=jnp.float32).astype(o_ref.dtype)


def linear(x, w, *, fuse_rms=False, out_dtype=jnp.bfloat16, bm_target=256, bn_target=512):
    """(M, K) @ (K, N). Weights bf16, f32 MXU accumulation, bf16 (or f32) output.
    Optionally fuses the per-row RMS norm of x (norm over the full K) into the kernel."""
    M, K = x.shape
    N = w.shape[1]
    bm = min(bm_target, _round_up(M, 8))
    bn = _col_tile(N, bn_target)
    return pl.pallas_call(
        partial(_linear_kernel, fuse_rms=fuse_rms),
        out_shape=jax.ShapeDtypeStruct((M, N), out_dtype),
        grid=(pl.cdiv(M, bm), N // bn),
        in_specs=[pl.BlockSpec((bm, K), lambda i, j: (i, 0)),
                  pl.BlockSpec((K, bn), lambda i, j: (0, j))],
        out_specs=pl.BlockSpec((bm, bn), lambda i, j: (i, j)),
        compiler_params=_cparams("parallel", "parallel"),
    )(x, w)


# ------------------------------ fused SwiGLU MLP -------------------------------

def _mlp_kernel(x_ref, w1_ref, w2_ref, w3_ref, o_ref, xb_ref, *, fuse_rms):
    @pl.when(pl.program_id(1) == 0)
    def _():
        x = x_ref[...].astype(jnp.float32)
        if fuse_rms:
            x = x * jax.lax.rsqrt(jnp.mean(x * x, axis=-1, keepdims=True) + RMS_EPS)
        xb_ref[...] = x.astype(jnp.bfloat16)          # RMS done once per row tile
        o_ref[...] = jnp.zeros(o_ref.shape, o_ref.dtype)

    xb = xb_ref[...]
    h1 = jnp.dot(xb, w1_ref[...], preferred_element_type=jnp.float32)
    h2 = jnp.dot(xb, w2_ref[...], preferred_element_type=jnp.float32)
    h = (h1 * jax.nn.sigmoid(h1)) * h2                 # SiLU(h1) * h2 in f32
    part = jnp.dot(h.astype(jnp.bfloat16), w3_ref[...], preferred_element_type=jnp.float32)
    # Output block index is constant across the hidden axis -> block stays resident in
    # VMEM; accumulate directly into it (no extra f32 acc scratch).
    o_ref[...] = (o_ref[...].astype(jnp.float32) + part).astype(o_ref.dtype)


def mlp(x2d, w1, w2, w3, *, fuse_rms=False, bm_target=256, bh_target=512):
    M, D = x2d.shape
    Hh = w1.shape[1]
    bm = min(bm_target, _round_up(M, 8))
    bh = _col_tile(Hh, bh_target)                      # exact divisor or full width
    return pl.pallas_call(
        partial(_mlp_kernel, fuse_rms=fuse_rms),
        out_shape=jax.ShapeDtypeStruct((M, D), jnp.bfloat16),
        grid=(pl.cdiv(M, bm), Hh // bh),
        in_specs=[pl.BlockSpec((bm, D), lambda i, h: (i, 0)),
                  pl.BlockSpec((D, bh), lambda i, h: (0, h)),
                  pl.BlockSpec((D, bh), lambda i, h: (0, h)),
                  pl.BlockSpec((bh, D), lambda i, h: (h, 0))],
        out_specs=pl.BlockSpec((bm, D), lambda i, h: (i, 0)),
        scratch_shapes=[pltpu.VMEM((bm, D), jnp.bfloat16)],
        compiler_params=_cparams("parallel", "arbitrary"),
    )(x2d, w1, w2, w3)


# ----------------- fused TPA attention (factors -> q/k/v -> flash) -----------------

def _tpa_attn_kernel(aq_ref, bq_ref, ak_ref, bk_ref, av_ref, bv_ref, o_ref,
                     q_sc, m_sc, l_sc, acc_sc, *,
                     n_heads, q_rank, rank, head_dim, q_scale, kv_scale,
                     start_pos, tkv):
    j = pl.program_id(1)
    s_len = aq_ref.shape[1]

    def contract(a, b, h, r_count):
        # a: (T, H*r_count), b: (T, r_count*head_dim) -> (T, head_dim) for head h.
        # Tiny rank -> unrolled broadcast-MACs on the VPU (MXU would be 1-16 wide here).
        out = a[:, h * r_count:h * r_count + 1] * b[:, :head_dim]
        for rr in range(1, r_count):
            out = out + (a[:, h * r_count + rr:h * r_count + rr + 1]
                         * b[:, rr * head_dim:(rr + 1) * head_dim])
        return out

    @pl.when(j == 0)
    def _():
        aq = aq_ref[0].astype(jnp.float32)             # (S, H*qr)
        bq = bq_ref[0].astype(jnp.float32)             # (S, qr*hd)
        for h in range(n_heads):
            # 1/sqrt(head_dim) folded into the q factor scale.
            q_sc[h] = (contract(aq, bq, h, q_rank) * q_scale).astype(jnp.bfloat16)
        m_sc[...] = jnp.full(m_sc.shape, NEG_INF, m_sc.dtype)
        l_sc[...] = jnp.zeros(l_sc.shape, l_sc.dtype)
        acc_sc[...] = jnp.zeros(acc_sc.shape, acc_sc.dtype)

    ak = ak_ref[0].astype(jnp.float32)                 # (tkv, H*r)
    bk = bk_ref[0].astype(jnp.float32)                 # (tkv, r*hd)
    av = av_ref[0].astype(jnp.float32)
    bv = bv_ref[0].astype(jnp.float32)

    # Causal mask built in-kernel from iota (no HBM mask array).
    row = jax.lax.broadcasted_iota(jnp.int32, (s_len, tkv), 0) + start_pos
    col = jax.lax.broadcasted_iota(jnp.int32, (s_len, tkv), 1) + j * tkv
    allowed = col <= row

    for h in range(n_heads):
        kh = (contract(ak, bk, h, rank) * kv_scale).astype(jnp.bfloat16)
        vh = (contract(av, bv, h, rank) * kv_scale).astype(jnp.bfloat16)
        sc = jax.lax.dot_general(q_sc[h], kh, (((1,), (1,)), ((), ())),
                                 preferred_element_type=jnp.float32)       # (S, tkv)
        sc = jnp.where(allowed, sc, NEG_INF)
        m_prev = m_sc[h]
        m_new = jnp.maximum(m_prev, jnp.max(sc, axis=-1, keepdims=True))
        alpha = jnp.exp(m_prev - m_new)                                    # f32, EUP
        p = jnp.exp(sc - m_new)
        l_sc[h] = alpha * l_sc[h] + jnp.sum(p, axis=-1, keepdims=True)
        acc_sc[h] = alpha * acc_sc[h] + jax.lax.dot_general(
            p.astype(jnp.bfloat16), vh, (((1,), (0,)), ((), ())),
            preferred_element_type=jnp.float32)
        m_sc[h] = m_new

    @pl.when(j == pl.num_programs(1) - 1)
    def _():
        outs = [acc_sc[h] * pl.reciprocal(l_sc[h], approx=True)
                for h in range(n_heads)]
        # Lane-dense (S, H*hd) output slab -> feeds the wo matmul with no transpose.
        o_ref[0] = jnp.concatenate(outs, axis=-1).astype(o_ref.dtype)


def tpa_flash_attention(a_q, b_q, a_k, b_k, a_v, b_v, cfg, start_pos):
    """Fused factor-contraction + causal flash attention.
    a_q:(B,S,H*qr) b_q:(B,S,qr*hd) a_k/a_v:(B,Skv,H*r) b_k/b_v:(B,Skv,r*hd), all bf16.
    Returns (B, S, H*hd) bf16."""
    B, S, _ = a_q.shape
    Skv = a_k.shape[1]
    H, qr, r, hd = cfg["n_heads"], cfg["q_rank"], cfg["rank"], cfg["head_dim"]
    tkv = _kv_tile(Skv)
    q_scale = 1.0 / (qr * math.sqrt(hd))
    kv_scale = 1.0 / r
    kernel = partial(_tpa_attn_kernel, n_heads=H, q_rank=qr, rank=r, head_dim=hd,
                     q_scale=q_scale, kv_scale=kv_scale, start_pos=start_pos, tkv=tkv)
    # TODO(synk): tile the query axis too for very long prefill sequences.
    return pl.pallas_call(
        kernel,
        out_shape=jax.ShapeDtypeStruct((B, S, H * hd), jnp.bfloat16),
        grid=(B, Skv // tkv),
        in_specs=[pl.BlockSpec((1, S, H * qr), lambda b, j: (b, 0, 0)),
                  pl.BlockSpec((1, S, qr * hd), lambda b, j: (b, 0, 0)),
                  pl.BlockSpec((1, tkv, H * r), lambda b, j: (b, j, 0)),
                  pl.BlockSpec((1, tkv, r * hd), lambda b, j: (b, j, 0)),
                  pl.BlockSpec((1, tkv, H * r), lambda b, j: (b, j, 0)),
                  pl.BlockSpec((1, tkv, r * hd), lambda b, j: (b, j, 0))],
        out_specs=pl.BlockSpec((1, S, H * hd), lambda b, j: (b, 0, 0)),
        scratch_shapes=[pltpu.VMEM((H, S, hd), jnp.bfloat16),   # q factors (built once)
                        pltpu.VMEM((H, S, 1), jnp.float32),     # running max
                        pltpu.VMEM((H, S, 1), jnp.float32),     # running sum
                        pltpu.VMEM((H, S, hd), jnp.float32)],   # f32 accumulator
        compiler_params=_cparams("parallel", "arbitrary"),
    )(a_q, b_q, a_k, b_k, a_v, b_v)


# --------------------------------- JAX glue -----------------------------------

def precompute_freqs(head_dim, end, theta):
    freqs = 1.0 / theta ** (jnp.arange(0, head_dim, 2)[: head_dim // 2].astype(jnp.float32)
                            / head_dim)
    t = jnp.arange(end, dtype=jnp.float32)
    f = jnp.outer(t, freqs)
    return jnp.cos(f), jnp.sin(f)


def apply_rope(x, cos, sin):
    """x: (b, s, r, d); cos/sin: (s, d//2). Matches torch complex rotary (f32 math)."""
    b, s, r, d = x.shape
    xr = x.astype(jnp.float32).reshape(b, s, r, d // 2, 2)
    x0, x1 = xr[..., 0], xr[..., 1]
    c = cos[None, :, None, :]
    sn = sin[None, :, None, :]
    o0 = x0 * c - x1 * sn
    o1 = x0 * sn + x1 * c
    return jnp.stack([o0, o1], axis=-1).reshape(b, s, r, d)


def tpa_attention(h2d, b, s, p, cos, sin, cfg, start_pos):
    H, qr, r, hd = cfg["n_heads"], cfg["q_rank"], cfg["rank"], cfg["head_dim"]
    widths, offs, _ = _qkv_layout(cfg)

    # Fused RMS-norm + all six TPA projections in one lane-dense matmul; the segments
    # inside W_qkv are 128-column aligned so these slices are lane-aligned (cheap).
    qkv = linear(h2d, p["W_qkv"], fuse_rms=True)          # (b*s, total) bf16

    def seg(i):
        return qkv[:, offs[i]:offs[i] + widths[i]]

    A_q = seg(0).reshape(b, s, H * qr)
    A_k = seg(1).reshape(b, s, H * r)
    A_v = seg(2).reshape(b, s, H * r)
    B_q = apply_rope(seg(3).reshape(b, s, qr, hd), cos, sin) \
        .reshape(b, s, qr * hd).astype(jnp.bfloat16)
    B_k = apply_rope(seg(4).reshape(b, s, r, hd), cos, sin) \
        .reshape(b, s, r * hd).astype(jnp.bfloat16)
    B_v = seg(5).reshape(b, s, r * hd)

    # TODO(synk): stateful KV cache (cache_kA/vA/kB/vB) is an identity read-back for the
    # start_pos=0 prefill path modelled here; decode-time cache append is not modelled.
    o = tpa_flash_attention(A_q, B_q, A_k, B_k, A_v, B_v, cfg, start_pos)  # (b,s,H*hd)
    return linear(o.reshape(b * s, H * hd), p["wo"])


def t6_block(h, p, cos, sin, cfg, start_pos):
    b, s, dim = h.shape
    h2 = h.reshape(b * s, dim)
    h = h + tpa_attention(h2, b, s, p, cos, sin, cfg, start_pos).reshape(b, s, dim)
    h2 = h.reshape(b * s, dim)
    h = h + mlp(h2, p["c_fc1"], p["c_fc2"], p["c_proj"], fuse_rms=True).reshape(b, s, dim)
    return h


def t6_forward(tokens, params, cfg, start_pos=0):
    b, s = tokens.shape
    dim = cfg["dim"]
    # bf16 residual stream: all inter-kernel activations travel HBM in bf16.
    h = jnp.take(params["tok_embeddings"], tokens, axis=0).astype(jnp.bfloat16)
    cos = params["cos"][start_pos:start_pos + s]
    sin = params["sin"][start_pos:start_pos + s]
    for lp in params["layers"]:
        h = t6_block(h, lp, cos, sin, cfg, start_pos)
    logits = linear(h.reshape(b * s, dim), params["output"],
                    fuse_rms=True, out_dtype=jnp.float32)   # fused final RMS norm
    return logits.reshape(b, s, cfg["vocab_size"])


# ------------------------------ parameter init --------------------------------

def init_params(key, cfg):
    dim, vocab = cfg["dim"], cfg["vocab_size"]
    H, qr, r, hd = cfg["n_heads"], cfg["q_rank"], cfg["rank"], cfg["head_dim"]
    hidden = math.floor(8 / 3 * dim)

    def dense(k, fan_in, fan_out, pad_to=None):
        w = jax.random.normal(k, (fan_in, fan_out), jnp.float32) * (1.0 / math.sqrt(fan_in))
        w = w.astype(jnp.bfloat16)          # weights stored bf16; f32 MXU accumulation
        if pad_to is not None and pad_to > fan_out:
            w = jnp.pad(w, ((0, 0), (0, pad_to - fan_out)))
        return w

    widths, _, _ = _qkv_layout(cfg)
    keys = iter(jax.random.split(key, 2 + cfg["n_layers"] * 10))
    params = {
        "tok_embeddings": jax.random.normal(next(keys), (vocab, dim), jnp.float32) * 0.02,
        "output": dense(next(keys), dim, vocab),
        "layers": [],
    }
    for _ in range(cfg["n_layers"]):
        # Six TPA projection weights fused into one matmul; each segment zero-padded to a
        # 128-column boundary so downstream activation slices are lane-aligned.
        segs = [dense(next(keys), dim, w, pad_to=_round_up(w, 128)) for w in widths]
        lp = {
            "W_qkv": jnp.concatenate(segs, axis=1),
            "wo": dense(next(keys), H * hd, dim),      # torch zero-inits; random here
            "c_fc1": dense(next(keys), dim, hidden),
            "c_fc2": dense(next(keys), dim, hidden),
            "c_proj": dense(next(keys), hidden, dim),  # torch zero-inits; random here
        }
        params["layers"].append(lp)
    cos, sin = precompute_freqs(hd, cfg["max_seq_len"] * 2, cfg["rope_theta"])
    params["cos"], params["sin"] = cos, sin
    return params


# ----------------------------------- main --------------------------------------

if __name__ == "__main__":
    cfg = dict(
        dim=64, n_layers=2, n_heads=4, head_dim=16,
        q_rank=12, rank=2, vocab_size=64,
        max_seq_len=16, rope_theta=500000.0,
    )
    batch, seqlen, start_pos = 2, 8, 0

    key = jax.random.PRNGKey(0)
    pkey, tkey = jax.random.split(key)
    params = init_params(pkey, cfg)
    tokens = jax.random.randint(tkey, (batch, seqlen), 0, cfg["vocab_size"], dtype=jnp.int32)

    fwd = jax.jit(lambda tok, prm: t6_forward(tok, prm, cfg, start_pos=start_pos))
    logits = fwd(tokens, params)
    jax.block_until_ready(logits)

    assert logits.shape == (batch, seqlen, cfg["vocab_size"])
    assert logits.dtype == jnp.float32
    assert bool(jnp.all(jnp.isfinite(logits)))
    print("KERNEL_OK")
</pallas_src>

<mosaic_0001>
module attributes {stable_mosaic.version = 11 : i64} {
  func.func @_linear_kernel(%arg0: i32, %arg1: i32, %arg2: memref<16x64xbf16, #tpu.memory_space<vmem>>, %arg3: memref<64x128xbf16, #tpu.memory_space<vmem>>, %arg4: memref<16x128xbf16, #tpu.memory_space<vmem>>) attributes {dimension_semantics = [#tpu.dimension_semantics<parallel>, #tpu.dimension_semantics<parallel>], iteration_bounds = array<i64: 1, 7>, scalar_prefetch = 0 : i64, scratch_operands = 0 : i64, tpu.core_type = #tpu.core_type<tc>, window_params = [{transform_indices = @transform_0, window_bounds = array<i64: 16, 64>}, {transform_indices = @transform_1, window_bounds = array<i64: 64, 128>}, {transform_indices = @transform_2, window_bounds = array<i64: 16, 128>}]} {
    %c0 = arith.constant 0 : index
    %c0_0 = arith.constant 0 : index
    %0 = vector.load %arg2[%c0, %c0_0] : memref<16x64xbf16, #tpu.memory_space<vmem>>, vector<16x64xbf16>
    %1 = arith.extf %0 : vector<16x64xbf16> to vector<16x64xf32>
    %2 = arith.mulf %1, %1 : vector<16x64xf32>
    %cst = arith.constant dense<0.000000e+00> : vector<16xf32>
    %3 = vector.multi_reduction <add>, %2, %cst [1] : vector<16x64xf32> to vector<16xf32>
    %4 = vector.shape_cast %3 : vector<16xf32> to vector<16x1xf32>
    %cst_1 = arith.constant 6.400000e+01 : f32
    %5 = vector.broadcast %cst_1 : f32 to vector<16x1xf32>
    %6 = arith.divf %4, %5 : vector<16x1xf32>
    %cst_2 = arith.constant 1.1920929E-7 : f32
    %7 = vector.broadcast %cst_2 : f32 to vector<16x1xf32>
    %8 = arith.addf %6, %7 : vector<16x1xf32>
    %9 = math.rsqrt %8 : vector<16x1xf32>
    %10 = vector.broadcast %9 : vector<16x1xf32> to vector<16x64xf32>
    %11 = arith.mulf %1, %10 : vector<16x64xf32>
    %12 = arith.truncf %11 : vector<16x64xf32> to vector<16x64xbf16>
    %c0_3 = arith.constant 0 : index
    %c0_4 = arith.constant 0 : index
    %13 = vector.load %arg3[%c0_3, %c0_4] : memref<64x128xbf16, #tpu.memory_space<vmem>>, vector<64x128xbf16>
    %cst_5 = arith.constant dense<0.000000e+00> : vector<16x128xf32>
    %14 = tpu.matmul %12, %13, %cst_5 {dimension_numbers = #tpu.dot_dimension_numbers<[1], [0], [0], [1], [0, 0, 1, 1], [], []>} : vector<16x64xbf16>, vector<64x128xbf16>, vector<16x128xf32> -> vector<16x128xf32>
    %15 = arith.truncf %14 : vector<16x128xf32> to vector<16x128xbf16>
    %c0_6 = arith.constant 0 : index
    %c0_7 = arith.constant 0 : index
    %16 = vector.load %arg4[%c0_6, %c0_7] : memref<16x128xbf16, #tpu.memory_space<vmem>>, vector<16x128xbf16>
    tpu.vector_store %arg4[%c0_6, %c0_7], %15 {strides = array<i32>} : memref<16x128xbf16, #tpu.memory_space<vmem>>, vector<16x128xbf16>,
    return
  }
  func.func @transform_0(%arg0: i32, %arg1: i32) -> (i32, i32) {
    %c0_i32 = arith.constant 0 : i32
    %c0_i32_0 = arith.constant 0 : i32
    return %arg0, %c0_i32 : i32, i32
  }
  func.func @transform_1(%arg0: i32, %arg1: i32) -> (i32, i32) {
    %c0_i32 = arith.constant 0 : i32
    %c0_i32_0 = arith.constant 0 : i32
    return %c0_i32, %arg1 : i32, i32
  }
  func.func @transform_2(%arg0: i32, %arg1: i32) -> (i32, i32) {
    %c0_i32 = arith.constant 0 : i32
    return %arg0, %arg1 : i32, i32
  }
}

module attributes {stable_mosaic.version = 11 : i64} {
  func.func @_linear_kernel(%arg0: i32, %arg1: i32, %arg2: memref<16x64xbf16, #tpu.memory_space<vmem>>, %arg3: memref<64x64xbf16, #tpu.memory_space<vmem>>, %arg4: memref<16x64xbf16, #tpu.memory_space<vmem>>) attributes {dimension_semantics = [#tpu.dimension_semantics<parallel>, #tpu.dimension_semantics<parallel>], iteration_bounds = array<i64: 1, 1>, scalar_prefetch = 0 : i64, scratch_operands = 0 : i64, tpu.core_type = #tpu.core_type<tc>, window_params = [{transform_indices = @transform_0, window_bounds = array<i64: 16, 64>}, {transform_indices = @transform_1, window_bounds = array<i64: 64, 64>}, {transform_indices = @transform_2, window_bounds = array<i64: 16, 64>}]} {
    %c0 = arith.constant 0 : index
    %c0_0 = arith.constant 0 : index
    %0 = vector.load %arg2[%c0, %c0_0] : memref<16x64xbf16, #tpu.memory_space<vmem>>, vector<16x64xbf16>
    %1 = arith.extf %0 : vector<16x64xbf16> to vector<16x64xf32>
    %2 = arith.truncf %1 : vector<16x64xf32> to vector<16x64xbf16>
    %c0_1 = arith.constant 0 : index
    %c0_2 = arith.constant 0 : index
    %3 = vector.load %arg3[%c0_1, %c0_2] : memref<64x64xbf16, #tpu.memory_space<vmem>>, vector<64x64xbf16>
    %cst = arith.constant dense<0.000000e+00> : vector<16x64xf32>
    %4 = tpu.matmul %2, %3, %cst {dimension_numbers = #tpu.dot_dimension_numbers<[1], [0], [0], [1], [0, 0, 1, 1], [], []>} : vector<16x64xbf16>, vector<64x64xbf16>, vector<16x64xf32> -> vector<16x64xf32>
    %5 = arith.truncf %4 : vector<16x64xf32> to vector<16x64xbf16>
    %c0_3 = arith.constant 0 : index
    %c0_4 = arith.constant 0 : index
    %6 = vector.load %arg4[%c0_3, %c0_4] : memref<16x64xbf16, #tpu.memory_space<vmem>>, vector<16x64xbf16>
    tpu.vector_store %arg4[%c0_3, %c0_4], %5 {strides = array<i32>} : memref<16x64xbf16, #tpu.memory_space<vmem>>, vector<16x64xbf16>,
    return
  }
  func.func @transform_0(%arg0: i32, %arg1: i32) -> (i32, i32) {
    %c0_i32 = arith.constant 0 : i32
    %c0_i32_0 = arith.constant 0 : i32
    return %arg0, %c0_i32 : i32, i32
  }
  func.func @transform_1(%arg0: i32, %arg1: i32) -> (i32, i32) {
    %c0_i32 = arith.constant 0 : i32
    %c0_i32_0 = arith.constant 0 : i32
    return %c0_i32, %arg1 : i32, i32
  }
  func.func @transform_2(%arg0: i32, %arg1: i32) -> (i32, i32) {
    %c0_i32 = arith.constant 0 : i32
    return %arg0, %arg1 : i32, i32
  }
}

module attributes {stable_mosaic.version = 11 : i64} {
  func.func @_tpa_attn_kernel(%arg0: i32, %arg1: i32, %arg2: memref<1x8x48xbf16, #tpu.memory_space<vmem>>, %arg3: memref<1x8x192xbf16, #tpu.memory_space<vmem>>, %arg4: memref<1x8x8xbf16, #tpu.memory_space<vmem>>, %arg5: memref<1x8x32xbf16, #tpu.memory_space<vmem>>, %arg6: memref<1x8x8xbf16, #tpu.memory_space<vmem>>, %arg7: memref<1x8x32xbf16, #tpu.memory_space<vmem>>, %arg8: memref<1x8x64xbf16, #tpu.memory_space<vmem>>, %arg9: memref<4x8x16xbf16, #tpu.memory_space<vmem>>, %arg10: memref<4x8x1xf32, #tpu.memory_space<vmem>>, %arg11: memref<4x8x1xf32, #tpu.memory_space<vmem>>, %arg12: memref<4x8x16xf32, #tpu.memory_space<vmem>>) attributes {dimension_semantics = [#tpu.dimension_semantics<parallel>, #tpu.dimension_semantics<arbitrary>], iteration_bounds = array<i64: 2, 1>, scalar_prefetch = 0 : i64, scratch_operands = 4 : i64, tpu.core_type = #tpu.core_type<tc>, window_params = [{transform_indices = @transform_0, window_bounds = array<i64: 1, 8, 48>}, {transform_indices = @transform_1, window_bounds = array<i64: 1, 8, 192>}, {transform_indices = @transform_2, window_bounds = array<i64: 1, 8, 8>}, {transform_indices = @transform_3, window_bounds = array<i64: 1, 8, 32>}, {transform_indices = @transform_4, window_bounds = array<i64: 1, 8, 8>}, {transform_indices = @transform_5, window_bounds = array<i64: 1, 8, 32>}, {transform_indices = @transform_6, window_bounds = array<i64: 1, 8, 64>}]} {
    %c0_i32 = arith.constant 0 : i32
    %0 = arith.cmpi eq, %arg1, %c0_i32 : i32
    %1 = arith.extui %0 : i1 to i32
    %c0_i32_0 = arith.constant 0 : i32
    %2 = arith.cmpi ne, %1, %c0_i32_0 : i32
    scf.if %2 {
      %c0_123 = arith.constant 0 : index
      %c0_124 = arith.constant 0 : index
      %c0_125 = arith.constant 0 : index
      %270 = vector.load %arg2[%c0_123, %c0_124, %c0_125] : memref<1x8x48xbf16, #tpu.memory_space<vmem>>, vector<1x8x48xbf16>
      %271 = vector.shape_cast %270 : vector<1x8x48xbf16> to vector<8x48xbf16>
      %272 = arith.extf %271 : vector<8x48xbf16> to vector<8x48xf32>
      %c0_126 = arith.constant 0 : index
      %c0_127 = arith.constant 0 : index
      %c0_128 = arith.constant 0 : index
      %273 = vector.load %arg3[%c0_126, %c0_127, %c0_128] : memref<1x8x192xbf16, #tpu.memory_space<vmem>>, vector<1x8x192xbf16>
      %274 = vector.shape_cast %273 : vector<1x8x192xbf16> to vector<8x192xbf16>
      %275 = arith.extf %274 : vector<8x192xbf16> to vector<8x192xf32>
      %276 = vector.extract_strided_slice %272 {offsets = [0, 0], sizes = [8, 1], strides = [1, 1]} : vector<8x48xf32> to vector<8x1xf32>
      %277 = vector.extract_strided_slice %275 {offsets = [0, 0], sizes = [8, 16], strides = [1, 1]} : vector<8x192xf32> to vector<8x16xf32>
      %278 = vector.broadcast %276 : vector<8x1xf32> to vector<8x16xf32>
      %279 = arith.mulf %278, %277 : vector<8x16xf32>
      %280 = vector.extract_strided_slice %272 {offsets = [0, 1], sizes = [8, 1], strides = [1, 1]} : vector<8x48xf32> to vector<8x1xf32>
      %281 = vector.extract_strided_slice %275 {offsets = [0, 16], sizes = [8, 16], strides = [1, 1]} : vector<8x192xf32> to vector<8x16xf32>
      %282 = vector.broadcast %280 : vector<8x1xf32> to vector<8x16xf32>
      %283 = arith.mulf %282, %281 : vector<8x16xf32>
      %284 = arith.addf %279, %283 : vector<8x16xf32>
      %285 = vector.extract_strided_slice %272 {offsets = [0, 2], sizes = [8, 1], strides = [1, 1]} : vector<8x48xf32> to vector<8x1xf32>
      %286 = vector.extract_strided_slice %275 {offsets = [0, 32], sizes = [8, 16], strides = [1, 1]} : vector<8x192xf32> to vector<8x16xf32>
      %287 = vector.broadcast %285 : vector<8x1xf32> to vector<8x16xf32>
      %288 = arith.mulf %287, %286 : vector<8x16xf32>
      %289 = arith.addf %284, %288 : vector<8x16xf32>
      %290 = vector.extract_strided_slice %272 {offsets = [0, 3], sizes = [8, 1], strides = [1, 1]} : vector<8x48xf32> to vector<8x1xf32>
      %291 = vector.extract_strided_slice %275 {offsets = [0, 48], sizes = [8, 16], strides = [1, 1]} : vector<8x192xf32> to vector<8x16xf32>
      %292 = vector.broadcast %290 : vector<8x1xf32> to vector<8x16xf32>
      %293 = arith.mulf %292, %291 : vector<8x16xf32>
      %294 = arith.addf %289, %293 : vector<8x16xf32>
      %295 = vector.extract_strided_slice %272 {offsets = [0, 4], sizes = [8, 1], strides = [1, 1]} : vector<8x48xf32> to vector<8x1xf32>
      %296 = vector.extract_strided_slice %275 {offsets = [0, 64], sizes = [8, 16], strides = [1, 1]} : vector<8x192xf32> to vector<8x16xf32>
      %297 = vector.broadcast %295 : vector<8x1xf32> to vector<8x16xf32>
      %298 = arith.mulf %297, %296 : vector<8x16xf32>
      %299 = arith.addf %294, %298 : vector<8x16xf32>
      %300 = vector.extract_strided_slice %272 {offsets = [0, 5], sizes = [8, 1], strides = [1, 1]} : vector<8x48xf32> to vector<8x1xf32>
      %301 = vector.extract_strided_slice %275 {offsets = [0, 80], sizes = [8, 16], strides = [1, 1]} : vector<8x192xf32> to vector<8x16xf32>
      %302 = vector.broadcast %300 : vector<8x1xf32> to vector<8x16xf32>
      %303 = arith.mulf %302, %301 : vector<8x16xf32>
      %304 = arith.addf %299, %303 : vector<8x16xf32>
      %305 = vector.extract_strided_slice %272 {offsets = [0, 6], sizes = [8, 1], strides = [1, 1]} : vector<8x48xf32> to vector<8x1xf32>
      %306 = vector.extract_strided_slice %275 {offsets = [0, 96], sizes = [8, 16], strides = [1, 1]} : vector<8x192xf32> to vector<8x16xf32>
      %307 = vector.broadcast %305 : vector<8x1xf32> to vector<8x16xf32>
      %308 = arith.mulf %307, %306 : vector<8x16xf32>
      %309 = arith.addf %304, %308 : vector<8x16xf32>
      %310 = vector.extract_strided_slice %272 {offsets = [0, 7], sizes = [8, 1], strides = [1, 1]} : vector<8x48xf32> to vector<8x1xf32>
      %311 = vector.extract_strided_slice %275 {offsets = [0, 112], sizes = [8, 16], strides = [1, 1]} : vector<8x192xf32> to vector<8x16xf32>
      %312 = vector.broadcast %310 : vector<8x1xf32> to vector<8x16xf32>
      %313 = arith.mulf %312, %311 : vector<8x16xf32>
      %314 = arith.addf %309, %313 : vector<8x16xf32>
      %315 = vector.extract_strided_slice %272 {offsets = [0, 8], sizes = [8, 1], strides = [1, 1]} : vector<8x48xf32> to vector<8x1xf32>
      %316 = vector.extract_strided_slice %275 {offsets = [0, 128], sizes = [8, 16], strides = [1, 1]} : vector<8x192xf32> to vector<8x16xf32>
      %317 = vector.broadcast %315 : vector<8x1xf32> to vector<8x16xf32>
      %318 = arith.mulf %317, %316 : vector<8x16xf32>
      %319 = arith.addf %314, %318 : vector<8x16xf32>
      %320 = vector.extract_strided_slice %272 {offsets = [0, 9], sizes = [8, 1], strides = [1, 1]} : vector<8x48xf32> to vector<8x1xf32>
      %321 = vector.extract_strided_slice %275 {offsets = [0, 144], sizes = [8, 16], strides = [1, 1]} : vector<8x192xf32> to vector<8x16xf32>
      %322 = vector.broadcast %320 : vector<8x1xf32> to vector<8x16xf32>
      %323 = arith.mulf %322, %321 : vector<8x16xf32>
      %324 = arith.addf %319, %323 : vector<8x16xf32>
      %325 = vector.extract_strided_slice %272 {offsets = [0, 10], sizes = [8, 1], strides = [1, 1]} : vector<8x48xf32> to vector<8x1xf32>
      %326 = vector.extract_strided_slice %275 {offsets = [0, 160], sizes = [8, 16], strides = [1, 1]} : vector<8x192xf32> to vector<8x16xf32>
      %327 = vector.broadcast %325 : vector<8x1xf32> to vector<8x16xf32>
      %328 = arith.mulf %327, %326 : vector<8x16xf32>
      %329 = arith.addf %324, %328 : vector<8x16xf32>
      %330 = vector.extract_strided_slice %272 {offsets = [0, 11], sizes = [8, 1], strides = [1, 1]} : vector<8x48xf32> to vector<8x1xf32>
      %331 = vector.extract_strided_slice %275 {offsets = [0, 176], sizes = [8, 16], strides = [1, 1]} : vector<8x192xf32> to vector<8x16xf32>
      %332 = vector.broadcast %330 : vector<8x1xf32> to vector<8x16xf32>
      %333 = arith.mulf %332, %331 : vector<8x16xf32>
      %334 = arith.addf %329, %333 : vector<8x16xf32>
      %cst_129 = arith.constant 0.020833334 : f32
      %335 = vector.broadcast %cst_129 : f32 to vector<8x16xf32>
      %336 = arith.mulf %334, %335 : vector<8x16xf32>
      %337 = arith.truncf %336 : vector<8x16xf32> to vector<8x16xbf16>
      %c0_130 = arith.constant 0 : index
      %c0_131 = arith.constant 0 : index
      %c0_132 = arith.constant 0 : index
      %338 = vector.load %arg9[%c0_130, %c0_131, %c0_132] : memref<4x8x16xbf16, #tpu.memory_space<vmem>>, vector<1x8x16xbf16>
      %339 = vector.shape_cast %338 : vector<1x8x16xbf16> to vector<8x16xbf16>
      %340 = vector.shape_cast %337 : vector<8x16xbf16> to vector<1x8x16xbf16>
      tpu.vector_store %arg9[%c0_130, %c0_131, %c0_132], %340 {strides = array<i32>} : memref<4x8x16xbf16, #tpu.memory_space<vmem>>, vector<1x8x16xbf16>,
      %341 = vector.extract_strided_slice %272 {offsets = [0, 12], sizes = [8, 1], strides = [1, 1]} : vector<8x48xf32> to vector<8x1xf32>
      %342 = vector.extract_strided_slice %275 {offsets = [0, 0], sizes = [8, 16], strides = [1, 1]} : vector<8x192xf32> to vector<8x16xf32>
      %343 = vector.broadcast %341 : vector<8x1xf32> to vector<8x16xf32>
      %344 = arith.mulf %343, %342 : vector<8x16xf32>
      %345 = vector.extract_strided_slice %272 {offsets = [0, 13], sizes = [8, 1], strides = [1, 1]} : vector<8x48xf32> to vector<8x1xf32>
      %346 = vector.extract_strided_slice %275 {offsets = [0, 16], sizes = [8, 16], strides = [1, 1]} : vector<8x192xf32> to vector<8x16xf32>
      %347 = vector.broadcast %345 : vector<8x1xf32> to vector<8x16xf32>
      %348 = arith.mulf %347, %346 : vector<8x16xf32>
      %349 = arith.addf %344, %348 : vector<8x16xf32>
      %350 = vector.extract_strided_slice %272 {offsets = [0, 14], sizes = [8, 1], strides = [1, 1]} : vector<8x48xf32> to vector<8x1xf32>
      %351 = vector.extract_strided_slice %275 {offsets = [0, 32], sizes = [8, 16], strides = [1, 1]} : vector<8x192xf32> to vector<8x16xf32>
      %352 = vector.broadcast %350 : vector<8x1xf32> to vector<8x16xf32>
      %353 = arith.mulf %352, %351 : vector<8x16xf32>
      %354 = arith.addf %349, %353 : vector<8x16xf32>
      %355 = vector.extract_strided_slice %272 {offsets = [0, 15], sizes = [8, 1], strides = [1, 1]} : vector<8x48xf32> to vector<8x1xf32>
      %356 = vector.extract_strided_slice %275 {offsets = [0, 48], sizes = [8, 16], strides = [1, 1]} : vector<8x192xf32> to vector<8x16xf32>
      %357 = vector.broadcast %355 : vector<8x1xf32> to vector<8x16xf32>
      %358 = arith.mulf %357, %356 : vector<8x16xf32>
      %359 = arith.addf %354, %358 : vector<8x16xf32>
      %360 = vector.extract_strided_slice %272 {offsets = [0, 16], sizes = [8, 1], strides = [1, 1]} : vector<8x48xf32> to vector<8x1xf32>
      %361 = vector.extract_strided_slice %275 {offsets = [0, 64], sizes = [8, 16], strides = [1, 1]} : vector<8x192xf32> to vector<8x16xf32>
      %362 = vector.broadcast %360 : vector<8x1xf32> to vector<8x16xf32>
      %363 = arith.mulf %362, %361 : vector<8x16xf32>
      %364 = arith.addf %359, %363 : vector<8x16xf32>
      %365 = vector.extract_strided_slice %272 {offsets = [0, 17], sizes = [8, 1], strides = [1, 1]} : vector<8x48xf32> to vector<8x1xf32>
      %366 = vector.extract_strided_slice %275 {offsets = [0, 80], sizes = [8, 16], strides = [1, 1]} : vector<8x192xf32> to vector<8x16xf32>
      %367 = vector.broadcast %365 : vector<8x1xf32> to vector<8x16xf32>
      %368 = arith.mulf %367, %366 : vector<8x16xf32>
      %369 = arith.addf %364, %368 : vector<8x16xf32>
      %370 = vector.extract_strided_slice %272 {offsets = [0, 18], sizes = [8, 1], strides = [1, 1]} : vector<8x48xf32> to vector<8x1xf32>
      %371 = vector.extract_strided_slice %275 {offsets = [0, 96], sizes = [8, 16], strides = [1, 1]} : vector<8x192xf32> to vector<8x16xf32>
      %372 = vector.broadcast %370 : vector<8x1xf32> to vector<8x16xf32>
      %373 = arith.mulf %372, %371 : vector<8x16xf32>
      %374 = arith.addf %369, %373 : vector<8x16xf32>
      %375 = vector.extract_strided_slice %272 {offsets = [0, 19], sizes = [8, 1], strides = [1, 1]} : vector<8x48xf32> to vector<8x1xf32>
      %376 = vector.extract_strided_slice %275 {offsets = [0, 112], sizes = [8, 16], strides = [1, 1]} : vector<8x192xf32> to vector<8x16xf32>
      %377 = vector.broadcast %375 : vector<8x1xf32> to vector<8x16xf32>
      %378 = arith.mulf %377, %376 : vector<8x16xf32>
      %379 = arith.addf %374, %378 : vector<8x16xf32>
      %380 = vector.extract_strided_slice %272 {offsets = [0, 20], sizes = [8, 1], strides = [1, 1]} : vector<8x48xf32> to vector<8x1xf32>
      %381 = vector.extract_strided_slice %275 {offsets = [0, 128], sizes = [8, 16], strides = [1, 1]} : vector<8x192xf32> to vector<8x16xf32>
      %382 = vector.broadcast %380 : vector<8x1xf32> to vector<8x16xf32>
      %383 = arith.mulf %382, %381 : vector<8x16xf32>
      %384 = arith.addf %379, %383 : vector<8x16xf32>
      %385 = vector.extract_strided_slice %272 {offsets = [0, 21], sizes = [8, 1], strides = [1, 1]} : vector<8x48xf32> to vector<8x1xf32>
      %386 = vector.extract_strided_slice %275 {offsets = [0, 144], sizes = [8, 16], strides = [1, 1]} : vector<8x192xf32> to vector<8x16xf32>
      %387 = vector.broadcast %385 : vector<8x1xf32> to vector<8x16xf32>
      %388 = arith.mulf %387, %386 : vector<8x16xf32>
      %389 = arith.addf %384, %388 : vector<8x16xf32>
      %390 = vector.extract_strided_slice %272 {offsets = [0, 22], sizes = [8, 1], strides = [1, 1]} : vector<8x48xf32> to vector<8x1xf32>
      %391 = vector.extract_strided_slice %275 {offsets = [0, 160], sizes = [8, 16], strides = [1, 1]} : vector<8x192xf32> to vector<8x16xf32>
      %392 = vector.broadcast %390 : vector<8x1xf32> to vector<8x16xf32>
      %393 = arith.mulf %392, %391 : vector<8x16xf32>
      %394 = arith.addf %389, %393 : vector<8x16xf32>
      %395 = vector.extract_strided_slice %272 {offsets = [0, 23], sizes = [8, 1], strides = [1, 1]} : vector<8x48xf32> to vector<8x1xf32>
      %396 = vector.extract_strided_slice %275 {offsets = [0, 176], sizes = [8, 16], strides = [1, 1]} : vector<8x192xf32> to vector<8x16xf32>
      %397 = vector.broadcast %395 : vector<8x1xf32> to vector<8x16xf32>
      %398 = arith.mulf %397, %396 : vector<8x16xf32>
      %399 = arith.addf %394, %398 : vector<8x16xf32>
      %cst_133 = arith.constant 0.020833334 : f32
      %400 = vector.broadcast %cst_133 : f32 to vector<8x16xf32>
      %401 = arith.mulf %399, %400 : vector<8x16xf32>
      %402 = arith.truncf %401 : vector<8x16xf32> to vector<8x16xbf16>
      %c1_134 = arith.constant 1 : index
      %c0_135 = arith.constant 0 : index
      %c0_136 = arith.constant 0 : index
      %403 = vector.load %arg9[%c1_134, %c0_135, %c0_136] : memref<4x8x16xbf16, #tpu.memory_space<vmem>>, vector<1x8x16xbf16>
      %404 = vector.shape_cast %403 : vector<1x8x16xbf16> to vector<8x16xbf16>
      %405 = vector.shape_cast %402 : vector<8x16xbf16> to vector<1x8x16xbf16>
      tpu.vector_store %arg9[%c1_134, %c0_135, %c0_136], %405 {strides = array<i32>} : memref<4x8x16xbf16, #tpu.memory_space<vmem>>, vector<1x8x16xbf16>,
      %406 = vector.extract_strided_slice %272 {offsets = [0, 24], sizes = [8, 1], strides = [1, 1]} : vector<8x48xf32> to vector<8x1xf32>
      %407 = vector.extract_strided_slice %275 {offsets = [0, 0], sizes = [8, 16], strides = [1, 1]} : vector<8x192xf32> to vector<8x16xf32>
      %408 = vector.broadcast %406 : vector<8x1xf32> to vector<8x16xf32>
      %409 = arith.mulf %408, %407 : vector<8x16xf32>
      %410 = vector.extract_strided_slice %272 {offsets = [0, 25], sizes = [8, 1], strides = [1, 1]} : vector<8x48xf32> to vector<8x1xf32>
      %411 = vector.extract_strided_slice %275 {offsets = [0, 16], sizes = [8, 16], strides = [1, 1]} : vector<8x192xf32> to vector<8x16xf32>
      %412 = vector.broadcast %410 : vector<8x1xf32> to vector<8x16xf32>
      %413 = arith.mulf %412, %411 : vector<8x16xf32>
      %414 = arith.addf %409, %413 : vector<8x16xf32>
      %415 = vector.extract_strided_slice %272 {offsets = [0, 26], sizes = [8, 1], strides = [1, 1]} : vector<8x48xf32> to vector<8x1xf32>
      %416 = vector.extract_strided_slice %275 {offsets = [0, 32], sizes = [8, 16], strides = [1, 1]} : vector<8x192xf32> to vector<8x16xf32>
      %417 = vector.broadcast %415 : vector<8x1xf32> to vector<8x16xf32>
      %418 = arith.mulf %417, %416 : vector<8x16xf32>
      %419 = arith.addf %414, %418 : vector<8x16xf32>
      %420 = vector.extract_strided_slice %272 {offsets = [0, 27], sizes = [8, 1], strides = [1, 1]} : vector<8x48xf32> to vector<8x1xf32>
      %421 = vector.extract_strided_slice %275 {offsets = [0, 48], sizes = [8, 16], strides = [1, 1]} : vector<8x192xf32> to vector<8x16xf32>
      %422 = vector.broadcast %420 : vector<8x1xf32> to vector<8x16xf32>
      %423 = arith.mulf %422, %421 : vector<8x16xf32>
      %424 = arith.addf %419, %423 : vector<8x16xf32>
      %425 = vector.extract_strided_slice %272 {offsets = [0, 28], sizes = [8, 1], strides = [1, 1]} : vector<8x48xf32> to vector<8x1xf32>
      %426 = vector.extract_strided_slice %275 {offsets = [0, 64], sizes = [8, 16], strides = [1, 1]} : vector<8x192xf32> to vector<8x16xf32>
      %427 = vector.broadcast %425 : vector<8x1xf32> to vector<8x16xf32>
      %428 = arith.mulf %427, %426 : vector<8x16xf32>
      %429 = arith.addf %424, %428 : vector<8x16xf32>
      %430 = vector.extract_strided_slice %272 {offsets = [0, 29], sizes = [8, 1], strides = [1, 1]} : vector<8x48xf32> to vector<8x1xf32>
      %431 = vector.extract_strided_slice %275 {offsets = [0, 80], sizes = [8, 16], strides = [1, 1]} : vector<8x192xf32> to vector<8x16xf32>
      %432 = vector.broadcast %430 : vector<8x1xf32> to vector<8x16xf32>
      %433 = arith.mulf %432, %431 : vector<8x16xf32>
      %434 = arith.addf %429, %433 : vector<8x16xf32>
      %435 = vector.extract_strided_slice %272 {offsets = [0, 30], sizes = [8, 1], strides = [1, 1]} : vector<8x48xf32> to vector<8x1xf32>
      %436 = vector.extract_strided_slice %275 {offsets = [0, 96], sizes = [8, 16], strides = [1, 1]} : vector<8x192xf32> to vector<8x16xf32>
      %437 = vector.broadcast %435 : vector<8x1xf32> to vector<8x16xf32>
      %438 = arith.mulf %437, %436 : vector<8x16xf32>
      %439 = arith.addf %434, %438 : vector<8x16xf32>
      %440 = vector.extract_strided_slice %272 {offsets = [0, 31], sizes = [8, 1], strides = [1, 1]} : vector<8x48xf32> to vector<8x1xf32>
      %441 = vector.extract_strided_slice %275 {offsets = [0, 112], sizes = [8, 16], strides = [1, 1]} : vector<8x192xf32> to vector<8x16xf32>
      %442 = vector.broadcast %440 : vector<8x1xf32> to vector<8x16xf32>
      %443 = arith.mulf %442, %441 : vector<8x16xf32>
      %444 = arith.addf %439, %443 : vector<8x16xf32>
      %445 = vector.extract_strided_slice %272 {offsets = [0, 32], sizes = [8, 1], strides = [1, 1]} : vector<8x48xf32> to vector<8x1xf32>
      %446 = vector.extract_strided_slice %275 {offsets = [0, 128], sizes = [8, 16], strides = [1, 1]} : vector<8x192xf32> to vector<8x16xf32>
      %447 = vector.broadcast %445 : vector<8x1xf32> to vector<8x16xf32>
      %448 = arith.mulf %447, %446 : vector<8x16xf32>
      %449 = arith.addf %444, %448 : vector<8x16xf32>
      %450 = vector.extract_strided_slice %272 {offsets = [0, 33], sizes = [8, 1], strides = [1, 1]} : vector<8x48xf32> to vector<8x1xf32>
      %451 = vector.extract_strided_slice %275 {offsets = [0, 144], sizes = [8, 16], strides = [1, 1]} : vector<8x192xf32> to vector<8x16xf32>
      %452 = vector.broadcast %450 : vector<8x1xf32> to vector<8x16xf32>
      %453 = arith.mulf %452, %451 : vector<8x16xf32>
      %454 = arith.addf %449, %453 : vector<8x16xf32>
      %455 = vector.extract_strided_slice %272 {offsets = [0, 34], sizes = [8, 1], strides = [1, 1]} : vector<8x48xf32> to vector<8x1xf32>
      %456 = vector.extract_strided_slice %275 {offsets = [0, 160], sizes = [8, 16], strides = [1, 1]} : vector<8x192xf32> to vector<8x16xf32>
      %457 = vector.broadcast %455 : vector<8x1xf32> to vector<8x16xf32>
      %458 = arith.mulf %457, %456 : vector<8x16xf32>
      %459 = arith.addf %454, %458 : vector<8x16xf32>
      %460 = vector.extract_strided_slice %272 {offsets = [0, 35], sizes = [8, 1], strides = [1, 1]} : vector<8x48xf32> to vector<8x1xf32>
      %461 = vector.extract_strided_slice %275 {offsets = [0, 176], sizes = [8, 16], strides = [1, 1]} : vector<8x192xf32> to vector<8x16xf32>
      %462 = vector.broadcast %460 : vector<8x1xf32> to vector<8x16xf32>
      %463 = arith.mulf %462, %461 : vector<8x16xf32>
      %464 = arith.addf %459, %463 : vector<8x16xf32>
      %cst_137 = arith.constant 0.020833334 : f32
      %465 = vector.broadcast %cst_137 : f32 to vector<8x16xf32>
      %466 = arith.mulf %464, %465 : vector<8x16xf32>
      %467 = arith.truncf %466 : vector<8x16xf32> to vector<8x16xbf16>
      %c2_138 = arith.constant 2 : index
      %c0_139 = arith.constant 0 : index
      %c0_140 = arith.constant 0 : index
      %468 = vector.load %arg9[%c2_138, %c0_139, %c0_140] : memref<4x8x16xbf16, #tpu.memory_space<vmem>>, vector<1x8x16xbf16>
      %469 = vector.shape_cast %468 : vector<1x8x16xbf16> to vector<8x16xbf16>
      %470 = vector.shape_cast %467 : vector<8x16xbf16> to vector<1x8x16xbf16>
      tpu.vector_store %arg9[%c2_138, %c0_139, %c0_140], %470 {strides = array<i32>} : memref<4x8x16xbf16, #tpu.memory_space<vmem>>, vector<1x8x16xbf16>,
      %471 = vector.extract_strided_slice %272 {offsets = [0, 36], sizes = [8, 1], strides = [1, 1]} : vector<8x48xf32> to vector<8x1xf32>
      %472 = vector.extract_strided_slice %275 {offsets = [0, 0], sizes = [8, 16], strides = [1, 1]} : vector<8x192xf32> to vector<8x16xf32>
      %473 = vector.broadcast %471 : vector<8x1xf32> to vector<8x16xf32>
      %474 = arith.mulf %473, %472 : vector<8x16xf32>
      %475 = vector.extract_strided_slice %272 {offsets = [0, 37], sizes = [8, 1], strides = [1, 1]} : vector<8x48xf32> to vector<8x1xf32>
      %476 = vector.extract_strided_slice %275 {offsets = [0, 16], sizes = [8, 16], strides = [1, 1]} : vector<8x192xf32> to vector<8x16xf32>
      %477 = vector.broadcast %475 : vector<8x1xf32> to vector<8x16xf32>
      %478 = arith.mulf %477, %476 : vector<8x16xf32>
      %479 = arith.addf %474, %478 : vector<8x16xf32>
      %480 = vector.extract_strided_slice %272 {offsets = [0, 38], sizes = [8, 1], strides = [1, 1]} : vector<8x48xf32> to vector<8x1xf32>
      %481 = vector.extract_strided_slice %275 {offsets = [0, 32], sizes = [8, 16], strides = [1, 1]} : vector<8x192xf32> to vector<8x16xf32>
      %482 = vector.broadcast %480 : vector<8x1xf32> to vector<8x16xf32>
      %483 = arith.mulf %482, %481 : vector<8x16xf32>
      %484 = arith.addf %479, %483 : vector<8x16xf32>
      %485 = vector.extract_strided_slice %272 {offsets = [0, 39], sizes = [8, 1], strides = [1, 1]} : vector<8x48xf32> to vector<8x1xf32>
      %486 = vector.extract_strided_slice %275 {offsets = [0, 48], sizes = [8, 16], strides = [1, 1]} : vector<8x192xf32> to vector<8x16xf32>
      %487 = vector.broadcast %485 : vector<8x1xf32> to vector<8x16xf32>
      %488 = arith.mulf %487, %486 : vector<8x16xf32>
      %489 = arith.addf %484, %488 : vector<8x16xf32>
      %490 = vector.extract_strided_slice %272 {offsets = [0, 40], sizes = [8, 1], strides = [1, 1]} : vector<8x48xf32> to vector<8x1xf32>
      %491 = vector.extract_strided_slice %275 {offsets = [0, 64], sizes = [8, 16], strides = [1, 1]} : vector<8x192xf32> to vector<8x16xf32>
      %492 = vector.broadcast %490 : vector<8x1xf32> to vector<8x16xf32>
      %493 = arith.mulf %492, %491 : vector<8x16xf32>
      %494 = arith.addf %489, %493 : vector<8x16xf32>
      %495 = vector.extract_strided_slice %272 {offsets = [0, 41], sizes = [8, 1], strides = [1, 1]} : vector<8x48xf32> to vector<8x1xf32>
      %496 = vector.extract_strided_slice %275 {offsets = [0, 80], sizes = [8, 16], strides = [1, 1]} : vector<8x192xf32> to vector<8x16xf32>
      %497 = vector.broadcast %495 : vector<8x1xf32> to vector<8x16xf32>
      %498 = arith.mulf %497, %496 : vector<8x16xf32>
      %499 = arith.addf %494, %498 : vector<8x16xf32>
      %500 = vector.extract_strided_slice %272 {offsets = [0, 42], sizes = [8, 1], strides = [1, 1]} : vector<8x48xf32> to vector<8x1xf32>
      %501 = vector.extract_strided_slice %275 {offsets = [0, 96], sizes = [8, 16], strides = [1, 1]} : vector<8x192xf32> to vector<8x16xf32>
      %502 = vector.broadcast %500 : vector<8x1xf32> to vector<8x16xf32>
      %503 = arith.mulf %502, %501 : vector<8x16xf32>
      %504 = arith.addf %499, %503 : vector<8x16xf32>
      %505 = vector.extract_strided_slice %272 {offsets = [0, 43], sizes = [8, 1], strides = [1, 1]} : vector<8x48xf32> to vector<8x1xf32>
      %506 = vector.extract_strided_slice %275 {offsets = [0, 112], sizes = [8, 16], strides = [1, 1]} : vector<8x192xf32> to vector<8x16xf32>
      %507 = vector.broadcast %505 : vector<8x1xf32> to vector<8x16xf32>
      %508 = arith.mulf %507, %506 : vector<8x16xf32>
      %509 = arith.addf %504, %508 : vector<8x16xf32>
      %510 = vector.extract_strided_slice %272 {offsets = [0, 44], sizes = [8, 1], strides = [1, 1]} : vector<8x48xf32> to vector<8x1xf32>
      %511 = vector.extract_strided_slice %275 {offsets = [0, 128], sizes = [8, 16], strides = [1, 1]} : vector<8x192xf32> to vector<8x16xf32>
      %512 = vector.broadcast %510 : vector<8x1xf32> to vector<8x16xf32>
      %513 = arith.mulf %512, %511 : vector<8x16xf32>
      %514 = arith.addf %509, %513 : vector<8x16xf32>
      %515 = vector.extract_strided_slice %272 {offsets = [0, 45], sizes = [8, 1], strides = [1, 1]} : vector<8x48xf32> to vector<8x1xf32>
      %516 = vector.extract_strided_slice %275 {offsets = [0, 144], sizes = [8, 16], strides = [1, 1]} : vector<8x192xf32> to vector<8x16xf32>
      %517 = vector.broadcast %515 : vector<8x1xf32> to vector<8x16xf32>
      %518 = arith.mulf %517, %516 : vector<8x16xf32>
      %519 = arith.addf %514, %518 : vector<8x16xf32>
      %520 = vector.extract_strided_slice %272 {offsets = [0, 46], sizes = [8, 1], strides = [1, 1]} : vector<8x48xf32> to vector<8x1xf32>
      %521 = vector.extract_strided_slice %275 {offsets = [0, 160], sizes = [8, 16], strides = [1, 1]} : vector<8x192xf32> to vector<8x16xf32>
      %522 = vector.broadcast %520 : vector<8x1xf32> to vector<8x16xf32>
      %523 = arith.mulf %522, %521 : vector<8x16xf32>
      %524 = arith.addf %519, %523 : vector<8x16xf32>
      %525 = vector.extract_strided_slice %272 {offsets = [0, 47], sizes = [8, 1], strides = [1, 1]} : vector<8x48xf32> to vector<8x1xf32>
      %526 = vector.extract_strided_slice %275 {offsets = [0, 176], sizes = [8, 16], strides = [1, 1]} : vector<8x192xf32> to vector<8x16xf32>
      %527 = vector.broadcast %525 : vector<8x1xf32> to vector<8x16xf32>
      %528 = arith.mulf %527, %526 : vector<8x16xf32>
      %529 = arith.addf %524, %528 : vector<8x16xf32>
      %cst_141 = arith.constant 0.020833334 : f32
      %530 = vector.broadcast %cst_141 : f32 to vector<8x16xf32>
      %531 = arith.mulf %529, %530 : vector<8x16xf32>
      %532 = arith.truncf %531 : vector<8x16xf32> to vector<8x16xbf16>
      %c3_142 = arith.constant 3 : index
      %c0_143 = arith.constant 0 : index
      %c0_144 = arith.constant 0 : index
      %533 = vector.load %arg9[%c3_142, %c0_143, %c0_144] : memref<4x8x16xbf16, #tpu.memory_space<vmem>>, vector<1x8x16xbf16>
      %534 = vector.shape_cast %533 : vector<1x8x16xbf16> to vector<8x16xbf16>
      %535 = vector.shape_cast %532 : vector<8x16xbf16> to vector<1x8x16xbf16>
      tpu.vector_store %arg9[%c3_142, %c0_143, %c0_144], %535 {strides = array<i32>} : memref<4x8x16xbf16, #tpu.memory_space<vmem>>, vector<1x8x16xbf16>,
      %cst_145 = arith.constant -1.000000e+30 : f32
      %536 = vector.broadcast %cst_145 : f32 to vector<4x8x1xf32>
      %c0_146 = arith.constant 0 : index
      %c0_147 = arith.constant 0 : index
      %c0_148 = arith.constant 0 : index
      %537 = vector.load %arg10[%c0_146, %c0_147, %c0_148] : memref<4x8x1xf32, #tpu.memory_space<vmem>>, vector<4x8x1xf32>
      tpu.vector_store %arg10[%c0_146, %c0_147, %c0_148], %536 {strides = array<i32>} : memref<4x8x1xf32, #tpu.memory_space<vmem>>, vector<4x8x1xf32>,
      %cst_149 = arith.constant 0.000000e+00 : f32
      %538 = vector.broadcast %cst_149 : f32 to vector<4x8x1xf32>
      %c0_150 = arith.constant 0 : index
      %c0_151 = arith.constant 0 : index
      %c0_152 = arith.constant 0 : index
      %539 = vector.load %arg11[%c0_150, %c0_151, %c0_152] : memref<4x8x1xf32, #tpu.memory_space<vmem>>, vector<4x8x1xf32>
      tpu.vector_store %arg11[%c0_150, %c0_151, %c0_152], %538 {strides = array<i32>} : memref<4x8x1xf32, #tpu.memory_space<vmem>>, vector<4x8x1xf32>,
      %cst_153 = arith.constant 0.000000e+00 : f32
      %540 = vector.broadcast %cst_153 : f32 to vector<4x8x16xf32>
      %c0_154 = arith.constant 0 : index
      %c0_155 = arith.constant 0 : index
      %c0_156 = arith.constant 0 : index
      %541 = vector.load %arg12[%c0_154, %c0_155, %c0_156] : memref<4x8x16xf32, #tpu.memory_space<vmem>>, vector<4x8x16xf32>
      tpu.vector_store %arg12[%c0_154, %c0_155, %c0_156], %540 {strides = array<i32>} : memref<4x8x16xf32, #tpu.memory_space<vmem>>, vector<4x8x16xf32>,
    } else {
    }
    %c0 = arith.constant 0 : index
    %c0_1 = arith.constant 0 : index
    %c0_2 = arith.constant 0 : index
    %3 = vector.load %arg4[%c0, %c0_1, %c0_2] : memref<1x8x8xbf16, #tpu.memory_space<vmem>>, vector<1x8x8xbf16>
    %4 = vector.shape_cast %3 : vector<1x8x8xbf16> to vector<8x8xbf16>
    %5 = arith.extf %4 : vector<8x8xbf16> to vector<8x8xf32>
    %c0_3 = arith.constant 0 : index
    %c0_4 = arith.constant 0 : index
    %c0_5 = arith.constant 0 : index
    %6 = vector.load %arg5[%c0_3, %c0_4, %c0_5] : memref<1x8x32xbf16, #tpu.memory_space<vmem>>, vector<1x8x32xbf16>
    %7 = vector.shape_cast %6 : vector<1x8x32xbf16> to vector<8x32xbf16>
    %8 = arith.extf %7 : vector<8x32xbf16> to vector<8x32xf32>
    %c0_6 = arith.constant 0 : index
    %c0_7 = arith.constant 0 : index
    %c0_8 = arith.constant 0 : index
    %9 = vector.load %arg6[%c0_6, %c0_7, %c0_8] : memref<1x8x8xbf16, #tpu.memory_space<vmem>>, vector<1x8x8xbf16>
    %10 = vector.shape_cast %9 : vector<1x8x8xbf16> to vector<8x8xbf16>
    %11 = arith.extf %10 : vector<8x8xbf16> to vector<8x8xf32>
    %c0_9 = arith.constant 0 : index
    %c0_10 = arith.constant 0 : index
    %c0_11 = arith.constant 0 : index
    %12 = vector.load %arg7[%c0_9, %c0_10, %c0_11] : memref<1x8x32xbf16, #tpu.memory_space<vmem>>, vector<1x8x32xbf16>
    %13 = vector.shape_cast %12 : vector<1x8x32xbf16> to vector<8x32xbf16>
    %14 = arith.extf %13 : vector<8x32xbf16> to vector<8x32xf32>
    %15 = tpu.iota {dimensions = array<i32: 0>} : vector<8x8xi32>
    %c0_i32_12 = arith.constant 0 : i32
    %16 = vector.broadcast %c0_i32_12 : i32 to vector<8x8xi32>
    %17 = arith.addi %15, %16 : vector<8x8xi32>
    %18 = tpu.iota {dimensions = array<i32: 1>} : vector<8x8xi32>
    %c8_i32 = arith.constant 8 : i32
    %19 = arith.muli %arg1, %c8_i32 : i32
    %20 = vector.broadcast %19 : i32 to vector<8x8xi32>
    %21 = arith.addi %18, %20 : vector<8x8xi32>
    %22 = arith.cmpi sle, %21, %17 : vector<8x8xi32>
    %23 = vector.extract_strided_slice %5 {offsets = [0, 0], sizes = [8, 1], strides = [1, 1]} : vector<8x8xf32> to vector<8x1xf32>
    %24 = vector.extract_strided_slice %8 {offsets = [0, 0], sizes = [8, 16], strides = [1, 1]} : vector<8x32xf32> to vector<8x16xf32>
    %25 = vector.broadcast %23 : vector<8x1xf32> to vector<8x16xf32>
    %26 = arith.mulf %25, %24 : vector<8x16xf32>
    %27 = vector.extract_strided_slice %5 {offsets = [0, 1], sizes = [8, 1], strides = [1, 1]} : vector<8x8xf32> to vector<8x1xf32>
    %28 = vector.extract_strided_slice %8 {offsets = [0, 16], sizes = [8, 16], strides = [1, 1]} : vector<8x32xf32> to vector<8x16xf32>
    %29 = vector.broadcast %27 : vector<8x1xf32> to vector<8x16xf32>
    %30 = arith.mulf %29, %28 : vector<8x16xf32>
    %31 = arith.addf %26, %30 : vector<8x16xf32>
    %cst = arith.constant 5.000000e-01 : f32
    %32 = vector.broadcast %cst : f32 to vector<8x16xf32>
    %33 = arith.mulf %31, %32 : vector<8x16xf32>
    %34 = arith.truncf %33 : vector<8x16xf32> to vector<8x16xbf16>
    %35 = vector.extract_strided_slice %11 {offsets = [0, 0], sizes = [8, 1], strides = [1, 1]} : vector<8x8xf32> to vector<8x1xf32>
    %36 = vector.extract_strided_slice %14 {offsets = [0, 0], sizes = [8, 16], strides = [1, 1]} : vector<8x32xf32> to vector<8x16xf32>
    %37 = vector.broadcast %35 : vector<8x1xf32> to vector<8x16xf32>
    %38 = arith.mulf %37, %36 : vector<8x16xf32>
    %39 = vector.extract_strided_slice %11 {offsets = [0, 1], sizes = [8, 1], strides = [1, 1]} : vector<8x8xf32> to vector<8x1xf32>
    %40 = vector.extract_strided_slice %14 {offsets = [0, 16], sizes = [8, 16], strides = [1, 1]} : vector<8x32xf32> to vector<8x16xf32>
    %41 = vector.broadcast %39 : vector<8x1xf32> to vector<8x16xf32>
    %42 = arith.mulf %41, %40 : vector<8x16xf32>
    %43 = arith.addf %38, %42 : vector<8x16xf32>
    %cst_13 = arith.constant 5.000000e-01 : f32
    %44 = vector.broadcast %cst_13 : f32 to vector<8x16xf32>
    %45 = arith.mulf %43, %44 : vector<8x16xf32>
    %46 = arith.truncf %45 : vector<8x16xf32> to vector<8x16xbf16>
    %c0_14 = arith.constant 0 : index
    %c0_15 = arith.constant 0 : index
    %c0_16 = arith.constant 0 : index
    %47 = vector.load %arg9[%c0_14, %c0_15, %c0_16] : memref<4x8x16xbf16, #tpu.memory_space<vmem>>, vector<1x8x16xbf16>
    %48 = vector.shape_cast %47 : vector<1x8x16xbf16> to vector<8x16xbf16>
    %cst_17 = arith.constant dense<0.000000e+00> : vector<8x8xf32>
    %49 = tpu.matmul %48, %34, %cst_17 {dimension_numbers = #tpu.dot_dimension_numbers<[1], [1], [0], [0], [0, 0, 1, 0], [], []>} : vector<8x16xbf16>, vector<8x16xbf16>, vector<8x8xf32> -> vector<8x8xf32>
    %cst_18 = arith.constant -1.000000e+30 : f32
    %50 = vector.broadcast %cst_18 : f32 to vector<8x8xf32>
    %51 = arith.select %22, %49, %50 : vector<8x8xi1>, vector<8x8xf32>
    %c0_19 = arith.constant 0 : index
    %c0_20 = arith.constant 0 : index
    %c0_21 = arith.constant 0 : index
    %52 = vector.load %arg10[%c0_19, %c0_20, %c0_21] : memref<4x8x1xf32, #tpu.memory_space<vmem>>, vector<1x8x1xf32>
    %53 = vector.shape_cast %52 : vector<1x8x1xf32> to vector<8x1xf32>
    %cst_22 = arith.constant dense<0xFF800000> : vector<8xf32>
    %54 = vector.multi_reduction <maximumf>, %51, %cst_22 [1] : vector<8x8xf32> to vector<8xf32>
    %55 = vector.shape_cast %54 : vector<8xf32> to vector<8x1xf32>
    %56 = arith.maximumf %53, %55 : vector<8x1xf32>
    %57 = arith.subf %53, %56 : vector<8x1xf32>
    %58 = math.exp %57 : vector<8x1xf32>
    %59 = vector.broadcast %56 : vector<8x1xf32> to vector<8x8xf32>
    %60 = arith.subf %51, %59 : vector<8x8xf32>
    %61 = math.exp %60 : vector<8x8xf32>
    %c0_23 = arith.constant 0 : index
    %c0_24 = arith.constant 0 : index
    %c0_25 = arith.constant 0 : index
    %62 = vector.load %arg11[%c0_23, %c0_24, %c0_25] : memref<4x8x1xf32, #tpu.memory_space<vmem>>, vector<1x8x1xf32>
    %63 = vector.shape_cast %62 : vector<1x8x1xf32> to vector<8x1xf32>
    %64 = arith.mulf %58, %63 : vector<8x1xf32>
    %cst_26 = arith.constant dense<0.000000e+00> : vector<8xf32>
    %65 = vector.multi_reduction <add>, %61, %cst_26 [1] : vector<8x8xf32> to vector<8xf32>
    %66 = vector.shape_cast %65 : vector<8xf32> to vector<8x1xf32>
    %67 = arith.addf %64, %66 : vector<8x1xf32>
    %c0_27 = arith.constant 0 : index
    %c0_28 = arith.constant 0 : index
    %c0_29 = arith.constant 0 : index
    %68 = vector.load %arg11[%c0_27, %c0_28, %c0_29] : memref<4x8x1xf32, #tpu.memory_space<vmem>>, vector<1x8x1xf32>
    %69 = vector.shape_cast %68 : vector<1x8x1xf32> to vector<8x1xf32>
    %70 = vector.shape_cast %67 : vector<8x1xf32> to vector<1x8x1xf32>
    tpu.vector_store %arg11[%c0_27, %c0_28, %c0_29], %70 {strides = array<i32>} : memref<4x8x1xf32, #tpu.memory_space<vmem>>, vector<1x8x1xf32>,
    %c0_30 = arith.constant 0 : index
    %c0_31 = arith.constant 0 : index
    %c0_32 = arith.constant 0 : index
    %71 = vector.load %arg12[%c0_30, %c0_31, %c0_32] : memref<4x8x16xf32, #tpu.memory_space<vmem>>, vector<1x8x16xf32>
    %72 = vector.shape_cast %71 : vector<1x8x16xf32> to vector<8x16xf32>
    %73 = vector.broadcast %58 : vector<8x1xf32> to vector<8x16xf32>
    %74 = arith.mulf %73, %72 : vector<8x16xf32>
    %75 = arith.truncf %61 : vector<8x8xf32> to vector<8x8xbf16>
    %cst_33 = arith.constant dense<0.000000e+00> : vector<8x16xf32>
    %76 = tpu.matmul %75, %46, %cst_33 {dimension_numbers = #tpu.dot_dimension_numbers<[1], [0], [0], [1], [0, 0, 1, 1], [], []>} : vector<8x8xbf16>, vector<8x16xbf16>, vector<8x16xf32> -> vector<8x16xf32>
    %77 = arith.addf %74, %76 : vector<8x16xf32>
    %c0_34 = arith.constant 0 : index
    %c0_35 = arith.constant 0 : index
    %c0_36 = arith.constant 0 : index
    %78 = vector.load %arg12[%c0_34, %c0_35, %c0_36] : memref<4x8x16xf32, #tpu.memory_space<vmem>>, vector<1x8x16xf32>
    %79 = vector.shape_cast %78 : vector<1x8x16xf32> to vector<8x16xf32>
    %80 = vector.shape_cast %77 : vector<8x16xf32> to vector<1x8x16xf32>
    tpu.vector_store %arg12[%c0_34, %c0_35, %c0_36], %80 {strides = array<i32>} : memref<4x8x16xf32, #tpu.memory_space<vmem>>, vector<1x8x16xf32>,
    %c0_37 = arith.constant 0 : index
    %c0_38 = arith.constant 0 : index
    %c0_39 = arith.constant 0 : index
    %81 = vector.load %arg10[%c0_37, %c0_38, %c0_39] : memref<4x8x1xf32, #tpu.memory_space<vmem>>, vector<1x8x1xf32>
    %82 = vector.shape_cast %81 : vector<1x8x1xf32> to vector<8x1xf32>
    %83 = vector.shape_cast %56 : vector<8x1xf32> to vector<1x8x1xf32>
    tpu.vector_store %arg10[%c0_37, %c0_38, %c0_39], %83 {strides = array<i32>} : memref<4x8x1xf32, #tpu.memory_space<vmem>>, vector<1x8x1xf32>,
    %84 = vector.extract_strided_slice %5 {offsets = [0, 2], sizes = [8, 1], strides = [1, 1]} : vector<8x8xf32> to vector<8x1xf32>
    %85 = vector.extract_strided_slice %8 {offsets = [0, 0], sizes = [8, 16], strides = [1, 1]} : vector<8x32xf32> to vector<8x16xf32>
    %86 = vector.broadcast %84 : vector<8x1xf32> to vector<8x16xf32>
    %87 = arith.mulf %86, %85 : vector<8x16xf32>
    %88 = vector.extract_strided_slice %5 {offsets = [0, 3], sizes = [8, 1], strides = [1, 1]} : vector<8x8xf32> to vector<8x1xf32>
    %89 = vector.extract_strided_slice %8 {offsets = [0, 16], sizes = [8, 16], strides = [1, 1]} : vector<8x32xf32> to vector<8x16xf32>
    %90 = vector.broadcast %88 : vector<8x1xf32> to vector<8x16xf32>
    %91 = arith.mulf %90, %89 : vector<8x16xf32>
    %92 = arith.addf %87, %91 : vector<8x16xf32>
    %cst_40 = arith.constant 5.000000e-01 : f32
    %93 = vector.broadcast %cst_40 : f32 to vector<8x16xf32>
    %94 = arith.mulf %92, %93 : vector<8x16xf32>
    %95 = arith.truncf %94 : vector<8x16xf32> to vector<8x16xbf16>
    %96 = vector.extract_strided_slice %11 {offsets = [0, 2], sizes = [8, 1], strides = [1, 1]} : vector<8x8xf32> to vector<8x1xf32>
    %97 = vector.extract_strided_slice %14 {offsets = [0, 0], sizes = [8, 16], strides = [1, 1]} : vector<8x32xf32> to vector<8x16xf32>
    %98 = vector.broadcast %96 : vector<8x1xf32> to vector<8x16xf32>
    %99 = arith.mulf %98, %97 : vector<8x16xf32>
    %100 = vector.extract_strided_slice %11 {offsets = [0, 3], sizes = [8, 1], strides = [1, 1]} : vector<8x8xf32> to vector<8x1xf32>
    %101 = vector.extract_strided_slice %14 {offsets = [0, 16], sizes = [8, 16], strides = [1, 1]} : vector<8x32xf32> to vector<8x16xf32>
    %102 = vector.broadcast %100 : vector<8x1xf32> to vector<8x16xf32>
    %103 = arith.mulf %102, %101 : vector<8x16xf32>
    %104 = arith.addf %99, %103 : vector<8x16xf32>
    %cst_41 = arith.constant 5.000000e-01 : f32
    %105 = vector.broadcast %cst_41 : f32 to vector<8x16xf32>
    %106 = arith.mulf %104, %105 : vector<8x16xf32>
    %107 = arith.truncf %106 : vector<8x16xf32> to vector<8x16xbf16>
    %c1 = arith.constant 1 : index
    %c0_42 = arith.constant 0 : index
    %c0_43 = arith.constant 0 : index
    %108 = vector.load %arg9[%c1, %c0_42, %c0_43] : memref<4x8x16xbf16, #tpu.memory_space<vmem>>, vector<1x8x16xbf16>
    %109 = vector.shape_cast %108 : vector<1x8x16xbf16> to vector<8x16xbf16>
    %cst_44 = arith.constant dense<0.000000e+00> : vector<8x8xf32>
    %110 = tpu.matmul %109, %95, %cst_44 {dimension_numbers = #tpu.dot_dimension_numbers<[1], [1], [0], [0], [0, 0, 1, 0], [], []>} : vector<8x16xbf16>, vector<8x16xbf16>, vector<8x8xf32> -> vector<8x8xf32>
    %cst_45 = arith.constant -1.000000e+30 : f32
    %111 = vector.broadcast %cst_45 : f32 to vector<8x8xf32>
    %112 = arith.select %22, %110, %111 : vector<8x8xi1>, vector<8x8xf32>
    %c1_46 = arith.constant 1 : index
    %c0_47 = arith.constant 0 : index
    %c0_48 = arith.constant 0 : index
    %113 = vector.load %arg10[%c1_46, %c0_47, %c0_48] : memref<4x8x1xf32, #tpu.memory_space<vmem>>, vector<1x8x1xf32>
    %114 = vector.shape_cast %113 : vector<1x8x1xf32> to vector<8x1xf32>
    %cst_49 = arith.constant dense<0xFF800000> : vector<8xf32>
    %115 = vector.multi_reduction <maximumf>, %112, %cst_49 [1] : vector<8x8xf32> to vector<8xf32>
    %116 = vector.shape_cast %115 : vector<8xf32> to vector<8x1xf32>
    %117 = arith.maximumf %114, %116 : vector<8x1xf32>
    %118 = arith.subf %114, %117 : vector<8x1xf32>
    %119 = math.exp %118 : vector<8x1xf32>
    %120 = vector.broadcast %117 : vector<8x1xf32> to vector<8x8xf32>
    %121 = arith.subf %112, %120 : vector<8x8xf32>
    %122 = math.exp %121 : vector<8x8xf32>
    %c1_50 = arith.constant 1 : index
    %c0_51 = arith.constant 0 : index
    %c0_52 = arith.constant 0 : index
    %123 = vector.load %arg11[%c1_50, %c0_51, %c0_52] : memref<4x8x1xf32, #tpu.memory_space<vmem>>, vector<1x8x1xf32>
    %124 = vector.shape_cast %123 : vector<1x8x1xf32> to vector<8x1xf32>
    %125 = arith.mulf %119, %124 : vector<8x1xf32>
    %cst_53 = arith.constant dense<0.000000e+00> : vector<8xf32>
    %126 = vector.multi_reduction <add>, %122, %cst_53 [1] : vector<8x8xf32> to vector<8xf32>
    %127 = vector.shape_cast %126 : vector<8xf32> to vector<8x1xf32>
    %128 = arith.addf %125, %127 : vector<8x1xf32>
    %c1_54 = arith.constant 1 : index
    %c0_55 = arith.constant 0 : index
    %c0_56 = arith.constant 0 : index
    %129 = vector.load %arg11[%c1_54, %c0_55, %c0_56] : memref<4x8x1xf32, #tpu.memory_space<vmem>>, vector<1x8x1xf32>
    %130 = vector.shape_cast %129 : vector<1x8x1xf32> to vector<8x1xf32>
    %131 = vector.shape_cast %128 : vector<8x1xf32> to vector<1x8x1xf32>
    tpu.vector_store %arg11[%c1_54, %c0_55, %c0_56], %131 {strides = array<i32>} : memref<4x8x1xf32, #tpu.memory_space<vmem>>, vector<1x8x1xf32>,
    %c1_57 = arith.constant 1 : index
    %c0_58 = arith.constant 0 : index
    %c0_59 = arith.constant 0 : index
    %132 = vector.load %arg12[%c1_57, %c0_58, %c0_59] : memref<4x8x16xf32, #tpu.memory_space<vmem>>, vector<1x8x16xf32>
    %133 = vector.shape_cast %132 : vector<1x8x16xf32> to vector<8x16xf32>
    %134 = vector.broadcast %119 : vector<8x1xf32> to vector<8x16xf32>
    %135 = arith.mulf %134, %133 : vector<8x16xf32>
    %136 = arith.truncf %122 : vector<8x8xf32> to vector<8x8xbf16>
    %cst_60 = arith.constant dense<0.000000e+00> : vector<8x16xf32>
    %137 = tpu.matmul %136, %107, %cst_60 {dimension_numbers = #tpu.dot_dimension_numbers<[1], [0], [0], [1], [0, 0, 1, 1], [], []>} : vector<8x8xbf16>, vector<8x16xbf16>, vector<8x16xf32> -> vector<8x16xf32>
    %138 = arith.addf %135, %137 : vector<8x16xf32>
    %c1_61 = arith.constant 1 : index
    %c0_62 = arith.constant 0 : index
    %c0_63 = arith.constant 0 : index
    %139 = vector.load %arg12[%c1_61, %c0_62, %c0_63] : memref<4x8x16xf32, #tpu.memory_space<vmem>>, vector<1x8x16xf32>
    %140 = vector.shape_cast %139 : vector<1x8x16xf32> to vector<8x16xf32>
    %141 = vector.shape_cast %138 : vector<8x16xf32> to vector<1x8x16xf32>
    tpu.vector_store %arg12[%c1_61, %c0_62, %c0_63], %141 {strides = array<i32>} : memref<4x8x16xf32, #tpu.memory_space<vmem>>, vector<1x8x16xf32>,
    %c1_64 = arith.constant 1 : index
    %c0_65 = arith.constant 0 : index
    %c0_66 = arith.constant 0 : index
    %142 = vector.load %arg10[%c1_64, %c0_65, %c0_66] : memref<4x8x1xf32, #tpu.memory_space<vmem>>, vector<1x8x1xf32>
    %143 = vector.shape_cast %142 : vector<1x8x1xf32> to vector<8x1xf32>
    %144 = vector.shape_cast %117 : vector<8x1xf32> to vector<1x8x1xf32>
    tpu.vector_store %arg10[%c1_64, %c0_65, %c0_66], %144 {strides = array<i32>} : memref<4x8x1xf32, #tpu.memory_space<vmem>>, vector<1x8x1xf32>,
    %145 = vector.extract_strided_slice %5 {offsets = [0, 4], sizes = [8, 1], strides = [1, 1]} : vector<8x8xf32> to vector<8x1xf32>
    %146 = vector.extract_strided_slice %8 {offsets = [0, 0], sizes = [8, 16], strides = [1, 1]} : vector<8x32xf32> to vector<8x16xf32>
    %147 = vector.broadcast %145 : vector<8x1xf32> to vector<8x16xf32>
    %148 = arith.mulf %147, %146 : vector<8x16xf32>
    %149 = vector.extract_strided_slice %5 {offsets = [0, 5], sizes = [8, 1], strides = [1, 1]} : vector<8x8xf32> to vector<8x1xf32>
    %150 = vector.extract_strided_slice %8 {offsets = [0, 16], sizes = [8, 16], strides = [1, 1]} : vector<8x32xf32> to vector<8x16xf32>
    %151 = vector.broadcast %149 : vector<8x1xf32> to vector<8x16xf32>
    %152 = arith.mulf %151, %150 : vector<8x16xf32>
    %153 = arith.addf %148, %152 : vector<8x16xf32>
    %cst_67 = arith.constant 5.000000e-01 : f32
    %154 = vector.broadcast %cst_67 : f32 to vector<8x16xf32>
    %155 = arith.mulf %153, %154 : vector<8x16xf32>
    %156 = arith.truncf %155 : vector<8x16xf32> to vector<8x16xbf16>
    %157 = vector.extract_strided_slice %11 {offsets = [0, 4], sizes = [8, 1], strides = [1, 1]} : vector<8x8xf32> to vector<8x1xf32>
    %158 = vector.extract_strided_slice %14 {offsets = [0, 0], sizes = [8, 16], strides = [1, 1]} : vector<8x32xf32> to vector<8x16xf32>
    %159 = vector.broadcast %157 : vector<8x1xf32> to vector<8x16xf32>
    %160 = arith.mulf %159, %158 : vector<8x16xf32>
    %161 = vector.extract_strided_slice %11 {offsets = [0, 5], sizes = [8, 1], strides = [1, 1]} : vector<8x8xf32> to vector<8x1xf32>
    %162 = vector.extract_strided_slice %14 {offsets = [0, 16], sizes = [8, 16], strides = [1, 1]} : vector<8x32xf32> to vector<8x16xf32>
    %163 = vector.broadcast %161 : vector<8x1xf32> to vector<8x16xf32>
    %164 = arith.mulf %163, %162 : vector<8x16xf32>
    %165 = arith.addf %160, %164 : vector<8x16xf32>
    %cst_68 = arith.constant 5.000000e-01 : f32
    %166 = vector.broadcast %cst_68 : f32 to vector<8x16xf32>
    %167 = arith.mulf %165, %166 : vector<8x16xf32>
    %168 = arith.truncf %167 : vector<8x16xf32> to vector<8x16xbf16>
    %c2 = arith.constant 2 : index
    %c0_69 = arith.constant 0 : index
    %c0_70 = arith.constant 0 : index
    %169 = vector.load %arg9[%c2, %c0_69, %c0_70] : memref<4x8x16xbf16, #tpu.memory_space<vmem>>, vector<1x8x16xbf16>
    %170 = vector.shape_cast %169 : vector<1x8x16xbf16> to vector<8x16xbf16>
    %cst_71 = arith.constant dense<0.000000e+00> : vector<8x8xf32>
    %171 = tpu.matmul %170, %156, %cst_71 {dimension_numbers = #tpu.dot_dimension_numbers<[1], [1], [0], [0], [0, 0, 1, 0], [], []>} : vector<8x16xbf16>, vector<8x16xbf16>, vector<8x8xf32> -> vector<8x8xf32>
    %cst_72 = arith.constant -1.000000e+30 : f32
    %172 = vector.broadcast %cst_72 : f32 to vector<8x8xf32>
    %173 = arith.select %22, %171, %172 : vector<8x8xi1>, vector<8x8xf32>
    %c2_73 = arith.constant 2 : index
    %c0_74 = arith.constant 0 : index
    %c0_75 = arith.constant 0 : index
    %174 = vector.load %arg10[%c2_73, %c0_74, %c0_75] : memref<4x8x1xf32, #tpu.memory_space<vmem>>, vector<1x8x1xf32>
    %175 = vector.shape_cast %174 : vector<1x8x1xf32> to vector<8x1xf32>
    %cst_76 = arith.constant dense<0xFF800000> : vector<8xf32>
    %176 = vector.multi_reduction <maximumf>, %173, %cst_76 [1] : vector<8x8xf32> to vector<8xf32>
    %177 = vector.shape_cast %176 : vector<8xf32> to vector<8x1xf32>
    %178 = arith.maximumf %175, %177 : vector<8x1xf32>
    %179 = arith.subf %175, %178 : vector<8x1xf32>
    %180 = math.exp %179 : vector<8x1xf32>
    %181 = vector.broadcast %178 : vector<8x1xf32> to vector<8x8xf32>
    %182 = arith.subf %173, %181 : vector<8x8xf32>
    %183 = math.exp %182 : vector<8x8xf32>
    %c2_77 = arith.constant 2 : index
    %c0_78 = arith.constant 0 : index
    %c0_79 = arith.constant 0 : index
    %184 = vector.load %arg11[%c2_77, %c0_78, %c0_79] : memref<4x8x1xf32, #tpu.memory_space<vmem>>, vector<1x8x1xf32>
    %185 = vector.shape_cast %184 : vector<1x8x1xf32> to vector<8x1xf32>
    %186 = arith.mulf %180, %185 : vector<8x1xf32>
    %cst_80 = arith.constant dense<0.000000e+00> : vector<8xf32>
    %187 = vector.multi_reduction <add>, %183, %cst_80 [1] : vector<8x8xf32> to vector<8xf32>
    %188 = vector.shape_cast %187 : vector<8xf32> to vector<8x1xf32>
    %189 = arith.addf %186, %188 : vector<8x1xf32>
    %c2_81 = arith.constant 2 : index
    %c0_82 = arith.constant 0 : index
    %c0_83 = arith.constant 0 : index
    %190 = vector.load %arg11[%c2_81, %c0_82, %c0_83] : memref<4x8x1xf32, #tpu.memory_space<vmem>>, vector<1x8x1xf32>
    %191 = vector.shape_cast %190 : vector<1x8x1xf32> to vector<8x1xf32>
    %192 = vector.shape_cast %189 : vector<8x1xf32> to vector<1x8x1xf32>
    tpu.vector_store %arg11[%c2_81, %c0_82, %c0_83], %192 {strides = array<i32>} : memref<4x8x1xf32, #tpu.memory_space<vmem>>, vector<1x8x1xf32>,
    %c2_84 = arith.constant 2 : index
    %c0_85 = arith.constant 0 : index
    %c0_86 = arith.constant 0 : index
    %193 = vector.load %arg12[%c2_84, %c0_85, %c0_86] : memref<4x8x16xf32, #tpu.memory_space<vmem>>, vector<1x8x16xf32>
    %194 = vector.shape_cast %193 : vector<1x8x16xf32> to vector<8x16xf32>
    %195 = vector.broadcast %180 : vector<8x1xf32> to vector<8x16xf32>
    %196 = arith.mulf %195, %194 : vector<8x16xf32>
    %197 = arith.truncf %183 : vector<8x8xf32> to vector<8x8xbf16>
    %cst_87 = arith.constant dense<0.000000e+00> : vector<8x16xf32>
    %198 = tpu.matmul %197, %168, %cst_87 {dimension_numbers = #tpu.dot_dimension_numbers<[1], [0], [0], [1], [0, 0, 1, 1], [], []>} : vector<8x8xbf16>, vector<8x16xbf16>, vector<8x16xf32> -> vector<8x16xf32>
    %199 = arith.addf %196, %198 : vector<8x16xf32>
    %c2_88 = arith.constant 2 : index
    %c0_89 = arith.constant 0 : index
    %c0_90 = arith.constant 0 : index
    %200 = vector.load %arg12[%c2_88, %c0_89, %c0_90] : memref<4x8x16xf32, #tpu.memory_space<vmem>>, vector<1x8x16xf32>
    %201 = vector.shape_cast %200 : vector<1x8x16xf32> to vector<8x16xf32>
    %202 = vector.shape_cast %199 : vector<8x16xf32> to vector<1x8x16xf32>
    tpu.vector_store %arg12[%c2_88, %c0_89, %c0_90], %202 {strides = array<i32>} : memref<4x8x16xf32, #tpu.memory_space<vmem>>, vector<1x8x16xf32>,
    %c2_91 = arith.constant 2 : index
    %c0_92 = arith.constant 0 : index
    %c0_93 = arith.constant 0 : index
    %203 = vector.load %arg10[%c2_91, %c0_92, %c0_93] : memref<4x8x1xf32, #tpu.memory_space<vmem>>, vector<1x8x1xf32>
    %204 = vector.shape_cast %203 : vector<1x8x1xf32> to vector<8x1xf32>
    %205 = vector.shape_cast %178 : vector<8x1xf32> to vector<1x8x1xf32>
    tpu.vector_store %arg10[%c2_91, %c0_92, %c0_93], %205 {strides = array<i32>} : memref<4x8x1xf32, #tpu.memory_space<vmem>>, vector<1x8x1xf32>,
    %206 = vector.extract_strided_slice %5 {offsets = [0, 6], sizes = [8, 1], strides = [1, 1]} : vector<8x8xf32> to vector<8x1xf32>
    %207 = vector.extract_strided_slice %8 {offsets = [0, 0], sizes = [8, 16], strides = [1, 1]} : vector<8x32xf32> to vector<8x16xf32>
    %208 = vector.broadcast %206 : vector<8x1xf32> to vector<8x16xf32>
    %209 = arith.mulf %208, %207 : vector<8x16xf32>
    %210 = vector.extract_strided_slice %5 {offsets = [0, 7], sizes = [8, 1], strides = [1, 1]} : vector<8x8xf32> to vector<8x1xf32>
    %211 = vector.extract_strided_slice %8 {offsets = [0, 16], sizes = [8, 16], strides = [1, 1]} : vector<8x32xf32> to vector<8x16xf32>
    %212 = vector.broadcast %210 : vector<8x1xf32> to vector<8x16xf32>
    %213 = arith.mulf %212, %211 : vector<8x16xf32>
    %214 = arith.addf %209, %213 : vector<8x16xf32>
    %cst_94 = arith.constant 5.000000e-01 : f32
    %215 = vector.broadcast %cst_94 : f32 to vector<8x16xf32>
    %216 = arith.mulf %214, %215 : vector<8x16xf32>
    %217 = arith.truncf %216 : vector<8x16xf32> to vector<8x16xbf16>
    %218 = vector.extract_strided_slice %11 {offsets = [0, 6], sizes = [8, 1], strides = [1, 1]} : vector<8x8xf32> to vector<8x1xf32>
    %219 = vector.extract_strided_slice %14 {offsets = [0, 0], sizes = [8, 16], strides = [1, 1]} : vector<8x32xf32> to vector<8x16xf32>
    %220 = vector.broadcast %218 : vector<8x1xf32> to vector<8x16xf32>
    %221 = arith.mulf %220, %219 : vector<8x16xf32>
    %222 = vector.extract_strided_slice %11 {offsets = [0, 7], sizes = [8, 1], strides = [1, 1]} : vector<8x8xf32> to vector<8x1xf32>
    %223 = vector.extract_strided_slice %14 {offsets = [0, 16], sizes = [8, 16], strides = [1, 1]} : vector<8x32xf32> to vector<8x16xf32>
    %224 = vector.broadcast %222 : vector<8x1xf32> to vector<8x16xf32>
    %225 = arith.mulf %224, %223 : vector<8x16xf32>
    %226 = arith.addf %221, %225 : vector<8x16xf32>
    %cst_95 = arith.constant 5.000000e-01 : f32
    %227 = vector.broadcast %cst_95 : f32 to vector<8x16xf32>
    %228 = arith.mulf %226, %227 : vector<8x16xf32>
    %229 = arith.truncf %228 : vector<8x16xf32> to vector<8x16xbf16>
    %c3 = arith.constant 3 : index
    %c0_96 = arith.constant 0 : index
    %c0_97 = arith.constant 0 : index
    %230 = vector.load %arg9[%c3, %c0_96, %c0_97] : memref<4x8x16xbf16, #tpu.memory_space<vmem>>, vector<1x8x16xbf16>
    %231 = vector.shape_cast %230 : vector<1x8x16xbf16> to vector<8x16xbf16>
    %cst_98 = arith.constant dense<0.000000e+00> : vector<8x8xf32>
    %232 = tpu.matmul %231, %217, %cst_98 {dimension_numbers = #tpu.dot_dimension_numbers<[1], [1], [0], [0], [0, 0, 1, 0], [], []>} : vector<8x16xbf16>, vector<8x16xbf16>, vector<8x8xf32> -> vector<8x8xf32>
    %cst_99 = arith.constant -1.000000e+30 : f32
    %233 = vector.broadcast %cst_99 : f32 to vector<8x8xf32>
    %234 = arith.select %22, %232, %233 : vector<8x8xi1>, vector<8x8xf32>
    %c3_100 = arith.constant 3 : index
    %c0_101 = arith.constant 0 : index
    %c0_102 = arith.constant 0 : index
    %235 = vector.load %arg10[%c3_100, %c0_101, %c0_102] : memref<4x8x1xf32, #tpu.memory_space<vmem>>, vector<1x8x1xf32>
    %236 = vector.shape_cast %235 : vector<1x8x1xf32> to vector<8x1xf32>
    %cst_103 = arith.constant dense<0xFF800000> : vector<8xf32>
    %237 = vector.multi_reduction <maximumf>, %234, %cst_103 [1] : vector<8x8xf32> to vector<8xf32>
    %238 = vector.shape_cast %237 : vector<8xf32> to vector<8x1xf32>
    %239 = arith.maximumf %236, %238 : vector<8x1xf32>
    %240 = arith.subf %236, %239 : vector<8x1xf32>
    %241 = math.exp %240 : vector<8x1xf32>
    %242 = vector.broadcast %239 : vector<8x1xf32> to vector<8x8xf32>
    %243 = arith.subf %234, %242 : vector<8x8xf32>
    %244 = math.exp %243 : vector<8x8xf32>
    %c3_104 = arith.constant 3 : index
    %c0_105 = arith.constant 0 : index
    %c0_106 = arith.constant 0 : index
    %245 = vector.load %arg11[%c3_104, %c0_105, %c0_106] : memref<4x8x1xf32, #tpu.memory_space<vmem>>, vector<1x8x1xf32>
    %246 = vector.shape_cast %245 : vector<1x8x1xf32> to vector<8x1xf32>
    %247 = arith.mulf %241, %246 : vector<8x1xf32>
    %cst_107 = arith.constant dense<0.000000e+00> : vector<8xf32>
    %248 = vector.multi_reduction <add>, %244, %cst_107 [1] : vector<8x8xf32> to vector<8xf32>
    %249 = vector.shape_cast %248 : vector<8xf32> to vector<8x1xf32>
    %250 = arith.addf %247, %249 : vector<8x1xf32>
    %c3_108 = arith.constant 3 : index
    %c0_109 = arith.constant 0 : index
    %c0_110 = arith.constant 0 : index
    %251 = vector.load %arg11[%c3_108, %c0_109, %c0_110] : memref<4x8x1xf32, #tpu.memory_space<vmem>>, vector<1x8x1xf32>
    %252 = vector.shape_cast %251 : vector<1x8x1xf32> to vector<8x1xf32>
    %253 = vector.shape_cast %250 : vector<8x1xf32> to vector<1x8x1xf32>
    tpu.vector_store %arg11[%c3_108, %c0_109, %c0_110], %253 {strides = array<i32>} : memref<4x8x1xf32, #tpu.memory_space<vmem>>, vector<1x8x1xf32>,
    %c3_111 = arith.constant 3 : index
    %c0_112 = arith.constant 0 : index
    %c0_113 = arith.constant 0 : index
    %254 = vector.load %arg12[%c3_111, %c0_112, %c0_113] : memref<4x8x16xf32, #tpu.memory_space<vmem>>, vector<1x8x16xf32>
    %255 = vector.shape_cast %254 : vector<1x8x16xf32> to vector<8x16xf32>
    %256 = vector.broadcast %241 : vector<8x1xf32> to vector<8x16xf32>
    %257 = arith.mulf %256, %255 : vector<8x16xf32>
    %258 = arith.truncf %244 : vector<8x8xf32> to vector<8x8xbf16>
    %cst_114 = arith.constant dense<0.000000e+00> : vector<8x16xf32>
    %259 = tpu.matmul %258, %229, %cst_114 {dimension_numbers = #tpu.dot_dimension_numbers<[1], [0], [0], [1], [0, 0, 1, 1], [], []>} : vector<8x8xbf16>, vector<8x16xbf16>, vector<8x16xf32> -> vector<8x16xf32>
    %260 = arith.addf %257, %259 : vector<8x16xf32>
    %c3_115 = arith.constant 3 : index
    %c0_116 = arith.constant 0 : index
    %c0_117 = arith.constant 0 : index
    %261 = vector.load %arg12[%c3_115, %c0_116, %c0_117] : memref<4x8x16xf32, #tpu.memory_space<vmem>>, vector<1x8x16xf32>
    %262 = vector.shape_cast %261 : vector<1x8x16xf32> to vector<8x16xf32>
    %263 = vector.shape_cast %260 : vector<8x16xf32> to vector<1x8x16xf32>
    tpu.vector_store %arg12[%c3_115, %c0_116, %c0_117], %263 {strides = array<i32>} : memref<4x8x16xf32, #tpu.memory_space<vmem>>, vector<1x8x16xf32>,
    %c3_118 = arith.constant 3 : index
    %c0_119 = arith.constant 0 : index
    %c0_120 = arith.constant 0 : index
    %264 = vector.load %arg10[%c3_118, %c0_119, %c0_120] : memref<4x8x1xf32, #tpu.memory_space<vmem>>, vector<1x8x1xf32>
    %265 = vector.shape_cast %264 : vector<1x8x1xf32> to vector<8x1xf32>
    %266 = vector.shape_cast %239 : vector<8x1xf32> to vector<1x8x1xf32>
    tpu.vector_store %arg10[%c3_118, %c0_119, %c0_120], %266 {strides = array<i32>} : memref<4x8x1xf32, #tpu.memory_space<vmem>>, vector<1x8x1xf32>,
    %c0_i32_121 = arith.constant 0 : i32
    %267 = arith.cmpi eq, %arg1, %c0_i32_121 : i32
    %268 = arith.extui %267 : i1 to i32
    %c0_i32_122 = arith.constant 0 : i32
    %269 = arith.cmpi ne, %268, %c0_i32_122 : i32
    scf.if %269 {
      %c0_123 = arith.constant 0 : index
      %c0_124 = arith.constant 0 : index
      %c0_125 = arith.constant 0 : index
      %270 = vector.load %arg12[%c0_123, %c0_124, %c0_125] : memref<4x8x16xf32, #tpu.memory_space<vmem>>, vector<1x8x16xf32>
      %271 = vector.shape_cast %270 : vector<1x8x16xf32> to vector<8x16xf32>
      %c0_126 = arith.constant 0 : index
      %c0_127 = arith.constant 0 : index
      %c0_128 = arith.constant 0 : index
      %272 = vector.load %arg11[%c0_126, %c0_127, %c0_128] : memref<4x8x1xf32, #tpu.memory_space<vmem>>, vector<1x8x1xf32>
      %273 = vector.shape_cast %272 : vector<1x8x1xf32> to vector<8x1xf32>
      %274 = tpu.reciprocal %273 {approx = true} : vector<8x1xf32> -> vector<8x1xf32>
      %275 = vector.broadcast %274 : vector<8x1xf32> to vector<8x16xf32>
      %276 = arith.mulf %271, %275 : vector<8x16xf32>
      %c1_129 = arith.constant 1 : index
      %c0_130 = arith.constant 0 : index
      %c0_131 = arith.constant 0 : index
      %277 = vector.load %arg12[%c1_129, %c0_130, %c0_131] : memref<4x8x16xf32, #tpu.memory_space<vmem>>, vector<1x8x16xf32>
      %278 = vector.shape_cast %277 : vector<1x8x16xf32> to vector<8x16xf32>
      %c1_132 = arith.constant 1 : index
      %c0_133 = arith.constant 0 : index
      %c0_134 = arith.constant 0 : index
      %279 = vector.load %arg11[%c1_132, %c0_133, %c0_134] : memref<4x8x1xf32, #tpu.memory_space<vmem>>, vector<1x8x1xf32>
      %280 = vector.shape_cast %279 : vector<1x8x1xf32> to vector<8x1xf32>
      %281 = tpu.reciprocal %280 {approx = true} : vector<8x1xf32> -> vector<8x1xf32>
      %282 = vector.broadcast %281 : vector<8x1xf32> to vector<8x16xf32>
      %283 = arith.mulf %278, %282 : vector<8x16xf32>
      %c2_135 = arith.constant 2 : index
      %c0_136 = arith.constant 0 : index
      %c0_137 = arith.constant 0 : index
      %284 = vector.load %arg12[%c2_135, %c0_136, %c0_137] : memref<4x8x16xf32, #tpu.memory_space<vmem>>, vector<1x8x16xf32>
      %285 = vector.shape_cast %284 : vector<1x8x16xf32> to vector<8x16xf32>
      %c2_138 = arith.constant 2 : index
      %c0_139 = arith.constant 0 : index
      %c0_140 = arith.constant 0 : index
      %286 = vector.load %arg11[%c2_138, %c0_139, %c0_140] : memref<4x8x1xf32, #tpu.memory_space<vmem>>, vector<1x8x1xf32>
      %287 = vector.shape_cast %286 : vector<1x8x1xf32> to vector<8x1xf32>
      %288 = tpu.reciprocal %287 {approx = true} : vector<8x1xf32> -> vector<8x1xf32>
      %289 = vector.broadcast %288 : vector<8x1xf32> to vector<8x16xf32>
      %290 = arith.mulf %285, %289 : vector<8x16xf32>
      %c3_141 = arith.constant 3 : index
      %c0_142 = arith.constant 0 : index
      %c0_143 = arith.constant 0 : index
      %291 = vector.load %arg12[%c3_141, %c0_142, %c0_143] : memref<4x8x16xf32, #tpu.memory_space<vmem>>, vector<1x8x16xf32>
      %292 = vector.shape_cast %291 : vector<1x8x16xf32> to vector<8x16xf32>
      %c3_144 = arith.constant 3 : index
      %c0_145 = arith.constant 0 : index
      %c0_146 = arith.constant 0 : index
      %293 = vector.load %arg11[%c3_144, %c0_145, %c0_146] : memref<4x8x1xf32, #tpu.memory_space<vmem>>, vector<1x8x1xf32>
      %294 = vector.shape_cast %293 : vector<1x8x1xf32> to vector<8x1xf32>
      %295 = tpu.reciprocal %294 {approx = true} : vector<8x1xf32> -> vector<8x1xf32>
      %296 = vector.broadcast %295 : vector<8x1xf32> to vector<8x16xf32>
      %297 = arith.mulf %292, %296 : vector<8x16xf32>
      %298 = tpu.concatenate %276, %283, %290, %297 in 1 : vector<8x16xf32>, vector<8x16xf32>, vector<8x16xf32>, vector<8x16xf32> -> vector<8x64xf32>
      %299 = arith.truncf %298 : vector<8x64xf32> to vector<8x64xbf16>
      %c0_147 = arith.constant 0 : index
      %c0_148 = arith.constant 0 : index
      %c0_149 = arith.constant 0 : index
      %300 = vector.load %arg8[%c0_147, %c0_148, %c0_149] : memref<1x8x64xbf16, #tpu.memory_space<vmem>>, vector<1x8x64xbf16>
      %301 = vector.shape_cast %300 : vector<1x8x64xbf16> to vector<8x64xbf16>
      %302 = vector.shape_cast %299 : vector<8x64xbf16> to vector<1x8x64xbf16>
      tpu.vector_store %arg8[%c0_147, %c0_148, %c0_149], %302 {strides = array<i32>} : memref<1x8x64xbf16, #tpu.memory_space<vmem>>, vector<1x8x64xbf16>,
    } else {
    }
    return
  }
  func.func @transform_0(%arg0: i32, %arg1: i32) -> (i32, i32, i32) {
    %c0_i32 = arith.constant 0 : i32
    %c0_i32_0 = arith.constant 0 : i32
    %c0_i32_1 = arith.constant 0 : i32
    return %arg0, %c0_i32, %c0_i32_0 : i32, i32, i32
  }
  func.func @transform_1(%arg0: i32, %arg1: i32) -> (i32, i32, i32) {
    %c0_i32 = arith.constant 0 : i32
    %c0_i32_0 = arith.constant 0 : i32
    %c0_i32_1 = arith.constant 0 : i32
    return %arg0, %c0_i32, %c0_i32_0 : i32, i32, i32
  }
  func.func @transform_2(%arg0: i32, %arg1: i32) -> (i32, i32, i32) {
    %c0_i32 = arith.constant 0 : i32
    %c0_i32_0 = arith.constant 0 : i32
    return %arg0, %arg1, %c0_i32 : i32, i32, i32
  }
  func.func @transform_3(%arg0: i32, %arg1: i32) -> (i32, i32, i32) {
    %c0_i32 = arith.constant 0 : i32
    %c0_i32_0 = arith.constant 0 : i32
    return %arg0, %arg1, %c0_i32 : i32, i32, i32
  }
  func.func @transform_4(%arg0: i32, %arg1: i32) -> (i32, i32, i32) {
    %c0_i32 = arith.constant 0 : i32
    %c0_i32_0 = arith.constant 0 : i32
    return %arg0, %arg1, %c0_i32 : i32, i32, i32
  }
  func.func @transform_5(%arg0: i32, %arg1: i32) -> (i32, i32, i32) {
    %c0_i32 = arith.constant 0 : i32
    %c0_i32_0 = arith.constant 0 : i32
    return %arg0, %arg1, %c0_i32 : i32, i32, i32
  }
  func.func @transform_6(%arg0: i32, %arg1: i32) -> (i32, i32, i32) {
    %c0_i32 = arith.constant 0 : i32
    %c0_i32_0 = arith.constant 0 : i32
    %c0_i32_1 = arith.constant 0 : i32
    return %arg0, %c0_i32, %c0_i32_0 : i32, i32, i32
  }
}

module attributes {stable_mosaic.version = 11 : i64} {
  func.func @_mlp_kernel(%arg0: i32, %arg1: i32, %arg2: memref<16x64xbf16, #tpu.memory_space<vmem>>, %arg3: memref<64x170xbf16, #tpu.memory_space<vmem>>, %arg4: memref<64x170xbf16, #tpu.memory_space<vmem>>, %arg5: memref<170x64xbf16, #tpu.memory_space<vmem>>, %arg6: memref<16x64xbf16, #tpu.memory_space<vmem>>, %arg7: memref<16x64xbf16, #tpu.memory_space<vmem>>) attributes {dimension_semantics = [#tpu.dimension_semantics<parallel>, #tpu.dimension_semantics<arbitrary>], iteration_bounds = array<i64: 1, 1>, scalar_prefetch = 0 : i64, scratch_operands = 1 : i64, tpu.core_type = #tpu.core_type<tc>, window_params = [{transform_indices = @transform_0, window_bounds = array<i64: 16, 64>}, {transform_indices = @transform_1, window_bounds = array<i64: 64, 170>}, {transform_indices = @transform_2, window_bounds = array<i64: 64, 170>}, {transform_indices = @transform_3, window_bounds = array<i64: 170, 64>}, {transform_indices = @transform_4, window_bounds = array<i64: 16, 64>}]} {
    %c0_i32 = arith.constant 0 : i32
    %0 = arith.cmpi eq, %arg1, %c0_i32 : i32
    %1 = arith.extui %0 : i1 to i32
    %c0_i32_0 = arith.constant 0 : i32
    %2 = arith.cmpi ne, %1, %c0_i32_0 : i32
    scf.if %2 {
      %c0_15 = arith.constant 0 : index
      %c0_16 = arith.constant 0 : index
      %23 = vector.load %arg2[%c0_15, %c0_16] : memref<16x64xbf16, #tpu.memory_space<vmem>>, vector<16x64xbf16>
      %24 = arith.extf %23 : vector<16x64xbf16> to vector<16x64xf32>
      %25 = arith.mulf %24, %24 : vector<16x64xf32>
      %cst_17 = arith.constant dense<0.000000e+00> : vector<16xf32>
      %26 = vector.multi_reduction <add>, %25, %cst_17 [1] : vector<16x64xf32> to vector<16xf32>
      %27 = vector.shape_cast %26 : vector<16xf32> to vector<16x1xf32>
      %cst_18 = arith.constant 6.400000e+01 : f32
      %28 = vector.broadcast %cst_18 : f32 to vector<16x1xf32>
      %29 = arith.divf %27, %28 : vector<16x1xf32>
      %cst_19 = arith.constant 1.1920929E-7 : f32
      %30 = vector.broadcast %cst_19 : f32 to vector<16x1xf32>
      %31 = arith.addf %29, %30 : vector<16x1xf32>
      %32 = math.rsqrt %31 : vector<16x1xf32>
      %33 = vector.broadcast %32 : vector<16x1xf32> to vector<16x64xf32>
      %34 = arith.mulf %24, %33 : vector<16x64xf32>
      %35 = arith.truncf %34 : vector<16x64xf32> to vector<16x64xbf16>
      %c0_20 = arith.constant 0 : index
      %c0_21 = arith.constant 0 : index
      %36 = vector.load %arg7[%c0_20, %c0_21] : memref<16x64xbf16, #tpu.memory_space<vmem>>, vector<16x64xbf16>
      tpu.vector_store %arg7[%c0_20, %c0_21], %35 {strides = array<i32>} : memref<16x64xbf16, #tpu.memory_space<vmem>>, vector<16x64xbf16>,
      %cst_22 = arith.constant 0.000000e+00 : bf16
      %37 = vector.broadcast %cst_22 : bf16 to vector<16x64xbf16>
      %c0_23 = arith.constant 0 : index
      %c0_24 = arith.constant 0 : index
      %38 = vector.load %arg6[%c0_23, %c0_24] : memref<16x64xbf16, #tpu.memory_space<vmem>>, vector<16x64xbf16>
      tpu.vector_store %arg6[%c0_23, %c0_24], %37 {strides = array<i32>} : memref<16x64xbf16, #tpu.memory_space<vmem>>, vector<16x64xbf16>,
    } else {
    }
    %c0 = arith.constant 0 : index
    %c0_1 = arith.constant 0 : index
    %3 = vector.load %arg7[%c0, %c0_1] : memref<16x64xbf16, #tpu.memory_space<vmem>>, vector<16x64xbf16>
    %c0_2 = arith.constant 0 : index
    %c0_3 = arith.constant 0 : index
    %4 = vector.load %arg3[%c0_2, %c0_3] : memref<64x170xbf16, #tpu.memory_space<vmem>>, vector<64x170xbf16>
    %cst = arith.constant dense<0.000000e+00> : vector<16x170xf32>
    %5 = tpu.matmul %3, %4, %cst {dimension_numbers = #tpu.dot_dimension_numbers<[1], [0], [0], [1], [0, 0, 1, 1], [], []>} : vector<16x64xbf16>, vector<64x170xbf16>, vector<16x170xf32> -> vector<16x170xf32>
    %c0_4 = arith.constant 0 : index
    %c0_5 = arith.constant 0 : index
    %6 = vector.load %arg4[%c0_4, %c0_5] : memref<64x170xbf16, #tpu.memory_space<vmem>>, vector<64x170xbf16>
    %cst_6 = arith.constant dense<0.000000e+00> : vector<16x170xf32>
    %7 = tpu.matmul %3, %6, %cst_6 {dimension_numbers = #tpu.dot_dimension_numbers<[1], [0], [0], [1], [0, 0, 1, 1], [], []>} : vector<16x64xbf16>, vector<64x170xbf16>, vector<16x170xf32> -> vector<16x170xf32>
    %8 = arith.negf %5 : vector<16x170xf32>
    %9 = math.exp %8 : vector<16x170xf32>
    %cst_7 = arith.constant 1.000000e+00 : f32
    %10 = vector.broadcast %cst_7 : f32 to vector<16x170xf32>
    %11 = arith.addf %10, %9 : vector<16x170xf32>
    %12 = arith.divf %10, %11 : vector<16x170xf32>
    %13 = arith.mulf %5, %12 : vector<16x170xf32>
    %14 = arith.mulf %13, %7 : vector<16x170xf32>
    %15 = arith.truncf %14 : vector<16x170xf32> to vector<16x170xbf16>
    %c0_8 = arith.constant 0 : index
    %c0_9 = arith.constant 0 : index
    %16 = vector.load %arg5[%c0_8, %c0_9] : memref<170x64xbf16, #tpu.memory_space<vmem>>, vector<170x64xbf16>
    %cst_10 = arith.constant dense<0.000000e+00> : vector<16x64xf32>
    %17 = tpu.matmul %15, %16, %cst_10 {dimension_numbers = #tpu.dot_dimension_numbers<[1], [0], [0], [1], [0, 0, 1, 1], [], []>} : vector<16x170xbf16>, vector<170x64xbf16>, vector<16x64xf32> -> vector<16x64xf32>
    %c0_11 = arith.constant 0 : index
    %c0_12 = arith.constant 0 : index
    %18 = vector.load %arg6[%c0_11, %c0_12] : memref<16x64xbf16, #tpu.memory_space<vmem>>, vector<16x64xbf16>
    %19 = arith.extf %18 : vector<16x64xbf16> to vector<16x64xf32>
    %20 = arith.addf %19, %17 : vector<16x64xf32>
    %21 = arith.truncf %20 : vector<16x64xf32> to vector<16x64xbf16>
    %c0_13 = arith.constant 0 : index
    %c0_14 = arith.constant 0 : index
    %22 = vector.load %arg6[%c0_13, %c0_14] : memref<16x64xbf16, #tpu.memory_space<vmem>>, vector<16x64xbf16>
    tpu.vector_store %arg6[%c0_13, %c0_14], %21 {strides = array<i32>} : memref<16x64xbf16, #tpu.memory_space<vmem>>, vector<16x64xbf16>,
    return
  }
  func.func @transform_0(%arg0: i32, %arg1: i32) -> (i32, i32) {
    %c0_i32 = arith.constant 0 : i32
    %c0_i32_0 = arith.constant 0 : i32
    return %arg0, %c0_i32 : i32, i32
  }
  func.func @transform_1(%arg0: i32, %arg1: i32) -> (i32, i32) {
    %c0_i32 = arith.constant 0 : i32
    %c0_i32_0 = arith.constant 0 : i32
    return %c0_i32, %arg1 : i32, i32
  }
  func.func @transform_2(%arg0: i32, %arg1: i32) -> (i32, i32) {
    %c0_i32 = arith.constant 0 : i32
    %c0_i32_0 = arith.constant 0 : i32
    return %c0_i32, %arg1 : i32, i32
  }
  func.func @transform_3(%arg0: i32, %arg1: i32) -> (i32, i32) {
    %c0_i32 = arith.constant 0 : i32
    %c0_i32_0 = arith.constant 0 : i32
    return %arg1, %c0_i32 : i32, i32
  }
  func.func @transform_4(%arg0: i32, %arg1: i32) -> (i32, i32) {
    %c0_i32 = arith.constant 0 : i32
    %c0_i32_0 = arith.constant 0 : i32
    return %arg0, %c0_i32 : i32, i32
  }
}

module attributes {stable_mosaic.version = 11 : i64} {
  func.func @_linear_kernel(%arg0: i32, %arg1: i32, %arg2: memref<16x64xbf16, #tpu.memory_space<vmem>>, %arg3: memref<64x128xbf16, #tpu.memory_space<vmem>>, %arg4: memref<16x128xbf16, #tpu.memory_space<vmem>>) attributes {dimension_semantics = [#tpu.dimension_semantics<parallel>, #tpu.dimension_semantics<parallel>], iteration_bounds = array<i64: 1, 7>, scalar_prefetch = 0 : i64, scratch_operands = 0 : i64, tpu.core_type = #tpu.core_type<tc>, window_params = [{transform_indices = @transform_0, window_bounds = array<i64: 16, 64>}, {transform_indices = @transform_1, window_bounds = array<i64: 64, 128>}, {transform_indices = @transform_2, window_bounds = array<i64: 16, 128>}]} {
    %c0 = arith.constant 0 : index
    %c0_0 = arith.constant 0 : index
    %0 = vector.load %arg2[%c0, %c0_0] : memref<16x64xbf16, #tpu.memory_space<vmem>>, vector<16x64xbf16>
    %1 = arith.extf %0 : vector<16x64xbf16> to vector<16x64xf32>
    %2 = arith.mulf %1, %1 : vector<16x64xf32>
    %cst = arith.constant dense<0.000000e+00> : vector<16xf32>
    %3 = vector.multi_reduction <add>, %2, %cst [1] : vector<16x64xf32> to vector<16xf32>
    %4 = vector.shape_cast %3 : vector<16xf32> to vector<16x1xf32>
    %cst_1 = arith.constant 6.400000e+01 : f32
    %5 = vector.broadcast %cst_1 : f32 to vector<16x1xf32>
    %6 = arith.divf %4, %5 : vector<16x1xf32>
    %cst_2 = arith.constant 1.1920929E-7 : f32
    %7 = vector.broadcast %cst_2 : f32 to vector<16x1xf32>
    %8 = arith.addf %6, %7 : vector<16x1xf32>
    %9 = math.rsqrt %8 : vector<16x1xf32>
    %10 = vector.broadcast %9 : vector<16x1xf32> to vector<16x64xf32>
    %11 = arith.mulf %1, %10 : vector<16x64xf32>
    %12 = arith.truncf %11 : vector<16x64xf32> to vector<16x64xbf16>
    %c0_3 = arith.constant 0 : index
    %c0_4 = arith.constant 0 : index
    %13 = vector.load %arg3[%c0_3, %c0_4] : memref<64x128xbf16, #tpu.memory_space<vmem>>, vector<64x128xbf16>
    %cst_5 = arith.constant dense<0.000000e+00> : vector<16x128xf32>
    %14 = tpu.matmul %12, %13, %cst_5 {dimension_numbers = #tpu.dot_dimension_numbers<[1], [0], [0], [1], [0, 0, 1, 1], [], []>} : vector<16x64xbf16>, vector<64x128xbf16>, vector<16x128xf32> -> vector<16x128xf32>
    %15 = arith.truncf %14 : vector<16x128xf32> to vector<16x128xbf16>
    %c0_6 = arith.constant 0 : index
    %c0_7 = arith.constant 0 : index
    %16 = vector.load %arg4[%c0_6, %c0_7] : memref<16x128xbf16, #tpu.memory_space<vmem>>, vector<16x128xbf16>
    tpu.vector_store %arg4[%c0_6, %c0_7], %15 {strides = array<i32>} : memref<16x128xbf16, #tpu.memory_space<vmem>>, vector<16x128xbf16>,
    return
  }
  func.func @transform_0(%arg0: i32, %arg1: i32) -> (i32, i32) {
    %c0_i32 = arith.constant 0 : i32
    %c0_i32_0 = arith.constant 0 : i32
    return %arg0, %c0_i32 : i32, i32
  }
  func.func @transform_1(%arg0: i32, %arg1: i32) -> (i32, i32) {
    %c0_i32 = arith.constant 0 : i32
    %c0_i32_0 = arith.constant 0 : i32
    return %c0_i32, %arg1 : i32, i32
  }
  func.func @transform_2(%arg0: i32, %arg1: i32) -> (i32, i32) {
    %c0_i32 = arith.constant 0 : i32
    return %arg0, %arg1 : i32, i32
  }
}

module attributes {stable_mosaic.version = 11 : i64} {
  func.func @_linear_kernel(%arg0: i32, %arg1: i32, %arg2: memref<16x64xbf16, #tpu.memory_space<vmem>>, %arg3: memref<64x64xbf16, #tpu.memory_space<vmem>>, %arg4: memref<16x64xf32, #tpu.memory_space<vmem>>) attributes {dimension_semantics = [#tpu.dimension_semantics<parallel>, #tpu.dimension_semantics<parallel>], iteration_bounds = array<i64: 1, 1>, scalar_prefetch = 0 : i64, scratch_operands = 0 : i64, tpu.core_type = #tpu.core_type<tc>, window_params = [{transform_indices = @transform_0, window_bounds = array<i64: 16, 64>}, {transform_indices = @transform_1, window_bounds = array<i64: 64, 64>}, {transform_indices = @transform_2, window_bounds = array<i64: 16, 64>}]} {
    %c0 = arith.constant 0 : index
    %c0_0 = arith.constant 0 : index
    %0 = vector.load %arg2[%c0, %c0_0] : memref<16x64xbf16, #tpu.memory_space<vmem>>, vector<16x64xbf16>
    %1 = arith.extf %0 : vector<16x64xbf16> to vector<16x64xf32>
    %2 = arith.mulf %1, %1 : vector<16x64xf32>
    %cst = arith.constant dense<0.000000e+00> : vector<16xf32>
    %3 = vector.multi_reduction <add>, %2, %cst [1] : vector<16x64xf32> to vector<16xf32>
    %4 = vector.shape_cast %3 : vector<16xf32> to vector<16x1xf32>
    %cst_1 = arith.constant 6.400000e+01 : f32
    %5 = vector.broadcast %cst_1 : f32 to vector<16x1xf32>
    %6 = arith.divf %4, %5 : vector<16x1xf32>
    %cst_2 = arith.constant 1.1920929E-7 : f32
    %7 = vector.broadcast %cst_2 : f32 to vector<16x1xf32>
    %8 = arith.addf %6, %7 : vector<16x1xf32>
    %9 = math.rsqrt %8 : vector<16x1xf32>
    %10 = vector.broadcast %9 : vector<16x1xf32> to vector<16x64xf32>
    %11 = arith.mulf %1, %10 : vector<16x64xf32>
    %12 = arith.truncf %11 : vector<16x64xf32> to vector<16x64xbf16>
    %c0_3 = arith.constant 0 : index
    %c0_4 = arith.constant 0 : index
    %13 = vector.load %arg3[%c0_3, %c0_4] : memref<64x64xbf16, #tpu.memory_space<vmem>>, vector<64x64xbf16>
    %cst_5 = arith.constant dense<0.000000e+00> : vector<16x64xf32>
    %14 = tpu.matmul %12, %13, %cst_5 {dimension_numbers = #tpu.dot_dimension_numbers<[1], [0], [0], [1], [0, 0, 1, 1], [], []>} : vector<16x64xbf16>, vector<64x64xbf16>, vector<16x64xf32> -> vector<16x64xf32>
    %c0_6 = arith.constant 0 : index
    %c0_7 = arith.constant 0 : index
    %15 = vector.load %arg4[%c0_6, %c0_7] : memref<16x64xf32, #tpu.memory_space<vmem>>, vector<16x64xf32>
    tpu.vector_store %arg4[%c0_6, %c0_7], %14 {strides = array<i32>} : memref<16x64xf32, #tpu.memory_space<vmem>>, vector<16x64xf32>,
    return
  }
  func.func @transform_0(%arg0: i32, %arg1: i32) -> (i32, i32) {
    %c0_i32 = arith.constant 0 : i32
    %c0_i32_0 = arith.constant 0 : i32
    return %arg0, %c0_i32 : i32, i32
  }
  func.func @transform_1(%arg0: i32, %arg1: i32) -> (i32, i32) {
    %c0_i32 = arith.constant 0 : i32
    %c0_i32_0 = arith.constant 0 : i32
    return %c0_i32, %arg1 : i32, i32
  }
  func.func @transform_2(%arg0: i32, %arg1: i32) -> (i32, i32) {
    %c0_i32 = arith.constant 0 : i32
    return %arg0, %arg1 : i32, i32
  }
}

</mosaic_0001>

<llo_original>
// kernel: _lambda_.9
$region0: #{_lambda_.9}
  #allocation0 [shape = 'u32[]', space=smem, size = 0x4, offset = 0x4, fixed_abs, tag = 'smem constant byte address 0x4 - core index']
  #allocation1 [shape = 'u32[72,128]{1,0:T(1,128)}', space=vmem, size = 0x9000, scoped, tag = 'internal scratch']
  %s0 = inlined_call_operand.vmem [shape: bf16[16,64], index: 0, kind: input, shape index: {}]
  %s1 = inlined_call_operand.hbm [shape: bf16[64,896], index: 1, kind: input, shape index: {}]
  %s2 = inlined_call_operand.vmem [shape: bf16[16,896], index: 2, kind: output, shape index: {}]
  %s3 = sld [smem:[#allocation0]]
  $region82: #{_lambda_.9} parent=0
    _
  %s5 = ssub.s32 1, %s3
  %s6 = scalar_select 0, %s5, %s3
  $region1: #{_lambda_.9} parent=0
    #allocation2 [shape = 'u8[32768]{0}', space=vmem, size = 0x8000, scoped, tag = 'input window, operand 1']
    #allocation3 [shape = 's32[2]{0}', space=sflag, size = 0x8, scoped, tag = 'scoped memory for _lambda_.9']
    #allocation4 [shape = 'u8[8192]{0}', space=vmem, size = 0x2000, scoped, tag = 'output window, operand 0']
    %7 = vsyncpa [#allocation3], 0
    %s8 = scalar_lea.sflag [#allocation3], 1
    %9 = vsyncpa %s8, 0
    loop: start=0, step=1, limit=9
    $region2: #{_lambda_.9} parent=1 // loop_pre_header
      _
    $region3: #{_lambda_.9} parent=1 // loop_header
      %s11 = sphi 0, %s15
      %p12 = scmp.ge.s32.totalorder %s11, 9
      %s18 = sphi 0, %s30
      %s19 = sphi 0, %s26
      %s20 = sphi 0, %s18
      %s21 = sphi 0, %s19
      %s22 = sphi 0, %s20
      %s23 = sphi 0, %s21
      %s33 = sphi 0, %s35
      %s36 = sphi 0, %s33
      %s37 = sphi 0, %s36
      %s53 = sphi 0, %s37
      %s59 = sphi 0, %s61
      %s62 = sphi 0, %s59
      %s63 = sphi 0, %s62
      %s79 = sphi 0, %s63
      %s87 = sphi 0, %s89
      %s90 = sphi 0, %s87
      %s91 = sphi 0, %s90
      %s107 = sphi 0, %s91
    $region4: #{_lambda_.9} parent=1 // loop_header_branch
      %14 = sbr.rel (%p12) target = $region8
    $region5: #{_lambda_.9} parent=1 // loop_body
      %s16 = ssub.s32 %s11, 1
      %s17 = ssub.s32 %s11, 2
      %s24 = sadd.s32 1, %s19
      %p25 = scmp.ge.s32.totalorder %s24, 7
      %s26 = scalar_select %p25, 0, %s24
      %s27 = sadd.s32 1, %s18
      %s28 = scalar_select %p25, %s27, %s18
      %p29 = scmp.ge.s32.totalorder %s28, 1
      %s30 = scalar_select %p29, 0, %s28
      %s31 = ssub.s32 %s18, %s30
      %p32 = scmp.eq.s32.totalorder %s31, 0
      %s34 = sadd.s32 %s33, 1
      %s35 = scalar_select %p32, %s33, %s34
      %p38 = pneg %p32
      %p39 = scmp.eq.s32.totalorder %s11, 6
      %p40 = por %p38, %p39
      %p41 = scmp.ne.s32.totalorder %s33, %s36
      %p42 = scmp.eq.s32.totalorder %s11, 0
      %p43 = por %p41, %p42
      %p44 = scmp.ne.s32.totalorder %s33, %s36
      %p45 = scmp.eq.s32.totalorder %s16, 6
      %p46 = por %p44, %p45
      %p47 = scmp.ne.s32.totalorder %s36, %s37
      %p48 = scmp.eq.s32.totalorder %s16, 0
      %p49 = por %p47, %p48
      %p50 = scmp.ne.s32.totalorder %s36, %s37
      %p51 = scmp.eq.s32.totalorder %s17, 6
      %p52 = por %p50, %p51
      %p54 = scmp.ne.s32.totalorder %s37, %s53
      %p55 = scmp.eq.s32.totalorder %s17, 0
      %p56 = por %p54, %p55
      %s57 = ssub.s32 %s19, %s26
      %p58 = scmp.eq.s32.totalorder %s57, 0
      %s60 = sadd.s32 %s59, 1
      %s61 = scalar_select %p58, %s59, %s60
      %p64 = pneg %p58
      %p65 = scmp.eq.s32.totalorder %s11, 6
      %p66 = por %p64, %p65
      %p67 = scmp.ne.s32.totalorder %s59, %s62
      %p68 = scmp.eq.s32.totalorder %s11, 0
      %p69 = por %p67, %p68
      %p70 = scmp.ne.s32.totalorder %s59, %s62
      %p71 = scmp.eq.s32.totalorder %s16, 6
      %p72 = por %p70, %p71
      %p73 = scmp.ne.s32.totalorder %s62, %s63
      %p74 = scmp.eq.s32.totalorder %s16, 0
      %p75 = por %p73, %p74
      %p76 = scmp.ne.s32.totalorder %s62, %s63
      %p77 = scmp.eq.s32.totalorder %s17, 6
      %p78 = por %p76, %p77
      %p80 = scmp.ne.s32.totalorder %s63, %s79
      %p81 = scmp.eq.s32.totalorder %s17, 0
      %p82 = por %p80, %p81
      %s83 = ssub.s32 %s18, %s30
      %s84 = ssub.s32 %s19, %s26
      %s85 = sor.u32 %s83, %s84
      %p86 = scmp.eq.s32.totalorder %s85, 0
      %s88 = sadd.s32 %s87, 1
      %s89 = scalar_select %p86, %s87, %s88
      %p92 = pneg %p86
      %p93 = scmp.eq.s32.totalorder %s11, 6
      %p94 = por %p92, %p93
      %p95 = scmp.ne.s32.totalorder %s87, %s90
      %p96 = scmp.eq.s32.totalorder %s11, 0
      %p97 = por %p95, %p96
      %p98 = scmp.ne.s32.totalorder %s87, %s90
      %p99 = scmp.eq.s32.totalorder %s16, 6
      %p100 = por %p98, %p99
      %p101 = scmp.ne.s32.totalorder %s90, %s91
      %p102 = scmp.eq.s32.totalorder %s16, 0
      %p103 = por %p101, %p102
      %p104 = scmp.ne.s32.totalorder %s90, %s91
      %p105 = scmp.eq.s32.totalorder %s17, 6
      %p106 = por %p104, %p105
      %p108 = scmp.ne.s32.totalorder %s91, %s107
      %p109 = scmp.eq.s32.totalorder %s17, 0
      %p110 = por %p108, %p109
      %p111 = scmp.le.s32.totalorder 1, %s11
      %p112 = scmp.lt.s32.totalorder %s11, 8
      %p113 = pnand %p111, %p112
      %p114 = pneg %p113
      // Predicated region
      $region9: #{_lambda_.9} parent=5 // pred_check
        _
      $region10: #{_lambda_.9} parent=5 // pred_check_branch
        %116 = sbr.rel (%p113) target = $region12
      $region11: #{_lambda_.9} parent=5 // pred_region
        %s117 = ssub.s32 %s11, 1
        // Predicated region
        $region13: #{_lambda_.9} parent=11 // pred_check
          %p118 = pneg %p49
        $region14: #{_lambda_.9} parent=11 // pred_check_branch
          %120 = sbr.rel (%p118) target = $region16
        $region15: #{_lambda_.9} parent=11 // pred_region
          %s121 = smul.u32 2, %s20
          %p122 = scmp.lt.s32.totalorder %s121, 1
          %s123 = scalar_select %p122, %s121, 1
          %s124 = smul.addr %s123, 4
          %s125 = scalar_lea.vmem %s0, %s124
          %s126 = smul.u32 2, %s20
        $region16: #{_lambda_.9} parent=11 // pred_fallthru
          _
      $region12: #{_lambda_.9} parent=5 // pred_fallthru
        _
      %p127 = scmp.lt.s32.totalorder %s11, 7
      // Predicated region
      $region17: #{_lambda_.9} parent=5 // pred_check
        %p128 = pneg %p127
      $region18: #{_lambda_.9} parent=5 // pred_check_branch
        %130 = sbr.rel (%p128) target = $region20
      $region19: #{_lambda_.9} parent=5 // pred_region
        // Predicated region
        $region21: #{_lambda_.9} parent=19 // pred_check
          %p131 = pneg %p69
        $region22: #{_lambda_.9} parent=19 // pred_check_branch
          %133 = sbr.rel (%p131) target = $region24
        $region23: #{_lambda_.9} parent=19 // pred_region
          %s134 = sand.u32 %s59, 1
          %s135 = scalar_lea.sflag [#allocation3], %s134
          %s136 = sand.u32 %s59, 1
          %s137 = smul.addr %s136, 32
          %s138 = scalar_lea.vmem [#allocation2], %s137
          %140 = vsyncadd %s135, 0
          %s141 = smul.addr %s19, 4
          %s142 = scalar_lea.hbm %s1, %s141
          %s143 = sshll.u32 %s142, 4
          %s144 = int_to_ptr.hbm [resolvable:$true] %s143
          %s145 = sshll.u32 %s138, 4
          %s146 = int_to_ptr.vmem [resolvable:$true] %s145
          %151 = dma.hbm_to_vmem [thread:$0]  %s144, 512, %s146, %s135, 448, 64, 4
        $region24: #{_lambda_.9} parent=19 // pred_fallthru
          _
      $region20: #{_lambda_.9} parent=5 // pred_fallthru
        _
      %p152 = scmp.le.s32.totalorder 1, %s11
      %p153 = scmp.lt.s32.totalorder %s11, 8
      %p154 = pnand %p152, %p153
      %p155 = pneg %p154
      // Predicated region
      $region25: #{_lambda_.9} parent=5 // pred_check
        _
      $region26: #{_lambda_.9} parent=5 // pred_check_branch
        %157 = sbr.rel (%p154) target = $region28
      $region27: #{_lambda_.9} parent=5 // pred_region
        %s158 = ssub.s32 %s11, 1
        %s159 = sand.u32 %s62, 1
        %s160 = scalar_lea.sflag [#allocation3], %s159
        %s161 = sand.u32 %s62, 1
        %s162 = smul.addr %s161, 32
        %s163 = scalar_lea.vmem [#allocation2], %s162
        // Predicated region
        $region29: #{_lambda_.9} parent=27 // pred_check
          %p164 = pneg %p75
        $region30: #{_lambda_.9} parent=27 // pred_check_branch
          %166 = sbr.rel (%p164) target = $region32
        $region31: #{_lambda_.9} parent=27 // pred_region
          %168 = dma.done %s160, 512
        $region32: #{_lambda_.9} parent=27 // pred_fallthru
          _
        %s169 = smul.u32 2, %s20
        %p170 = scmp.lt.s32.totalorder %s169, 1
        %s171 = scalar_select %p170, %s169, 1
        %s172 = smul.addr %s171, 4
        %s173 = scalar_lea.vmem %s0, %s172
        %p174 = pneg %p49
        %p175 = pneg %p46
        %s176 = sand.u32 %s62, 1
        %s177 = scalar_lea.sflag [#allocation3], %s176
        %s178 = sand.u32 %s62, 1
        %s179 = smul.addr %s178, 32
        %s180 = scalar_lea.vmem [#allocation2], %s179
        %p181 = pneg %p75
        %p182 = pneg %p72
        %p183 = pneg %p103
        %p184 = pneg %p100
        %s185 = sand.u32 %s90, 1
        %s186 = sand.u32 %s90, 1
        %s187 = smul.addr %s186, 8
        %s188 = scalar_lea.vmem [#allocation4], %s187
        %s189 = smul.u32 2, %s20
        %p190 = scmp.lt.s32.totalorder %s189, 1
        %s191 = scalar_select %p190, %s189, 1
        %s192 = smul.addr %s191, 4
        %s193 = scalar_lea.vmem %s0, %s192
        %s194 = smul.u32 2, %s20
        %s195 = smul.u32 2, %s20
        %v197 = vld [vmem:[%s193] sm:$0xf]
        %v198 = vld [vmem:[%s193 + $0x4] sm:$0xf]
        %v199 = vunpack.c.l.bf16 %v197
        %v200 = vunpack.c.l.bf16 %v198
        %v201 = vmul.f32 %v199, %v199
        %v202 = vmul.f32 %v200, %v200
        %vm203 = vcmask 523264
        %v204 = vsel %vm203, %v201, 0.0
        %205 = vadd.xlane.f32.xlu0 %v204
        %v206 = vpop.xlane.xlu0 %205
        %v207 = vsel %vm203, %v202, 0.0
        %208 = vadd.xlane.f32.xlu0 %v207
        %v209 = vpop.xlane.xlu0 %208
        %v210 = vrcp.pop 64.0
        %v211 = vmul.f32 64.0, %v210
        %v212 = vsub.f32 1.0, %v211
        %v213 = vmul.f32 %v210, %v212
        %v214 = vadd.f32 %v210, %v213
        %vm215 = vweird.f32 %v210
        %v216 = vsel %vm215, %v210, %v214
        %v217 = vmul.f32 %v206, %v216
        %v218 = vmul.f32 %v209, %v216
        %v219 = vadd.f32 %v217, 1.1920929e-07
        %v220 = vadd.f32 %v218, 1.1920929e-07
        %v221 = vrsqrt.pop %v219
        %v222 = vmul.f32 %v221, %v219
        %v223 = vmul.f32 %v222, %v221
        %v224 = vmul.f32 0.5, %v223
        %v225 = vsub.f32 1.5, %v224
        %v226 = vmul.f32 %v221, %v225
        %vm227 = vweird.f32 %v219
        %vm228 = vweird.f32 %v221
        %vm229 = vmor %vm227, %vm228
        %v230 = vsel %vm229, %v221, %v226
        %v231 = vrsqrt.pop %v220
        %v232 = vmul.f32 %v231, %v220
        %v233 = vmul.f32 %v232, %v231
        %v234 = vmul.f32 0.5, %v233
        %v235 = vsub.f32 1.5, %v234
        %v236 = vmul.f32 %v231, %v235
        %vm237 = vweird.f32 %v220
        %vm238 = vweird.f32 %v231
        %vm239 = vmor %vm237, %vm238
        %v240 = vsel %vm239, %v231, %v236
        %v241 = vmul.f32 %v199, %v230
        %v242 = vmul.f32 %v200, %v240
        %v243 = vpack.c.bf16 %v242, %v241
        %v244 = vld [vmem:[%s163] sm:$0xf]
        %v245 = vld [vmem:[%s163 + $0x4] sm:$0xf]
        %v246 = vld [vmem:[%s163 + $0x8] sm:$0xf]
        %v247 = vld [vmem:[%s163 + $0xc] sm:$0xf]
        %v248 = vld [vmem:[%s163 + $0x10] sm:$0xf]
        %v249 = vld [vmem:[%s163 + $0x14] sm:$0xf]
        %v250 = vld [vmem:[%s163 + $0x18] sm:$0xf]
        %v251 = vld [vmem:[%s163 + $0x1c] sm:$0xf]
        %v260 = vunpack.c.l.b16 %v244
        %v261 = vunpack.c.l.b16 %v245
        %v262 = vunpack.c.l.b16 %v246
        %v263 = vunpack.c.l.b16 %v247
        %v264 = vunpack.c.l.b16 %v248
        %v265 = vunpack.c.l.b16 %v249
        %v266 = vunpack.c.l.b16 %v250
        %v267 = vunpack.c.l.b16 %v251
        %v268 = vpack.c.b16 %v261, %v260
        %v269 = vpack.c.b16 %v263, %v262
        %v270 = vpack.c.b16 %v265, %v264
        %v271 = vpack.c.b16 %v267, %v266
        %v277 = vsel %vm203, %v243, 0
        %279 = vmatpush.bf16.msra.mxu0 0
        %280 = vmatpush.bf16.msra.mxu0 0
        %281 = vmatpush.bf16.msra.mxu0 0
        %282 = vmatpush.bf16.msra.mxu0 0
        %283 = vmatpush.bf16.msra.mxu0 %v271
        %284 = vmatpush.bf16.msra.mxu0 %v270
        %285 = vmatpush.bf16.msra.mxu0 %v269
        %286 = vmatpush.bf16.msra.mxu0 %v268
        %287 = vmatmul.bf16.gmra.mxu0 %v277
        %v288 = vpop.f32.mrf.mxu0
        %v289 = vadd.f32 0.0, %v288
        %v290 = vpop.f32.mrf.mxu0
        %v291 = vadd.f32 0.0, %v290
        %292 = vdwg.mxu0
        %v293 = vpack.c.bf16 %v289, %v289
        %v294 = vpack.c.bf16 %v291, %v291
        %295 = vst [vmem:[%s188] sm:$0xf] %v293
        %296 = vst [vmem:[%s188 + $0x4] sm:$0xf] %v294
        %s297 = sand.u32 %s90, 1
        %s298 = sand.u32 %s90, 1
        %s299 = smul.addr %s298, 8
        %s300 = scalar_lea.vmem [#allocation4], %s299
        // Predicated region
        $region33: #{_lambda_.9} parent=27 // pred_check
          %p301 = pneg %p100
        $region34: #{_lambda_.9} parent=27 // pred_check_branch
          %303 = sbr.rel (%p301) target = $region36
        $region35: #{_lambda_.9} parent=27 // pred_region
          %s304 = smul.u32 2, %s20
          %s305 = smul.addr %s304, 7
          %s306 = sadd.s32 %s21, %s305
          %s307 = smul.addr %s306, 4
          %s308 = scalar_lea.vmem %s2, %s307
          // Predicated region
          $region37: #{_lambda_.9} parent=35 // pred_check
            _
          $region38: #{_lambda_.9} parent=35 // pred_check_branch
            %310 = sbr.rel (0) target = $region40
          $region39: #{_lambda_.9} parent=35 // pred_region
            // Predicated region
            $region41: #{_lambda_.9} parent=39 // pred_check
              _
            $region42: #{_lambda_.9} parent=39 // pred_check_branch
              %312 = sbr.rel target = $region44
            $region43: #{_lambda_.9} parent=39 // pred_region
              // Predicated region
              $region56: #{_lambda_.9} parent=43 // pred_check
                _
              $region57: #{_lambda_.9} parent=43 // pred_check_branch
                %330 = sbr.rel (0) target = $region59
              $region58: #{_lambda_.9} parent=43 // pred_region
                loop: start=0, step=1, limit=1
                $region60: #{_lambda_.9} parent=58 // loop_pre_header
                  _
                $region61: #{_lambda_.9} parent=58 // loop_header
                  %s332 = sphi 0, %s336
                  %p333 = scmp.ge.s32.totalorder %s332, 1
                  %s337 = sphi %s300, %s300
                  %s338 = sphi %s308, %s308
                $region62: #{_lambda_.9} parent=58 // loop_header_branch
                  %335 = sbr.rel (%p333) target = $region66
                $region63: #{_lambda_.9} parent=58 // loop_body
                  _
                $region64: #{_lambda_.9} parent=58 // loop_footer
                  %s336 = sadd.s32 1, %s332
                $region65: #{_lambda_.9} parent=58 // loop_footer_branch
                  %331 = sbr.rel target = $region61
                $region66: #{_lambda_.9} parent=58 // loop_exit
                  _
                %s340 = ssub.s32 16, 1
                loop: start=0, step=1, limit=1
                $region67: #{_lambda_.9} parent=58 // loop_pre_header
                  _
                $region68: #{_lambda_.9} parent=58 // loop_header
                  %s342 = sphi 0, %s346
                  %p343 = scmp.ge.s32.totalorder %s342, 1
                  %s347 = sphi %s300, %s300
                  %s348 = sphi %s308, %s308
                $region69: #{_lambda_.9} parent=58 // loop_header_branch
                  %345 = sbr.rel (%p343) target = $region73
                $region70: #{_lambda_.9} parent=58 // loop_body
                  %v349 = vld [vmem:[%s347] sm:%s340]
                  %350 = vst [vmem:[%s348] sm:%s340] %v349
                  %v351 = vld [vmem:[%s347 + $0x4] sm:%s340]
                  %352 = vst [vmem:[%s348 + $0x1c] sm:%s340] %v351
                $region71: #{_lambda_.9} parent=58 // loop_footer
                  %s346 = sadd.s32 1, %s342
                $region72: #{_lambda_.9} parent=58 // loop_footer_branch
                  %341 = sbr.rel target = $region68
                $region73: #{_lambda_.9} parent=58 // loop_exit
                  _
              $region59: #{_lambda_.9} parent=43 // pred_fallthru
                _
            $region44: #{_lambda_.9} parent=39 // pred_fallthru
              _
            // Predicated region
            $region45: #{_lambda_.9} parent=39 // pred_check
              _
            $region46: #{_lambda_.9} parent=39 // pred_check_branch
              %314 = sbr.rel (0) target = $region48
            $region47: #{_lambda_.9} parent=39 // pred_region
              %s316 = ssub.s32 16, 1
              loop: start=0, step=1, limit=1
              $region49: #{_lambda_.9} parent=47 // loop_pre_header
                _
              $region50: #{_lambda_.9} parent=47 // loop_header
                %s318 = sphi 0, %s322
                %p319 = scmp.ge.s32.totalorder %s318, 1
                %s323 = sphi %s300, %s300
                %s324 = sphi %s308, %s308
              $region51: #{_lambda_.9} parent=47 // loop_header_branch
                %321 = sbr.rel (%p319) target = $region55
              $region52: #{_lambda_.9} parent=47 // loop_body
                %v325 = vld [vmem:[%s323] sm:%s316]
                %326 = vst [vmem:[%s324] sm:%s316] %v325
                %v327 = vld [vmem:[%s323 + $0x4] sm:%s316]
                %328 = vst [vmem:[%s324 + $0x1c] sm:%s316] %v327
              $region53: #{_lambda_.9} parent=47 // loop_footer
                %s322 = sadd.s32 1, %s318
              $region54: #{_lambda_.9} parent=47 // loop_footer_branch
                %317 = sbr.rel target = $region50
              $region55: #{_lambda_.9} parent=47 // loop_exit
                _
            $region48: #{_lambda_.9} parent=39 // pred_fallthru
              _
          $region40: #{_lambda_.9} parent=35 // pred_fallthru
            _
          %353 = vnop
        $region36: #{_lambda_.9} parent=27 // pred_fallthru
          _
      $region28: #{_lambda_.9} parent=5 // pred_fallthru
        _
      %p354 = scmp.le.s32.totalorder 2, %s11
      // Predicated region
      $region74: #{_lambda_.9} parent=5 // pred_check
        %p355 = pneg %p354
      $region75: #{_lambda_.9} parent=5 // pred_check_branch
        %357 = sbr.rel (%p355) target = $region77
      $region76: #{_lambda_.9} parent=5 // pred_region
        %s358 = ssub.s32 %s11, 2
        // Predicated region
        $region78: #{_lambda_.9} parent=76 // pred_check
          %p359 = pneg %p106
        $region79: #{_lambda_.9} parent=76 // pred_check_branch
          %361 = sbr.rel (%p359) target = $region81
        $region80: #{_lambda_.9} parent=76 // pred_region
          %s362 = sand.u32 %s91, 1
          %s363 = sand.u32 %s91, 1
          %s364 = smul.addr %s363, 8
          %s365 = scalar_lea.vmem [#allocation4], %s364
        $region81: #{_lambda_.9} parent=76 // pred_fallthru
          _
      $region77: #{_lambda_.9} parent=5 // pred_fallthru
        _
    $region6: #{_lambda_.9} parent=1 // loop_footer
      %s15 = sadd.s32 1, %s11
    $region7: #{_lambda_.9} parent=1 // loop_footer_branch
      %10 = sbr.rel target = $region3
    $region8: #{_lambda_.9} parent=1 // loop_exit
      _
    %366 = vsyncpa [#allocation3], 1
    %s367 = scalar_lea.sflag [#allocation3], 1
    %368 = vsyncpa %s367, 1

// kernel: _lambda_.11
$region0: #{_lambda_.11}
  #allocation0 [shape = 'u32[]', space=smem, size = 0x4, offset = 0x4, fixed_abs, tag = 'smem constant byte address 0x4 - core index']
  #allocation1 [shape = 'u32[72,128]{1,0:T(1,128)}', space=vmem, size = 0x9000, scoped, tag = 'internal scratch']
  %s0 = inlined_call_operand.vmem [shape: bf16[16,64], index: 0, kind: input, shape index: {}]
  %s1 = inlined_call_operand.vmem [shape: bf16[64,64], index: 1, kind: input, shape index: {}]
  %s2 = inlined_call_operand.vmem [shape: bf16[16,64], index: 2, kind: output, shape index: {}]
  %s3 = sld [smem:[#allocation0]]
  $region18: #{_lambda_.11} parent=0
    _
  %s5 = ssub.s32 1, %s3
  %s6 = scalar_select 0, %s5, %s3
  // Predicated region
  $region2: #{_lambda_.11} parent=0 // pred_check
    _
  $region3: #{_lambda_.11} parent=0 // pred_check_branch
    %8 = sbr.rel (0) target = $region5
  $region4: #{_lambda_.11} parent=0 // pred_region
    _
  $region5: #{_lambda_.11} parent=0 // pred_fallthru
    _
  // Predicated region
  $region6: #{_lambda_.11} parent=0 // pred_check
    _
  $region7: #{_lambda_.11} parent=0 // pred_check_branch
    %10 = sbr.rel (0) target = $region9
  $region8: #{_lambda_.11} parent=0 // pred_region
    _
  $region9: #{_lambda_.11} parent=0 // pred_fallthru
    _
  %v12 = vld [vmem:[%s0] sm:$0xf]
  %v13 = vld [vmem:[%s0 + $0x4] sm:$0xf]
  %v14 = vld [vmem:[%s1] sm:$0xf]
  %v15 = vld [vmem:[%s1 + $0x4] sm:$0xf]
  %v16 = vld [vmem:[%s1 + $0x8] sm:$0xf]
  %v17 = vld [vmem:[%s1 + $0xc] sm:$0xf]
  %v18 = vld [vmem:[%s1 + $0x10] sm:$0xf]
  %v19 = vld [vmem:[%s1 + $0x14] sm:$0xf]
  %v20 = vld [vmem:[%s1 + $0x18] sm:$0xf]
  %v21 = vld [vmem:[%s1 + $0x1c] sm:$0xf]
  %v24 = vunpack.c.l.b16 %v12
  %v25 = vunpack.c.l.b16 %v13
  %v26 = vpack.c.b16 %v25, %v24
  %v35 = vunpack.c.l.b16 %v14
  %v36 = vunpack.c.l.b16 %v15
  %v37 = vunpack.c.l.b16 %v16
  %v38 = vunpack.c.l.b16 %v17
  %v39 = vunpack.c.l.b16 %v18
  %v40 = vunpack.c.l.b16 %v19
  %v41 = vunpack.c.l.b16 %v20
  %v42 = vunpack.c.l.b16 %v21
  %v43 = vpack.c.b16 %v36, %v35
  %v44 = vpack.c.b16 %v38, %v37
  %v45 = vpack.c.b16 %v40, %v39
  %v46 = vpack.c.b16 %v42, %v41
  %vm51 = vcmask 523264
  %v53 = vsel %vm51, %v26, 0
  %55 = vmatpush.bf16.msra.mxu0 0
  %56 = vmatpush.bf16.msra.mxu0 0
  %57 = vmatpush.bf16.msra.mxu0 0
  %58 = vmatpush.bf16.msra.mxu0 0
  %59 = vmatpush.bf16.msra.mxu0 %v46
  %60 = vmatpush.bf16.msra.mxu0 %v45
  %61 = vmatpush.bf16.msra.mxu0 %v44
  %62 = vmatpush.bf16.msra.mxu0 %v43
  %63 = vmatmul.bf16.gmra.mxu0 %v53
  %v64 = vpop.f32.mrf.mxu0
  %v65 = vadd.f32 0.0, %v64
  %v66 = vpop.f32.mrf.mxu0
  %v67 = vadd.f32 0.0, %v66
  %68 = vdwg.mxu0
  %v69 = vpack.c.bf16 %v65, %v65
  %v70 = vpack.c.bf16 %v67, %v67
  %vm71 = vcmask 519168
  %72 = vst.msk [vmem:[%s2] sm:$0xf] %vm71, %v69
  %73 = vst.msk [vmem:[%s2 + $0x4] sm:$0xf] %vm71, %v70
  // Predicated region
  $region10: #{_lambda_.11} parent=0 // pred_check
    _
  $region11: #{_lambda_.11} parent=0 // pred_check_branch
    %75 = sbr.rel (0) target = $region13
  $region12: #{_lambda_.11} parent=0 // pred_region
    _
  $region13: #{_lambda_.11} parent=0 // pred_fallthru
    _
  // Predicated region
  $region14: #{_lambda_.11} parent=0 // pred_check
    _
  $region15: #{_lambda_.11} parent=0 // pred_check_branch
    %77 = sbr.rel (0) target = $region17
  $region16: #{_lambda_.11} parent=0 // pred_region
    _
  $region17: #{_lambda_.11} parent=0 // pred_fallthru
    _

// kernel: _lambda_.13
$region0: #{_lambda_.13}
  #allocation0 [shape = 'u32[]', space=smem, size = 0x4, offset = 0x4, fixed_abs, tag = 'smem constant byte address 0x4 - core index']
  #allocation1 [shape = 'u32[72,128]{1,0:T(1,128)}', space=vmem, size = 0x9000, scoped, tag = 'internal scratch']
  %s0 = inlined_call_operand.vmem [shape: bf16[16,64], index: 0, kind: input, shape index: {}]
  %s1 = inlined_call_operand.vmem [shape: bf16[64,896], index: 1, kind: input, shape index: {}]
  %s2 = inlined_call_operand.vmem [shape: bf16[16,896], index: 2, kind: output, shape index: {}]
  %s3 = sld [smem:[#allocation0]]
  $region119: #{_lambda_.13} parent=0
    _
  %s5 = ssub.s32 1, %s3
  %s6 = scalar_select 0, %s5, %s3
  $region1: #{_lambda_.13} parent=0
    #allocation2 [shape = 'u8[32768]{0}', space=vmem, size = 0x8000, scoped, tag = 'input window, operand 1']
    #allocation3 [shape = 'u8[8192]{0}', space=vmem, size = 0x2000, scoped, tag = 'output window, operand 0']
    loop: start=0, step=1, limit=9
    $region2: #{_lambda_.13} parent=1 // loop_pre_header
      _
    $region3: #{_lambda_.13} parent=1 // loop_header
      %s8 = sphi 0, %s12
      %p9 = scmp.ge.s32.totalorder %s8, 9
      %s15 = sphi 0, %s27
      %s16 = sphi 0, %s23
      %s17 = sphi 0, %s15
      %s18 = sphi 0, %s16
      %s19 = sphi 0, %s17
      %s20 = sphi 0, %s18
      %s30 = sphi 0, %s32
      %s33 = sphi 0, %s30
      %s34 = sphi 0, %s33
      %s50 = sphi 0, %s34
      %s56 = sphi 0, %s58
      %s59 = sphi 0, %s56
      %s60 = sphi 0, %s59
      %s76 = sphi 0, %s60
      %s84 = sphi 0, %s86
      %s87 = sphi 0, %s84
      %s88 = sphi 0, %s87
      %s104 = sphi 0, %s88
    $region4: #{_lambda_.13} parent=1 // loop_header_branch
      %11 = sbr.rel (%p9) target = $region8
    $region5: #{_lambda_.13} parent=1 // loop_body
      %s13 = ssub.s32 %s8, 1
      %s14 = ssub.s32 %s8, 2
      %s21 = sadd.s32 1, %s16
      %p22 = scmp.ge.s32.totalorder %s21, 7
      %s23 = scalar_select %p22, 0, %s21
      %s24 = sadd.s32 1, %s15
      %s25 = scalar_select %p22, %s24, %s15
      %p26 = scmp.ge.s32.totalorder %s25, 1
      %s27 = scalar_select %p26, 0, %s25
      %s28 = ssub.s32 %s15, %s27
      %p29 = scmp.eq.s32.totalorder %s28, 0
      %s31 = sadd.s32 %s30, 1
      %s32 = scalar_select %p29, %s30, %s31
      %p35 = pneg %p29
      %p36 = scmp.eq.s32.totalorder %s8, 6
      %p37 = por %p35, %p36
      %p38 = scmp.ne.s32.totalorder %s30, %s33
      %p39 = scmp.eq.s32.totalorder %s8, 0
      %p40 = por %p38, %p39
      %p41 = scmp.ne.s32.totalorder %s30, %s33
      %p42 = scmp.eq.s32.totalorder %s13, 6
      %p43 = por %p41, %p42
      %p44 = scmp.ne.s32.totalorder %s33, %s34
      %p45 = scmp.eq.s32.totalorder %s13, 0
      %p46 = por %p44, %p45
      %p47 = scmp.ne.s32.totalorder %s33, %s34
      %p48 = scmp.eq.s32.totalorder %s14, 6
      %p49 = por %p47, %p48
      %p51 = scmp.ne.s32.totalorder %s34, %s50
      %p52 = scmp.eq.s32.totalorder %s14, 0
      %p53 = por %p51, %p52
      %s54 = ssub.s32 %s16, %s23
      %p55 = scmp.eq.s32.totalorder %s54, 0
      %s57 = sadd.s32 %s56, 1
      %s58 = scalar_select %p55, %s56, %s57
      %p61 = pneg %p55
      %p62 = scmp.eq.s32.totalorder %s8, 6
      %p63 = por %p61, %p62
      %p64 = scmp.ne.s32.totalorder %s56, %s59
      %p65 = scmp.eq.s32.totalorder %s8, 0
      %p66 = por %p64, %p65
      %p67 = scmp.ne.s32.totalorder %s56, %s59
      %p68 = scmp.eq.s32.totalorder %s13, 6
      %p69 = por %p67, %p68
      %p70 = scmp.ne.s32.totalorder %s59, %s60
      %p71 = scmp.eq.s32.totalorder %s13, 0
      %p72 = por %p70, %p71
      %p73 = scmp.ne.s32.totalorder %s59, %s60
      %p74 = scmp.eq.s32.totalorder %s14, 6
      %p75 = por %p73, %p74
      %p77 = scmp.ne.s32.totalorder %s60, %s76
      %p78 = scmp.eq.s32.totalorder %s14, 0
      %p79 = por %p77, %p78
      %s80 = ssub.s32 %s15, %s27
      %s81 = ssub.s32 %s16, %s23
      %s82 = sor.u32 %s80, %s81
      %p83 = scmp.eq.s32.totalorder %s82, 0
      %s85 = sadd.s32 %s84, 1
      %s86 = scalar_select %p83, %s84, %s85
      %p89 = pneg %p83
      %p90 = scmp.eq.s32.totalorder %s8, 6
      %p91 = por %p89, %p90
      %p92 = scmp.ne.s32.totalorder %s84, %s87
      %p93 = scmp.eq.s32.totalorder %s8, 0
      %p94 = por %p92, %p93
      %p95 = scmp.ne.s32.totalorder %s84, %s87
      %p96 = scmp.eq.s32.totalorder %s13, 6
      %p97 = por %p95, %p96
      %p98 = scmp.ne.s32.totalorder %s87, %s88
      %p99 = scmp.eq.s32.totalorder %s13, 0
      %p100 = por %p98, %p99
      %p101 = scmp.ne.s32.totalorder %s87, %s88
      %p102 = scmp.eq.s32.totalorder %s14, 6
      %p103 = por %p101, %p102
      %p105 = scmp.ne.s32.totalorder %s88, %s104
      %p106 = scmp.eq.s32.totalorder %s14, 0
      %p107 = por %p105, %p106
      %p108 = scmp.le.s32.totalorder 1, %s8
      %p109 = scmp.lt.s32.totalorder %s8, 8
      %p110 = pnand %p108, %p109
      %p111 = pneg %p110
      // Predicated region
      $region9: #{_lambda_.13} parent=5 // pred_check
        _
      $region10: #{_lambda_.13} parent=5 // pred_check_branch
        %113 = sbr.rel (%p110) target = $region12
      $region11: #{_lambda_.13} parent=5 // pred_region
        %s114 = ssub.s32 %s8, 1
        // Predicated region
        $region13: #{_lambda_.13} parent=11 // pred_check
          %p115 = pneg %p46
        $region14: #{_lambda_.13} parent=11 // pred_check_branch
          %117 = sbr.rel (%p115) target = $region16
        $region15: #{_lambda_.13} parent=11 // pred_region
          %s118 = smul.u32 2, %s17
          %p119 = scmp.lt.s32.totalorder %s118, 1
          %s120 = scalar_select %p119, %s118, 1
          %s121 = smul.addr %s120, 4
          %s122 = scalar_lea.vmem %s0, %s121
          %s123 = smul.u32 2, %s17
        $region16: #{_lambda_.13} parent=11 // pred_fallthru
          _
      $region12: #{_lambda_.13} parent=5 // pred_fallthru
        _
      %p124 = scmp.lt.s32.totalorder %s8, 7
      // Predicated region
      $region17: #{_lambda_.13} parent=5 // pred_check
        %p125 = pneg %p124
      $region18: #{_lambda_.13} parent=5 // pred_check_branch
        %127 = sbr.rel (%p125) target = $region20
      $region19: #{_lambda_.13} parent=5 // pred_region
        // Predicated region
        $region21: #{_lambda_.13} parent=19 // pred_check
          %p128 = pneg %p66
        $region22: #{_lambda_.13} parent=19 // pred_check_branch
          %130 = sbr.rel (%p128) target = $region24
        $region23: #{_lambda_.13} parent=19 // pred_region
          %s131 = sand.u32 %s56, 1
          %s132 = sand.u32 %s56, 1
          %s133 = smul.addr %s132, 32
          %s134 = scalar_lea.vmem [#allocation2], %s133
          %s135 = smul.addr %s16, 4
          %s136 = scalar_lea.vmem %s1, %s135
          // Predicated region
          $region25: #{_lambda_.13} parent=23 // pred_check
            _
          $region26: #{_lambda_.13} parent=23 // pred_check_branch
            %138 = sbr.rel (0) target = $region28
          $region27: #{_lambda_.13} parent=23 // pred_region
            // Predicated region
            $region29: #{_lambda_.13} parent=27 // pred_check
              _
            $region30: #{_lambda_.13} parent=27 // pred_check_branch
              %140 = sbr.rel target = $region32
            $region31: #{_lambda_.13} parent=27 // pred_region
              // Predicated region
              $region44: #{_lambda_.13} parent=31 // pred_check
                _
              $region45: #{_lambda_.13} parent=31 // pred_check_branch
                %170 = sbr.rel (0) target = $region47
              $region46: #{_lambda_.13} parent=31 // pred_region
                loop: start=0, step=1, limit=1
                $region48: #{_lambda_.13} parent=46 // loop_pre_header
                  _
                $region49: #{_lambda_.13} parent=46 // loop_header
                  %s172 = sphi 0, %s176
                  %p173 = scmp.ge.s32.totalorder %s172, 1
                  %s177 = sphi %s136, %s136
                  %s178 = sphi %s134, %s134
                $region50: #{_lambda_.13} parent=46 // loop_header_branch
                  %175 = sbr.rel (%p173) target = $region54
                $region51: #{_lambda_.13} parent=46 // loop_body
                  _
                $region52: #{_lambda_.13} parent=46 // loop_footer
                  %s176 = sadd.s32 1, %s172
                $region53: #{_lambda_.13} parent=46 // loop_footer_branch
                  %171 = sbr.rel target = $region49
                $region54: #{_lambda_.13} parent=46 // loop_exit
                  _
                %s180 = ssub.s32 16, 1
                loop: start=0, step=1, limit=1
                $region55: #{_lambda_.13} parent=46 // loop_pre_header
                  _
                $region56: #{_lambda_.13} parent=46 // loop_header
                  %s182 = sphi 0, %s186
                  %p183 = scmp.ge.s32.totalorder %s182, 1
                  %s187 = sphi %s136, %s136
                  %s188 = sphi %s134, %s134
                $region57: #{_lambda_.13} parent=46 // loop_header_branch
                  %185 = sbr.rel (%p183) target = $region61
                $region58: #{_lambda_.13} parent=46 // loop_body
                  %v189 = vld [vmem:[%s187] sm:%s180]
                  %190 = vst [vmem:[%s188] sm:%s180] %v189
                  %v191 = vld [vmem:[%s187 + $0x1c] sm:%s180]
                  %192 = vst [vmem:[%s188 + $0x4] sm:%s180] %v191
                  %v193 = vld [vmem:[%s187 + $0x38] sm:%s180]
                  %194 = vst [vmem:[%s188 + $0x8] sm:%s180] %v193
                  %v195 = vld [vmem:[%s187 + $0x54] sm:%s180]
                  %196 = vst [vmem:[%s188 + $0xc] sm:%s180] %v195
                  %v197 = vld [vmem:[%s187 + $0x70] sm:%s180]
                  %198 = vst [vmem:[%s188 + $0x10] sm:%s180] %v197
                  %v199 = vld [vmem:[%s187 + $0x8c] sm:%s180]
                  %200 = vst [vmem:[%s188 + $0x14] sm:%s180] %v199
                  %v201 = vld [vmem:[%s187 + $0xa8] sm:%s180]
                  %202 = vst [vmem:[%s188 + $0x18] sm:%s180] %v201
                  %v203 = vld [vmem:[%s187 + $0xc4] sm:%s180]
                  %204 = vst [vmem:[%s188 + $0x1c] sm:%s180] %v203
                $region59: #{_lambda_.13} parent=46 // loop_footer
                  %s186 = sadd.s32 1, %s182
                $region60: #{_lambda_.13} parent=46 // loop_footer_branch
                  %181 = sbr.rel target = $region56
                $region61: #{_lambda_.13} parent=46 // loop_exit
                  _
              $region47: #{_lambda_.13} parent=31 // pred_fallthru
                _
            $region32: #{_lambda_.13} parent=27 // pred_fallthru
              _
            // Predicated region
            $region33: #{_lambda_.13} parent=27 // pred_check
              _
            $region34: #{_lambda_.13} parent=27 // pred_check_branch
              %142 = sbr.rel (0) target = $region36
            $region35: #{_lambda_.13} parent=27 // pred_region
              %s144 = ssub.s32 16, 1
              loop: start=0, step=1, limit=1
              $region37: #{_lambda_.13} parent=35 // loop_pre_header
                _
              $region38: #{_lambda_.13} parent=35 // loop_header
                %s146 = sphi 0, %s150
                %p147 = scmp.ge.s32.totalorder %s146, 1
                %s151 = sphi %s136, %s136
                %s152 = sphi %s134, %s134
              $region39: #{_lambda_.13} parent=35 // loop_header_branch
                %149 = sbr.rel (%p147) target = $region43
              $region40: #{_lambda_.13} parent=35 // loop_body
                %v153 = vld [vmem:[%s151] sm:%s144]
                %154 = vst [vmem:[%s152] sm:%s144] %v153
                %v155 = vld [vmem:[%s151 + $0x1c] sm:%s144]
                %156 = vst [vmem:[%s152 + $0x4] sm:%s144] %v155
                %v157 = vld [vmem:[%s151 + $0x38] sm:%s144]
                %158 = vst [vmem:[%s152 + $0x8] sm:%s144] %v157
                %v159 = vld [vmem:[%s151 + $0x54] sm:%s144]
                %160 = vst [vmem:[%s152 + $0xc] sm:%s144] %v159
                %v161 = vld [vmem:[%s151 + $0x70] sm:%s144]
                %162 = vst [vmem:[%s152 + $0x10] sm:%s144] %v161
                %v163 = vld [vmem:[%s151 + $0x8c] sm:%s144]
                %164 = vst [vmem:[%s152 + $0x14] sm:%s144] %v163
                %v165 = vld [vmem:[%s151 + $0xa8] sm:%s144]
                %166 = vst [vmem:[%s152 + $0x18] sm:%s144] %v165
                %v167 = vld [vmem:[%s151 + $0xc4] sm:%s144]
                %168 = vst [vmem:[%s152 + $0x1c] sm:%s144] %v167
              $region41: #{_lambda_.13} parent=35 // loop_footer
                %s150 = sadd.s32 1, %s146
              $region42: #{_lambda_.13} parent=35 // loop_footer_branch
                %145 = sbr.rel target = $region38
              $region43: #{_lambda_.13} parent=35 // loop_exit
                _
            $region36: #{_lambda_.13} parent=27 // pred_fallthru
              _
          $region28: #{_lambda_.13} parent=23 // pred_fallthru
            _
          %205 = vnop
        $region24: #{_lambda_.13} parent=19 // pred_fallthru
          _
      $region20: #{_lambda_.13} parent=5 // pred_fallthru
        _
      %p206 = scmp.le.s32.totalorder 1, %s8
      %p207 = scmp.lt.s32.totalorder %s8, 8
      %p208 = pnand %p206, %p207
      %p209 = pneg %p208
      // Predicated region
      $region62: #{_lambda_.13} parent=5 // pred_check
        _
      $region63: #{_lambda_.13} parent=5 // pred_check_branch
        %211 = sbr.rel (%p208) target = $region65
      $region64: #{_lambda_.13} parent=5 // pred_region
        %s212 = ssub.s32 %s8, 1
        %s213 = sand.u32 %s59, 1
        %s214 = sand.u32 %s59, 1
        %s215 = smul.addr %s214, 32
        %s216 = scalar_lea.vmem [#allocation2], %s215
        // Predicated region
        $region66: #{_lambda_.13} parent=64 // pred_check
          %p217 = pneg %p72
        $region67: #{_lambda_.13} parent=64 // pred_check_branch
          %219 = sbr.rel (%p217) target = $region69
        $region68: #{_lambda_.13} parent=64 // pred_region
          _
        $region69: #{_lambda_.13} parent=64 // pred_fallthru
          _
        %s220 = smul.u32 2, %s17
        %p221 = scmp.lt.s32.totalorder %s220, 1
        %s222 = scalar_select %p221, %s220, 1
        %s223 = smul.addr %s222, 4
        %s224 = scalar_lea.vmem %s0, %s223
        %p225 = pneg %p46
        %p226 = pneg %p43
        %s227 = sand.u32 %s59, 1
        %s228 = sand.u32 %s59, 1
        %s229 = smul.addr %s228, 32
        %s230 = scalar_lea.vmem [#allocation2], %s229
        %p231 = pneg %p72
        %p232 = pneg %p69
        %p233 = pneg %p100
        %p234 = pneg %p97
        %s235 = sand.u32 %s87, 1
        %s236 = sand.u32 %s87, 1
        %s237 = smul.addr %s236, 8
        %s238 = scalar_lea.vmem [#allocation3], %s237
        %s239 = smul.u32 2, %s17
        %p240 = scmp.lt.s32.totalorder %s239, 1
        %s241 = scalar_select %p240, %s239, 1
        %s242 = smul.addr %s241, 4
        %s243 = scalar_lea.vmem %s0, %s242
        %s244 = smul.u32 2, %s17
        %s245 = smul.u32 2, %s17
        %v247 = vld [vmem:[%s243] sm:$0xf]
        %v248 = vld [vmem:[%s243 + $0x4] sm:$0xf]
        %v249 = vunpack.c.l.bf16 %v247
        %v250 = vunpack.c.l.bf16 %v248
        %v251 = vmul.f32 %v249, %v249
        %v252 = vmul.f32 %v250, %v250
        %vm253 = vcmask 523264
        %v254 = vsel %vm253, %v251, 0.0
        %255 = vadd.xlane.f32.xlu0 %v254
        %v256 = vpop.xlane.xlu0 %255
        %v257 = vsel %vm253, %v252, 0.0
        %258 = vadd.xlane.f32.xlu0 %v257
        %v259 = vpop.xlane.xlu0 %258
        %v260 = vrcp.pop 64.0
        %v261 = vmul.f32 64.0, %v260
        %v262 = vsub.f32 1.0, %v261
        %v263 = vmul.f32 %v260, %v262
        %v264 = vadd.f32 %v260, %v263
        %vm265 = vweird.f32 %v260
        %v266 = vsel %vm265, %v260, %v264
        %v267 = vmul.f32 %v256, %v266
        %v268 = vmul.f32 %v259, %v266
        %v269 = vadd.f32 %v267, 1.1920929e-07
        %v270 = vadd.f32 %v268, 1.1920929e-07
        %v271 = vrsqrt.pop %v269
        %v272 = vmul.f32 %v271, %v269
        %v273 = vmul.f32 %v272, %v271
        %v274 = vmul.f32 0.5, %v273
        %v275 = vsub.f32 1.5, %v274
        %v276 = vmul.f32 %v271, %v275
        %vm277 = vweird.f32 %v269
        %vm278 = vweird.f32 %v271
        %vm279 = vmor %vm277, %vm278
        %v280 = vsel %vm279, %v271, %v276
        %v281 = vrsqrt.pop %v270
        %v282 = vmul.f32 %v281, %v270
        %v283 = vmul.f32 %v282, %v281
        %v284 = vmul.f32 0.5, %v283
        %v285 = vsub.f32 1.5, %v284
        %v286 = vmul.f32 %v281, %v285
        %vm287 = vweird.f32 %v270
        %vm288 = vweird.f32 %v281
        %vm289 = vmor %vm287, %vm288
        %v290 = vsel %vm289, %v281, %v286
        %v291 = vmul.f32 %v249, %v280
        %v292 = vmul.f32 %v250, %v290
        %v293 = vpack.c.bf16 %v292, %v291
        %v294 = vld [vmem:[%s216] sm:$0xf]
        %v295 = vld [vmem:[%s216 + $0x4] sm:$0xf]
        %v296 = vld [vmem:[%s216 + $0x8] sm:$0xf]
        %v297 = vld [vmem:[%s216 + $0xc] sm:$0xf]
        %v298 = vld [vmem:[%s216 + $0x10] sm:$0xf]
        %v299 = vld [vmem:[%s216 + $0x14] sm:$0xf]
        %v300 = vld [vmem:[%s216 + $0x18] sm:$0xf]
        %v301 = vld [vmem:[%s216 + $0x1c] sm:$0xf]
        %v310 = vunpack.c.l.b16 %v294
        %v311 = vunpack.c.l.b16 %v295
        %v312 = vunpack.c.l.b16 %v296
        %v313 = vunpack.c.l.b16 %v297
        %v314 = vunpack.c.l.b16 %v298
        %v315 = vunpack.c.l.b16 %v299
        %v316 = vunpack.c.l.b16 %v300
        %v317 = vunpack.c.l.b16 %v301
        %v318 = vpack.c.b16 %v311, %v310
        %v319 = vpack.c.b16 %v313, %v312
        %v320 = vpack.c.b16 %v315, %v314
        %v321 = vpack.c.b16 %v317, %v316
        %v327 = vsel %vm253, %v293, 0
        %329 = vmatpush.bf16.msra.mxu0 0
        %330 = vmatpush.bf16.msra.mxu0 0
        %331 = vmatpush.bf16.msra.mxu0 0
        %332 = vmatpush.bf16.msra.mxu0 0
        %333 = vmatpush.bf16.msra.mxu0 %v321
        %334 = vmatpush.bf16.msra.mxu0 %v320
        %335 = vmatpush.bf16.msra.mxu0 %v319
        %336 = vmatpush.bf16.msra.mxu0 %v318
        %337 = vmatmul.bf16.gmra.mxu0 %v327
        %v338 = vpop.f32.mrf.mxu0
        %v339 = vadd.f32 0.0, %v338
        %v340 = vpop.f32.mrf.mxu0
        %v341 = vadd.f32 0.0, %v340
        %342 = vdwg.mxu0
        %v343 = vpack.c.bf16 %v339, %v339
        %v344 = vpack.c.bf16 %v341, %v341
        %345 = vst [vmem:[%s238] sm:$0xf] %v343
        %346 = vst [vmem:[%s238 + $0x4] sm:$0xf] %v344
        %s347 = sand.u32 %s87, 1
        %s348 = sand.u32 %s87, 1
        %s349 = smul.addr %s348, 8
        %s350 = scalar_lea.vmem [#allocation3], %s349
        // Predicated region
        $region70: #{_lambda_.13} parent=64 // pred_check
          %p351 = pneg %p97
        $region71: #{_lambda_.13} parent=64 // pred_check_branch
          %353 = sbr.rel (%p351) target = $region73
        $region72: #{_lambda_.13} parent=64 // pred_region
          %s354 = smul.u32 2, %s17
          %s355 = smul.addr %s354, 7
          %s356 = sadd.s32 %s18, %s355
          %s357 = smul.addr %s356, 4
          %s358 = scalar_lea.vmem %s2, %s357
          // Predicated region
          $region74: #{_lambda_.13} parent=72 // pred_check
            _
          $region75: #{_lambda_.13} parent=72 // pred_check_branch
            %360 = sbr.rel (0) target = $region77
          $region76: #{_lambda_.13} parent=72 // pred_region
            // Predicated region
            $region78: #{_lambda_.13} parent=76 // pred_check
              _
            $region79: #{_lambda_.13} parent=76 // pred_check_branch
              %362 = sbr.rel target = $region81
            $region80: #{_lambda_.13} parent=76 // pred_region
              // Predicated region
              $region93: #{_lambda_.13} parent=80 // pred_check
                _
              $region94: #{_lambda_.13} parent=80 // pred_check_branch
                %380 = sbr.rel (0) target = $region96
              $region95: #{_lambda_.13} parent=80 // pred_region
                loop: start=0, step=1, limit=1
                $region97: #{_lambda_.13} parent=95 // loop_pre_header
                  _
                $region98: #{_lambda_.13} parent=95 // loop_header
                  %s382 = sphi 0, %s386
                  %p383 = scmp.ge.s32.totalorder %s382, 1
                  %s387 = sphi %s350, %s350
                  %s388 = sphi %s358, %s358
                $region99: #{_lambda_.13} parent=95 // loop_header_branch
                  %385 = sbr.rel (%p383) target = $region103
                $region100: #{_lambda_.13} parent=95 // loop_body
                  _
                $region101: #{_lambda_.13} parent=95 // loop_footer
                  %s386 = sadd.s32 1, %s382
                $region102: #{_lambda_.13} parent=95 // loop_footer_branch
                  %381 = sbr.rel target = $region98
                $region103: #{_lambda_.13} parent=95 // loop_exit
                  _
                %s390 = ssub.s32 16, 1
                loop: start=0, step=1, limit=1
                $region104: #{_lambda_.13} parent=95 // loop_pre_header
                  _
                $region105: #{_lambda_.13} parent=95 // loop_header
                  %s392 = sphi 0, %s396
                  %p393 = scmp.ge.s32.totalorder %s392, 1
                  %s397 = sphi %s350, %s350
                  %s398 = sphi %s358, %s358
                $region106: #{_lambda_.13} parent=95 // loop_header_branch
                  %395 = sbr.rel (%p393) target = $region110
                $region107: #{_lambda_.13} parent=95 // loop_body
                  %v399 = vld [vmem:[%s397] sm:%s390]
                  %400 = vst [vmem:[%s398] sm:%s390] %v399
                  %v401 = vld [vmem:[%s397 + $0x4] sm:%s390]
                  %402 = vst [vmem:[%s398 + $0x1c] sm:%s390] %v401
                $region108: #{_lambda_.13} parent=95 // loop_footer
                  %s396 = sadd.s32 1, %s392
                $region109: #{_lambda_.13} parent=95 // loop_footer_branch
                  %391 = sbr.rel target = $region105
                $region110: #{_lambda_.13} parent=95 // loop_exit
                  _
              $region96: #{_lambda_.13} parent=80 // pred_fallthru
                _
            $region81: #{_lambda_.13} parent=76 // pred_fallthru
              _
            // Predicated region
            $region82: #{_lambda_.13} parent=76 // pred_check
              _
            $region83: #{_lambda_.13} parent=76 // pred_check_branch
              %364 = sbr.rel (0) target = $region85
            $region84: #{_lambda_.13} parent=76 // pred_region
              %s366 = ssub.s32 16, 1
              loop: start=0, step=1, limit=1
              $region86: #{_lambda_.13} parent=84 // loop_pre_header
                _
              $region87: #{_lambda_.13} parent=84 // loop_header
                %s368 = sphi 0, %s372
                %p369 = scmp.ge.s32.totalorder %s368, 1
                %s373 = sphi %s350, %s350
                %s374 = sphi %s358, %s358
              $region88: #{_lambda_.13} parent=84 // loop_header_branch
                %371 = sbr.rel (%p369) target = $region92
              $region89: #{_lambda_.13} parent=84 // loop_body
                %v375 = vld [vmem:[%s373] sm:%s366]
                %376 = vst [vmem:[%s374] sm:%s366] %v375
                %v377 = vld [vmem:[%s373 + $0x4] sm:%s366]
                %378 = vst [vmem:[%s374 + $0x1c] sm:%s366] %v377
              $region90: #{_lambda_.13} parent=84 // loop_footer
                %s372 = sadd.s32 1, %s368
              $region91: #{_lambda_.13} parent=84 // loop_footer_branch
                %367 = sbr.rel target = $region87
              $region92: #{_lambda_.13} parent=84 // loop_exit
                _
            $region85: #{_lambda_.13} parent=76 // pred_fallthru
              _
          $region77: #{_lambda_.13} parent=72 // pred_fallthru
            _
          %403 = vnop
        $region73: #{_lambda_.13} parent=64 // pred_fallthru
          _
      $region65: #{_lambda_.13} parent=5 // pred_fallthru
        _
      %p404 = scmp.le.s32.totalorder 2, %s8
      // Predicated region
      $region111: #{_lambda_.13} parent=5 // pred_check
        %p405 = pneg %p404
      $region112: #{_lambda_.13} parent=5 // pred_check_branch
        %407 = sbr.rel (%p405) target = $region114
      $region113: #{_lambda_.13} parent=5 // pred_region
        %s408 = ssub.s32 %s8, 2
        // Predicated region
        $region115: #{_lambda_.13} parent=113 // pred_check
          %p409 = pneg %p103
        $region116: #{_lambda_.13} parent=113 // pred_check_branch
          %411 = sbr.rel (%p409) target = $region118
        $region117: #{_lambda_.13} parent=113 // pred_region
          %s412 = sand.u32 %s88, 1
          %s413 = sand.u32 %s88, 1
          %s414 = smul.addr %s413, 8
          %s415 = scalar_lea.vmem [#allocation3], %s414
        $region118: #{_lambda_.13} parent=113 // pred_fallthru
          _
      $region114: #{_lambda_.13} parent=5 // pred_fallthru
        _
    $region6: #{_lambda_.13} parent=1 // loop_footer
      %s12 = sadd.s32 1, %s8
    $region7: #{_lambda_.13} parent=1 // loop_footer_branch
      %7 = sbr.rel target = $region3
    $region8: #{_lambda_.13} parent=1 // loop_exit
      _

// kernel: _lambda_.12
$region0: #{_lambda_.12}
  #allocation0 [shape = 'u32[]', space=smem, size = 0x4, offset = 0x4, fixed_abs, tag = 'smem constant byte address 0x4 - core index']
  #allocation1 [shape = 'u32[72,128]{1,0:T(1,128)}', space=vmem, size = 0x9000, scoped, tag = 'internal scratch']
  #allocation2 [shape = 'bf16[16,64]{1,0:T(8,128)(2,1)}', space=vmem, size = 0x1000, scoped, tag = 'scratch operand']
  %s0 = inlined_call_operand.vmem [shape: bf16[16,64], index: 0, kind: input, shape index: {}]
  %s1 = inlined_call_operand.vmem [shape: bf16[64,170], index: 1, kind: input, shape index: {}]
  %s2 = inlined_call_operand.vmem [shape: bf16[64,170], index: 2, kind: input, shape index: {}]
  %s3 = inlined_call_operand.vmem [shape: bf16[170,64], index: 3, kind: input, shape index: {}]
  %s4 = inlined_call_operand.vmem [shape: bf16[16,64], index: 4, kind: output, shape index: {}]
  %s5 = sld [smem:[#allocation0]]
  $region30: #{_lambda_.12} parent=0
    _
  %s7 = ssub.s32 1, %s5
  %s8 = scalar_select 0, %s7, %s5
  // Predicated region
  $region2: #{_lambda_.12} parent=0 // pred_check
    _
  $region3: #{_lambda_.12} parent=0 // pred_check_branch
    %10 = sbr.rel (0) target = $region5
  $region4: #{_lambda_.12} parent=0 // pred_region
    _
  $region5: #{_lambda_.12} parent=0 // pred_fallthru
    _
  // Predicated region
  $region6: #{_lambda_.12} parent=0 // pred_check
    _
  $region7: #{_lambda_.12} parent=0 // pred_check_branch
    %12 = sbr.rel (0) target = $region9
  $region8: #{_lambda_.12} parent=0 // pred_region
    _
  $region9: #{_lambda_.12} parent=0 // pred_fallthru
    _
  // Predicated region
  $region10: #{_lambda_.12} parent=0 // pred_check
    _
  $region11: #{_lambda_.12} parent=0 // pred_check_branch
    %14 = sbr.rel (0) target = $region13
  $region12: #{_lambda_.12} parent=0 // pred_region
    _
  $region13: #{_lambda_.12} parent=0 // pred_fallthru
    _
  // Predicated region
  $region14: #{_lambda_.12} parent=0 // pred_check
    _
  $region15: #{_lambda_.12} parent=0 // pred_check_branch
    %16 = sbr.rel (0) target = $region17
  $region16: #{_lambda_.12} parent=0 // pred_region
    _
  $region17: #{_lambda_.12} parent=0 // pred_fallthru
    _
  %p18 = scmp.eq.s32.totalorder 0, 0
  // Predicated region
  $region18: #{_lambda_.12} parent=0 // pred_check
    %p19 = pneg %p18
  $region19: #{_lambda_.12} parent=0 // pred_check_branch
    %21 = sbr.rel (%p19) target = $region21
  $region20: #{_lambda_.12} parent=0 // pred_region
    %v22 = vld [vmem:[%s0] sm:$0xf]
    %v23 = vld [vmem:[%s0 + $0x4] sm:$0xf]
    %v24 = vunpack.c.l.bf16 %v22
    %v25 = vunpack.c.l.bf16 %v23
    %v26 = vmul.f32 %v24, %v24
    %v27 = vmul.f32 %v25, %v25
    %vm28 = vcmask 523264
    %v29 = vsel %vm28, %v26, 0.0
    %30 = vadd.xlane.f32.xlu0 %v29
    %v31 = vpop.xlane.xlu0 %30
    %v32 = vsel %vm28, %v27, 0.0
    %33 = vadd.xlane.f32.xlu0 %v32
    %v34 = vpop.xlane.xlu0 %33
    %v35 = vrcp.pop 64.0
    %v36 = vmul.f32 64.0, %v35
    %v37 = vsub.f32 1.0, %v36
    %v38 = vmul.f32 %v35, %v37
    %v39 = vadd.f32 %v35, %v38
    %vm40 = vweird.f32 %v35
    %v41 = vsel %vm40, %v35, %v39
    %v42 = vmul.f32 %v31, %v41
    %v43 = vmul.f32 %v34, %v41
    %v44 = vadd.f32 %v42, 1.1920929e-07
    %v45 = vadd.f32 %v43, 1.1920929e-07
    %v46 = vrsqrt.pop %v44
    %v47 = vmul.f32 %v46, %v44
    %v48 = vmul.f32 %v47, %v46
    %v49 = vmul.f32 0.5, %v48
    %v50 = vsub.f32 1.5, %v49
    %v51 = vmul.f32 %v46, %v50
    %vm52 = vweird.f32 %v44
    %vm53 = vweird.f32 %v46
    %vm54 = vmor %vm52, %vm53
    %v55 = vsel %vm54, %v46, %v51
    %v56 = vrsqrt.pop %v45
    %v57 = vmul.f32 %v56, %v45
    %v58 = vmul.f32 %v57, %v56
    %v59 = vmul.f32 0.5, %v58
    %v60 = vsub.f32 1.5, %v59
    %v61 = vmul.f32 %v56, %v60
    %vm62 = vweird.f32 %v45
    %vm63 = vweird.f32 %v56
    %vm64 = vmor %vm62, %vm63
    %v65 = vsel %vm64, %v56, %v61
    %v66 = vmul.f32 %v24, %v55
    %v67 = vmul.f32 %v25, %v65
    %v68 = vpack.c.bf16 %v66, %v66
    %v69 = vpack.c.bf16 %v67, %v67
    %vm70 = vcmask 519168
    %71 = vst.msk [vmem:[#allocation2] sm:$0xf] %vm70, %v68
    %72 = vst.msk [vmem:[#allocation2 + $0x4] sm:$0xf] %vm70, %v69
    %73 = vst.msk [vmem:[%s4] sm:$0xf] %vm70, 0
    %74 = vst.msk [vmem:[%s4 + $0x4] sm:$0xf] %vm70, 0
  $region21: #{_lambda_.12} parent=0 // pred_fallthru
    _
  %v75 = vld [vmem:[#allocation2] sm:$0xf]
  %v76 = vld [vmem:[#allocation2 + $0x4] sm:$0xf]
  %v77 = vld [vmem:[%s1] sm:$0xff]
  %v78 = vld [vmem:[%s1 + $0x8] sm:$0xff]
  %v79 = vld [vmem:[%s1 + $0x10] sm:$0xff]
  %v80 = vld [vmem:[%s1 + $0x18] sm:$0xff]
  %v81 = vld [vmem:[%s1 + $0x20] sm:$0xff]
  %v82 = vld [vmem:[%s1 + $0x28] sm:$0xff]
  %v83 = vld [vmem:[%s1 + $0x30] sm:$0xff]
  %v84 = vld [vmem:[%s1 + $0x38] sm:$0xff]
  %v87 = vunpack.c.l.b16 %v75
  %v88 = vunpack.c.l.b16 %v76
  %v89 = vpack.c.b16 %v88, %v87
  %v98 = vunpack.c.l.b16 %v77
  %v99 = vunpack.c.h.b16 %v77
  %v100 = vunpack.c.l.b16 %v78
  %v101 = vunpack.c.h.b16 %v78
  %v102 = vunpack.c.l.b16 %v79
  %v103 = vunpack.c.h.b16 %v79
  %v104 = vunpack.c.l.b16 %v80
  %v105 = vunpack.c.h.b16 %v80
  %v106 = vunpack.c.l.b16 %v81
  %v107 = vunpack.c.h.b16 %v81
  %v108 = vunpack.c.l.b16 %v82
  %v109 = vunpack.c.h.b16 %v82
  %v110 = vunpack.c.l.b16 %v83
  %v111 = vunpack.c.h.b16 %v83
  %v112 = vunpack.c.l.b16 %v84
  %v113 = vunpack.c.h.b16 %v84
  %v114 = vpack.c.b16 %v100, %v98
  %v115 = vpack.c.b16 %v101, %v99
  %v116 = vpack.c.b16 %v104, %v102
  %v117 = vpack.c.b16 %v105, %v103
  %v118 = vpack.c.b16 %v108, %v106
  %v119 = vpack.c.b16 %v109, %v107
  %v120 = vpack.c.b16 %v112, %v110
  %v121 = vpack.c.b16 %v113, %v111
  %vm130 = vcmask 523264
  %v132 = vsel %vm130, %v89, 0
  %134 = vmatpush.bf16.msra.mxu0 0
  %135 = vmatpush.bf16.msra.mxu0 0
  %136 = vmatpush.bf16.msra.mxu0 0
  %137 = vmatpush.bf16.msra.mxu0 0
  %138 = vmatpush.bf16.msra.mxu0 %v120
  %139 = vmatpush.bf16.msra.mxu0 %v118
  %140 = vmatpush.bf16.msra.mxu0 %v116
  %141 = vmatpush.bf16.msra.mxu0 %v114
  %142 = vmatmul.bf16.gmra.mxu0 %v132
  %v143 = vpop.f32.mrf.mxu0
  %v144 = vadd.f32 0.0, %v143
  %v145 = vpop.f32.mrf.mxu0
  %v146 = vadd.f32 0.0, %v145
  %147 = vdwg.mxu0
  %148 = vmatpush.bf16.msra.mxu0 0
  %149 = vmatpush.bf16.msra.mxu0 0
  %150 = vmatpush.bf16.msra.mxu0 0
  %151 = vmatpush.bf16.msra.mxu0 0
  %152 = vmatpush.bf16.msra.mxu0 %v121
  %153 = vmatpush.bf16.msra.mxu0 %v119
  %154 = vmatpush.bf16.msra.mxu0 %v117
  %155 = vmatpush.bf16.msra.mxu0 %v115
  %156 = vmatmul.bf16.gmra.mxu0 %v132
  %v157 = vpop.f32.mrf.mxu0
  %v158 = vadd.f32 0.0, %v157
  %v159 = vpop.f32.mrf.mxu0
  %v160 = vadd.f32 0.0, %v159
  %161 = vdwg.mxu0
  %v162 = vld [vmem:[%s2] sm:$0xff]
  %v163 = vld [vmem:[%s2 + $0x8] sm:$0xff]
  %v164 = vld [vmem:[%s2 + $0x10] sm:$0xff]
  %v165 = vld [vmem:[%s2 + $0x18] sm:$0xff]
  %v166 = vld [vmem:[%s2 + $0x20] sm:$0xff]
  %v167 = vld [vmem:[%s2 + $0x28] sm:$0xff]
  %v168 = vld [vmem:[%s2 + $0x30] sm:$0xff]
  %v169 = vld [vmem:[%s2 + $0x38] sm:$0xff]
  %v178 = vunpack.c.l.b16 %v162
  %v179 = vunpack.c.h.b16 %v162
  %v180 = vunpack.c.l.b16 %v163
  %v181 = vunpack.c.h.b16 %v163
  %v182 = vunpack.c.l.b16 %v164
  %v183 = vunpack.c.h.b16 %v164
  %v184 = vunpack.c.l.b16 %v165
  %v185 = vunpack.c.h.b16 %v165
  %v186 = vunpack.c.l.b16 %v166
  %v187 = vunpack.c.h.b16 %v166
  %v188 = vunpack.c.l.b16 %v167
  %v189 = vunpack.c.h.b16 %v167
  %v190 = vunpack.c.l.b16 %v168
  %v191 = vunpack.c.h.b16 %v168
  %v192 = vunpack.c.l.b16 %v169
  %v193 = vunpack.c.h.b16 %v169
  %v194 = vpack.c.b16 %v180, %v178
  %v195 = vpack.c.b16 %v181, %v179
  %v196 = vpack.c.b16 %v184, %v182
  %v197 = vpack.c.b16 %v185, %v183
  %v198 = vpack.c.b16 %v188, %v186
  %v199 = vpack.c.b16 %v189, %v187
  %v200 = vpack.c.b16 %v192, %v190
  %v201 = vpack.c.b16 %v193, %v191
  %210 = vmatpush.bf16.msra.mxu0 0
  %211 = vmatpush.bf16.msra.mxu0 0
  %212 = vmatpush.bf16.msra.mxu0 0
  %213 = vmatpush.bf16.msra.mxu0 0
  %214 = vmatpush.bf16.msra.mxu0 %v200
  %215 = vmatpush.bf16.msra.mxu0 %v198
  %216 = vmatpush.bf16.msra.mxu0 %v196
  %217 = vmatpush.bf16.msra.mxu0 %v194
  %218 = vmatmul.bf16.gmra.mxu0 %v132
  %v219 = vpop.f32.mrf.mxu0
  %v220 = vadd.f32 0.0, %v219
  %v221 = vpop.f32.mrf.mxu0
  %v222 = vadd.f32 0.0, %v221
  %223 = vdwg.mxu0
  %224 = vmatpush.bf16.msra.mxu0 0
  %225 = vmatpush.bf16.msra.mxu0 0
  %226 = vmatpush.bf16.msra.mxu0 0
  %227 = vmatpush.bf16.msra.mxu0 0
  %228 = vmatpush.bf16.msra.mxu0 %v201
  %229 = vmatpush.bf16.msra.mxu0 %v199
  %230 = vmatpush.bf16.msra.mxu0 %v197
  %231 = vmatpush.bf16.msra.mxu0 %v195
  %232 = vmatmul.bf16.gmra.mxu0 %v132
  %v233 = vpop.f32.mrf.mxu0
  %v234 = vadd.f32 0.0, %v233
  %v235 = vpop.f32.mrf.mxu0
  %v236 = vadd.f32 0.0, %v235
  %237 = vdwg.mxu0
  %v238 = vxor.u32 %v144, 2147483648
  %v239 = vxor.u32 %v158, 2147483648
  %v240 = vxor.u32 %v146, 2147483648
  %v241 = vxor.u32 %v160, 2147483648
  %v242 = vmul.f32 %v238, 1.442695
  %v243 = vpow.pop %v242
  %v244 = vmul.f32 %v239, 1.442695
  %v245 = vpow.pop %v244
  %v246 = vmul.f32 %v240, 1.442695
  %v247 = vpow.pop %v246
  %v248 = vmul.f32 %v241, 1.442695
  %v249 = vpow.pop %v248
  %v250 = vadd.f32 %v243, 1.0
  %v251 = vadd.f32 %v245, 1.0
  %v252 = vadd.f32 %v247, 1.0
  %v253 = vadd.f32 %v249, 1.0
  %v254 = vrcp.pop %v250
  %v255 = vmul.f32 %v250, %v254
  %v256 = vsub.f32 1.0, %v255
  %v257 = vmul.f32 %v254, %v256
  %v258 = vadd.f32 %v254, %v257
  %vm259 = vweird.f32 %v250
  %vm260 = vweird.f32 %v254
  %vm261 = vmor %vm259, %vm260
  %v262 = vsel %vm261, %v254, %v258
  %v263 = vand.u32 2147483647, %v250
  %vm264 = vcmp.eq.f32.partialorder %v263, 8.507059e+37
  %v265 = vand.u32 %v250, 2147483648
  %v266 = vor.u32 1.1754944e-38, %v265
  %v267 = vsel %vm264, %v266, %v262
  %v268 = vmul.f32 1.0, %v267
  %v269 = vrcp.pop %v251
  %v270 = vmul.f32 %v251, %v269
  %v271 = vsub.f32 1.0, %v270
  %v272 = vmul.f32 %v269, %v271
  %v273 = vadd.f32 %v269, %v272
  %vm274 = vweird.f32 %v251
  %vm275 = vweird.f32 %v269
  %vm276 = vmor %vm274, %vm275
  %v277 = vsel %vm276, %v269, %v273
  %v278 = vand.u32 2147483647, %v251
  %vm279 = vcmp.eq.f32.partialorder %v278, 8.507059e+37
  %v280 = vand.u32 %v251, 2147483648
  %v281 = vor.u32 1.1754944e-38, %v280
  %v282 = vsel %vm279, %v281, %v277
  %v283 = vmul.f32 1.0, %v282
  %v284 = vrcp.pop %v252
  %v285 = vmul.f32 %v252, %v284
  %v286 = vsub.f32 1.0, %v285
  %v287 = vmul.f32 %v284, %v286
  %v288 = vadd.f32 %v284, %v287
  %vm289 = vweird.f32 %v252
  %vm290 = vweird.f32 %v284
  %vm291 = vmor %vm289, %vm290
  %v292 = vsel %vm291, %v284, %v288
  %v293 = vand.u32 2147483647, %v252
  %vm294 = vcmp.eq.f32.partialorder %v293, 8.507059e+37
  %v295 = vand.u32 %v252, 2147483648
  %v296 = vor.u32 1.1754944e-38, %v295
  %v297 = vsel %vm294, %v296, %v292
  %v298 = vmul.f32 1.0, %v297
  %v299 = vrcp.pop %v253
  %v300 = vmul.f32 %v253, %v299
  %v301 = vsub.f32 1.0, %v300
  %v302 = vmul.f32 %v299, %v301
  %v303 = vadd.f32 %v299, %v302
  %vm304 = vweird.f32 %v253
  %vm305 = vweird.f32 %v299
  %vm306 = vmor %vm304, %vm305
  %v307 = vsel %vm306, %v299, %v303
  %v308 = vand.u32 2147483647, %v253
  %vm309 = vcmp.eq.f32.partialorder %v308, 8.507059e+37
  %v310 = vand.u32 %v253, 2147483648
  %v311 = vor.u32 1.1754944e-38, %v310
  %v312 = vsel %vm309, %v311, %v307
  %v313 = vmul.f32 1.0, %v312
  %v314 = vmul.f32 %v144, %v268
  %v315 = vmul.f32 %v158, %v283
  %v316 = vmul.f32 %v146, %v298
  %v317 = vmul.f32 %v160, %v313
  %v318 = vmul.f32 %v314, %v220
  %v319 = vmul.f32 %v315, %v234
  %v320 = vmul.f32 %v316, %v222
  %v321 = vmul.f32 %v317, %v236
  %v322 = vpack.c.bf16 %v320, %v318
  %v323 = vpack.c.bf16 %v321, %v319
  %v324 = vld [vmem:[%s3] sm:$0xf]
  %v325 = vld [vmem:[%s3 + $0x4] sm:$0xf]
  %v326 = vld [vmem:[%s3 + $0x8] sm:$0xf]
  %v327 = vld [vmem:[%s3 + $0xc] sm:$0xf]
  %v328 = vld [vmem:[%s3 + $0x10] sm:$0xf]
  %v329 = vld [vmem:[%s3 + $0x14] sm:$0xf]
  %v330 = vld [vmem:[%s3 + $0x18] sm:$0xf]
  %v331 = vld [vmem:[%s3 + $0x1c] sm:$0xf]
  %v332 = vld [vmem:[%s3 + $0x20] sm:$0xf]
  %v333 = vld [vmem:[%s3 + $0x24] sm:$0xf]
  %v334 = vld [vmem:[%s3 + $0x28] sm:$0xf]
  %v335 = vld [vmem:[%s3 + $0x2c] sm:$0xf]
  %v336 = vld [vmem:[%s3 + $0x30] sm:$0xf]
  %v337 = vld [vmem:[%s3 + $0x34] sm:$0xf]
  %v338 = vld [vmem:[%s3 + $0x38] sm:$0xf]
  %v339 = vld [vmem:[%s3 + $0x3c] sm:$0xf]
  %v340 = vld [vmem:[%s3 + $0x40] sm:$0xf]
  %v341 = vld [vmem:[%s3 + $0x44] sm:$0xf]
  %v342 = vld [vmem:[%s3 + $0x48] sm:$0xf]
  %v343 = vld [vmem:[%s3 + $0x4c] sm:$0xf]
  %v344 = vld [vmem:[%s3 + $0x50] sm:$0xf]
  %v345 = vld [vmem:[%s3 + $0x54] sm:$0x1]
  %v368 = vunpack.c.l.b16 %v324
  %v369 = vunpack.c.l.b16 %v325
  %v370 = vunpack.c.l.b16 %v326
  %v371 = vunpack.c.l.b16 %v327
  %v372 = vunpack.c.l.b16 %v328
  %v373 = vunpack.c.l.b16 %v329
  %v374 = vunpack.c.l.b16 %v330
  %v375 = vunpack.c.l.b16 %v331
  %v376 = vunpack.c.l.b16 %v332
  %v377 = vunpack.c.l.b16 %v333
  %v378 = vunpack.c.l.b16 %v334
  %v379 = vunpack.c.l.b16 %v335
  %v380 = vunpack.c.l.b16 %v336
  %v381 = vunpack.c.l.b16 %v337
  %v382 = vunpack.c.l.b16 %v338
  %v383 = vunpack.c.l.b16 %v339
  %v384 = vunpack.c.l.b16 %v340
  %v385 = vunpack.c.l.b16 %v341
  %v386 = vunpack.c.l.b16 %v342
  %v387 = vunpack.c.l.b16 %v343
  %v388 = vunpack.c.l.b16 %v344
  %v389 = vunpack.c.l.b16 %v345
  %v390 = vpack.c.b16 %v369, %v368
  %v391 = vpack.c.b16 %v371, %v370
  %v392 = vpack.c.b16 %v373, %v372
  %v393 = vpack.c.b16 %v375, %v374
  %v394 = vpack.c.b16 %v377, %v376
  %v395 = vpack.c.b16 %v379, %v378
  %v396 = vpack.c.b16 %v381, %v380
  %v397 = vpack.c.b16 %v383, %v382
  %v398 = vpack.c.b16 %v385, %v384
  %v399 = vpack.c.b16 %v387, %v386
  %v400 = vpack.c.b16 %v389, %v388
  %vm411 = vcmask 343040
  %v413 = vsel %vm411, %v323, 0
  %vm415 = vcmask 1044480
  %v417 = vsel %vm415, %v400, 0
  %419 = vmatpush.bf16.msra.mxu0 %v397
  %420 = vmatpush.bf16.msra.mxu0 %v396
  %421 = vmatpush.bf16.msra.mxu0 %v395
  %422 = vmatpush.bf16.msra.mxu0 %v394
  %423 = vmatpush.bf16.msra.mxu0 %v393
  %424 = vmatpush.bf16.msra.mxu0 %v392
  %425 = vmatpush.bf16.msra.mxu0 %v391
  %426 = vmatpush.bf16.msra.mxu0 %v390
  %427 = vmatmul.bf16.gmra.mxu0 %v322
  %v428 = vpop.f32.mrf.mxu0
  %v429 = vadd.f32 0.0, %v428
  %v430 = vpop.f32.mrf.mxu0
  %v431 = vadd.f32 0.0, %v430
  %432 = vdwg.mxu0
  %433 = vmatpush.bf16.msra.mxu0 0
  %434 = vmatpush.bf16.msra.mxu0 0
  %435 = vmatpush.bf16.msra.mxu0 0
  %436 = vmatpush.bf16.msra.mxu0 0
  %437 = vmatpush.bf16.msra.mxu0 0
  %438 = vmatpush.bf16.msra.mxu0 %v417
  %439 = vmatpush.bf16.msra.mxu0 %v399
  %440 = vmatpush.bf16.msra.mxu0 %v398
  %441 = vmatmul.bf16.gmra.mxu0 %v413
  %v442 = vpop.f32.mrf.mxu0
  %v443 = vadd.f32 %v429, %v442
  %v444 = vpop.f32.mrf.mxu0
  %v445 = vadd.f32 %v431, %v444
  %446 = vdwg.mxu0
  %v447 = vld [vmem:[%s4] sm:$0xf]
  %v448 = vld [vmem:[%s4 + $0x4] sm:$0xf]
  %v449 = vunpack.c.l.bf16 %v447
  %v450 = vunpack.c.l.bf16 %v448
  %v451 = vadd.f32 %v449, %v443
  %v452 = vadd.f32 %v450, %v445
  %v453 = vpack.c.bf16 %v451, %v451
  %v454 = vpack.c.bf16 %v452, %v452
  %vm455 = vcmask 519168
  %456 = vst.msk [vmem:[%s4] sm:$0xf] %vm455, %v453
  %457 = vst.msk [vmem:[%s4 + $0x4] sm:$0xf] %vm455, %v454
  // Predicated region
  $region22: #{_lambda_.12} parent=0 // pred_check
    _
  $region23: #{_lambda_.12} parent=0 // pred_check_branch
    %459 = sbr.rel (0) target = $region25
  $region24: #{_lambda_.12} parent=0 // pred_region
    _
  $region25: #{_lambda_.12} parent=0 // pred_fallthru
    _
  // Predicated region
  $region26: #{_lambda_.12} parent=0 // pred_check
    _
  $region27: #{_lambda_.12} parent=0 // pred_check_branch
    %461 = sbr.rel (0) target = $region29
  $region28: #{_lambda_.12} parent=0 // pred_region
    _
  $region29: #{_lambda_.12} parent=0 // pred_fallthru
    _

// kernel: _lambda_.17
$region0: #{_lambda_.17}
  #allocation0 [shape = 'u32[]', space=smem, size = 0x4, offset = 0x4, fixed_abs, tag = 'smem constant byte address 0x4 - core index']
  #allocation1 [shape = 'u32[72,128]{1,0:T(1,128)}', space=vmem, size = 0x9000, scoped, tag = 'internal scratch']
  %s0 = inlined_call_operand.vmem [shape: bf16[16,64], index: 0, kind: input, shape index: {}]
  %s1 = inlined_call_operand.vmem [shape: bf16[64,64], index: 1, kind: input, shape index: {}]
  %s2 = inlined_call_operand.hbm [shape: f32[16,64], index: 2, kind: output, shape index: {}]
  %s3 = sld [smem:[#allocation0]]
  $region18: #{_lambda_.17} parent=0
    _
  %s5 = ssub.s32 1, %s3
  %s6 = scalar_select 0, %s5, %s3
  $region1: #{_lambda_.17} parent=0
    #allocation2 [shape = 'u8[8192]{0}', space=vmem, size = 0x2000, scoped, tag = 'output window, operand 0, single buffered']
    #allocation3 [shape = 's32[1]{0}', space=sflag, size = 0x4, scoped, tag = 'scoped memory for _lambda_.17']
    %7 = vsyncpa [#allocation3], 0
    // Predicated region
    $region2: #{_lambda_.17} parent=1 // pred_check
      _
    $region3: #{_lambda_.17} parent=1 // pred_check_branch
      %9 = sbr.rel (0) target = $region5
    $region4: #{_lambda_.17} parent=1 // pred_region
      _
    $region5: #{_lambda_.17} parent=1 // pred_fallthru
      _
    // Predicated region
    $region6: #{_lambda_.17} parent=1 // pred_check
      _
    $region7: #{_lambda_.17} parent=1 // pred_check_branch
      %11 = sbr.rel (0) target = $region9
    $region8: #{_lambda_.17} parent=1 // pred_region
      _
    $region9: #{_lambda_.17} parent=1 // pred_fallthru
      _
    %v13 = vld [vmem:[%s0] sm:$0xf]
    %v14 = vld [vmem:[%s0 + $0x4] sm:$0xf]
    %v15 = vunpack.c.l.bf16 %v13
    %v16 = vunpack.c.l.bf16 %v14
    %v17 = vmul.f32 %v15, %v15
    %v18 = vmul.f32 %v16, %v16
    %vm19 = vcmask 523264
    %v20 = vsel %vm19, %v17, 0.0
    %21 = vadd.xlane.f32.xlu0 %v20
    %v22 = vpop.xlane.xlu0 %21
    %v23 = vsel %vm19, %v18, 0.0
    %24 = vadd.xlane.f32.xlu0 %v23
    %v25 = vpop.xlane.xlu0 %24
    %v26 = vrcp.pop 64.0
    %v27 = vmul.f32 64.0, %v26
    %v28 = vsub.f32 1.0, %v27
    %v29 = vmul.f32 %v26, %v28
    %v30 = vadd.f32 %v26, %v29
    %vm31 = vweird.f32 %v26
    %v32 = vsel %vm31, %v26, %v30
    %v33 = vmul.f32 %v22, %v32
    %v34 = vmul.f32 %v25, %v32
    %v35 = vadd.f32 %v33, 1.1920929e-07
    %v36 = vadd.f32 %v34, 1.1920929e-07
    %v37 = vrsqrt.pop %v35
    %v38 = vmul.f32 %v37, %v35
    %v39 = vmul.f32 %v38, %v37
    %v40 = vmul.f32 0.5, %v39
    %v41 = vsub.f32 1.5, %v40
    %v42 = vmul.f32 %v37, %v41
    %vm43 = vweird.f32 %v35
    %vm44 = vweird.f32 %v37
    %vm45 = vmor %vm43, %vm44
    %v46 = vsel %vm45, %v37, %v42
    %v47 = vrsqrt.pop %v36
    %v48 = vmul.f32 %v47, %v36
    %v49 = vmul.f32 %v48, %v47
    %v50 = vmul.f32 0.5, %v49
    %v51 = vsub.f32 1.5, %v50
    %v52 = vmul.f32 %v47, %v51
    %vm53 = vweird.f32 %v36
    %vm54 = vweird.f32 %v47
    %vm55 = vmor %vm53, %vm54
    %v56 = vsel %vm55, %v47, %v52
    %v57 = vmul.f32 %v15, %v46
    %v58 = vmul.f32 %v16, %v56
    %v59 = vpack.c.bf16 %v58, %v57
    %v60 = vld [vmem:[%s1] sm:$0xf]
    %v61 = vld [vmem:[%s1 + $0x4] sm:$0xf]
    %v62 = vld [vmem:[%s1 + $0x8] sm:$0xf]
    %v63 = vld [vmem:[%s1 + $0xc] sm:$0xf]
    %v64 = vld [vmem:[%s1 + $0x10] sm:$0xf]
    %v65 = vld [vmem:[%s1 + $0x14] sm:$0xf]
    %v66 = vld [vmem:[%s1 + $0x18] sm:$0xf]
    %v67 = vld [vmem:[%s1 + $0x1c] sm:$0xf]
    %v76 = vunpack.c.l.b16 %v60
    %v77 = vunpack.c.l.b16 %v61
    %v78 = vunpack.c.l.b16 %v62
    %v79 = vunpack.c.l.b16 %v63
    %v80 = vunpack.c.l.b16 %v64
    %v81 = vunpack.c.l.b16 %v65
    %v82 = vunpack.c.l.b16 %v66
    %v83 = vunpack.c.l.b16 %v67
    %v84 = vpack.c.b16 %v77, %v76
    %v85 = vpack.c.b16 %v79, %v78
    %v86 = vpack.c.b16 %v81, %v80
    %v87 = vpack.c.b16 %v83, %v82
    %v93 = vsel %vm19, %v59, 0
    %95 = vmatpush.bf16.msra.mxu0 0
    %96 = vmatpush.bf16.msra.mxu0 0
    %97 = vmatpush.bf16.msra.mxu0 0
    %98 = vmatpush.bf16.msra.mxu0 0
    %99 = vmatpush.bf16.msra.mxu0 %v87
    %100 = vmatpush.bf16.msra.mxu0 %v86
    %101 = vmatpush.bf16.msra.mxu0 %v85
    %102 = vmatpush.bf16.msra.mxu0 %v84
    %103 = vmatmul.bf16.gmra.mxu0 %v93
    %v104 = vpop.f32.mrf.mxu0
    %v105 = vadd.f32 0.0, %v104
    %v106 = vpop.f32.mrf.mxu0
    %v107 = vadd.f32 0.0, %v106
    %108 = vdwg.mxu0
    %109 = vst.msk [vmem:[#allocation2] sm:$0xff] %vm19, %v105
    %110 = vst.msk [vmem:[#allocation2 + $0x8] sm:$0xff] %vm19, %v107
    // Predicated region
    $region10: #{_lambda_.17} parent=1 // pred_check
      _
    $region11: #{_lambda_.17} parent=1 // pred_check_branch
      %112 = sbr.rel (0) target = $region13
    $region12: #{_lambda_.17} parent=1 // pred_region
      %114 = vsyncadd [#allocation3], 0
      %s115 = sshll.u32 [#allocation2], 4
      %s116 = int_to_ptr.vmem [resolvable:$true] %s115
      %s117 = sshll.u32 %s2, 4
      %s118 = int_to_ptr.hbm [resolvable:$true] %s117
      %123 = dma.vmem_to_hbm [thread:$0]  %s116, 256, %s118, [#allocation3], 128, 128, 8
    $region13: #{_lambda_.17} parent=1 // pred_fallthru
      _
    // Predicated region
    $region14: #{_lambda_.17} parent=1 // pred_check
      _
    $region15: #{_lambda_.17} parent=1 // pred_check_branch
      %125 = sbr.rel (0) target = $region17
    $region16: #{_lambda_.17} parent=1 // pred_region
      %127 = dma.done [#allocation3], 256
    $region17: #{_lambda_.17} parent=1 // pred_fallthru
      _
    %128 = vsyncpa [#allocation3], 1

// kernel: _lambda_.10
$region0: #{_lambda_.10}
  #allocation0 [shape = 'u32[]', space=smem, size = 0x4, offset = 0x4, fixed_abs, tag = 'smem constant byte address 0x4 - core index']
  #allocation1 [shape = 'u32[72,128]{1,0:T(1,128)}', space=vmem, size = 0x9000, scoped, tag = 'internal scratch']
  #allocation2 [shape = 'bf16[4,8,16]{2,1,0:T(8,128)(2,1)}', space=vmem, size = 0x2000, scoped, tag = 'scratch operand']
  #allocation3 [shape = 'f32[4,8,1]{2,1,0:T(8,128)}', space=vmem, size = 0x4000, scoped, tag = 'scratch operand']
  #allocation4 [shape = 'f32[4,8,1]{2,1,0:T(8,128)}', space=vmem, size = 0x4000, scoped, tag = 'scratch operand']
  #allocation5 [shape = 'f32[4,8,16]{2,1,0:T(8,128)}', space=vmem, size = 0x4000, scoped, tag = 'scratch operand']
  %s0 = inlined_call_operand.vmem [shape: bf16[2,8,48], index: 0, kind: input, shape index: {}]
  %s1 = inlined_call_operand.vmem [shape: bf16[2,8,192], index: 1, kind: input, shape index: {}]
  %s2 = inlined_call_operand.vmem [shape: bf16[2,8,8], index: 2, kind: input, shape index: {}]
  %s3 = inlined_call_operand.vmem [shape: bf16[2,8,32], index: 3, kind: input, shape index: {}]
  %s4 = inlined_call_operand.vmem [shape: bf16[2,8,8], index: 4, kind: input, shape index: {}]
  %s5 = inlined_call_operand.vmem [shape: bf16[2,8,32], index: 5, kind: input, shape index: {}]
  %s6 = inlined_call_operand.vmem [shape: bf16[2,8,64], index: 6, kind: output, shape index: {}]
  %s7 = sld [smem:[#allocation0]]
  $region65: #{_lambda_.10} parent=0
    _
  %s9 = ssub.s32 1, %s7
  %s10 = scalar_select 0, %s9, %s7
  loop: start=0, step=1, limit=4
  $region2: #{_lambda_.10} parent=0 // loop_pre_header
    _
  $region3: #{_lambda_.10} parent=0 // loop_header
    %s12 = sphi 0, %s16
    %p13 = scmp.ge.s32.totalorder %s12, 4
    %s19 = sphi 0, %s31
    %s20 = sphi 0, %s27
    %s21 = sphi 0, %s19
    %s22 = sphi 0, %s20
    %s23 = sphi 0, %s21
    %s24 = sphi 0, %s22
    %s34 = sphi 0, %s36
    %s37 = sphi 0, %s34
    %s38 = sphi 0, %s37
    %s54 = sphi 0, %s38
    %s60 = sphi 0, %s62
    %s63 = sphi 0, %s60
    %s64 = sphi 0, %s63
    %s80 = sphi 0, %s64
    %s88 = sphi 0, %s90
    %s91 = sphi 0, %s88
    %s92 = sphi 0, %s91
    %s108 = sphi 0, %s92
    %s116 = sphi 0, %s118
    %s119 = sphi 0, %s116
    %s120 = sphi 0, %s119
    %s136 = sphi 0, %s120
    %s144 = sphi 0, %s146
    %s147 = sphi 0, %s144
    %s148 = sphi 0, %s147
    %s164 = sphi 0, %s148
    %s172 = sphi 0, %s174
    %s175 = sphi 0, %s172
    %s176 = sphi 0, %s175
    %s192 = sphi 0, %s176
    %s198 = sphi 0, %s200
    %s201 = sphi 0, %s198
    %s202 = sphi 0, %s201
    %s218 = sphi 0, %s202
  $region4: #{_lambda_.10} parent=0 // loop_header_branch
    %15 = sbr.rel (%p13) target = $region8
  $region5: #{_lambda_.10} parent=0 // loop_body
    %s17 = ssub.s32 %s12, 1
    %s18 = ssub.s32 %s12, 2
    %s25 = sadd.s32 1, %s20
    %p26 = scmp.ge.s32.totalorder %s25, 1
    %s27 = scalar_select %p26, 0, %s25
    %s28 = sadd.s32 1, %s19
    %s29 = scalar_select %p26, %s28, %s19
    %p30 = scmp.ge.s32.totalorder %s29, 2
    %s31 = scalar_select %p30, 0, %s29
    %s32 = ssub.s32 %s19, %s31
    %p33 = scmp.eq.s32.totalorder %s32, 0
    %s35 = sadd.s32 %s34, 1
    %s36 = scalar_select %p33, %s34, %s35
    %p39 = pneg %p33
    %p40 = scmp.eq.s32.totalorder %s12, 1
    %p41 = por %p39, %p40
    %p42 = scmp.ne.s32.totalorder %s34, %s37
    %p43 = scmp.eq.s32.totalorder %s12, 0
    %p44 = por %p42, %p43
    %p45 = scmp.ne.s32.totalorder %s34, %s37
    %p46 = scmp.eq.s32.totalorder %s17, 1
    %p47 = por %p45, %p46
    %p48 = scmp.ne.s32.totalorder %s37, %s38
    %p49 = scmp.eq.s32.totalorder %s17, 0
    %p50 = por %p48, %p49
    %p51 = scmp.ne.s32.totalorder %s37, %s38
    %p52 = scmp.eq.s32.totalorder %s18, 1
    %p53 = por %p51, %p52
    %p55 = scmp.ne.s32.totalorder %s38, %s54
    %p56 = scmp.eq.s32.totalorder %s18, 0
    %p57 = por %p55, %p56
    %s58 = ssub.s32 %s19, %s31
    %p59 = scmp.eq.s32.totalorder %s58, 0
    %s61 = sadd.s32 %s60, 1
    %s62 = scalar_select %p59, %s60, %s61
    %p65 = pneg %p59
    %p66 = scmp.eq.s32.totalorder %s12, 1
    %p67 = por %p65, %p66
    %p68 = scmp.ne.s32.totalorder %s60, %s63
    %p69 = scmp.eq.s32.totalorder %s12, 0
    %p70 = por %p68, %p69
    %p71 = scmp.ne.s32.totalorder %s60, %s63
    %p72 = scmp.eq.s32.totalorder %s17, 1
    %p73 = por %p71, %p72
    %p74 = scmp.ne.s32.totalorder %s63, %s64
    %p75 = scmp.eq.s32.totalorder %s17, 0
    %p76 = por %p74, %p75
    %p77 = scmp.ne.s32.totalorder %s63, %s64
    %p78 = scmp.eq.s32.totalorder %s18, 1
    %p79 = por %p77, %p78
    %p81 = scmp.ne.s32.totalorder %s64, %s80
    %p82 = scmp.eq.s32.totalorder %s18, 0
    %p83 = por %p81, %p82
    %s84 = ssub.s32 %s19, %s31
    %s85 = ssub.s32 %s20, %s27
    %s86 = sor.u32 %s84, %s85
    %p87 = scmp.eq.s32.totalorder %s86, 0
    %s89 = sadd.s32 %s88, 1
    %s90 = scalar_select %p87, %s88, %s89
    %p93 = pneg %p87
    %p94 = scmp.eq.s32.totalorder %s12, 1
    %p95 = por %p93, %p94
    %p96 = scmp.ne.s32.totalorder %s88, %s91
    %p97 = scmp.eq.s32.totalorder %s12, 0
    %p98 = por %p96, %p97
    %p99 = scmp.ne.s32.totalorder %s88, %s91
    %p100 = scmp.eq.s32.totalorder %s17, 1
    %p101 = por %p99, %p100
    %p102 = scmp.ne.s32.totalorder %s91, %s92
    %p103 = scmp.eq.s32.totalorder %s17, 0
    %p104 = por %p102, %p103
    %p105 = scmp.ne.s32.totalorder %s91, %s92
    %p106 = scmp.eq.s32.totalorder %s18, 1
    %p107 = por %p105, %p106
    %p109 = scmp.ne.s32.totalorder %s92, %s108
    %p110 = scmp.eq.s32.totalorder %s18, 0
    %p111 = por %p109, %p110
    %s112 = ssub.s32 %s19, %s31
    %s113 = ssub.s32 %s20, %s27
    %s114 = sor.u32 %s112, %s113
    %p115 = scmp.eq.s32.totalorder %s114, 0
    %s117 = sadd.s32 %s116, 1
    %s118 = scalar_select %p115, %s116, %s117
    %p121 = pneg %p115
    %p122 = scmp.eq.s32.totalorder %s12, 1
    %p123 = por %p121, %p122
    %p124 = scmp.ne.s32.totalorder %s116, %s119
    %p125 = scmp.eq.s32.totalorder %s12, 0
    %p126 = por %p124, %p125
    %p127 = scmp.ne.s32.totalorder %s116, %s119
    %p128 = scmp.eq.s32.totalorder %s17, 1
    %p129 = por %p127, %p128
    %p130 = scmp.ne.s32.totalorder %s119, %s120
    %p131 = scmp.eq.s32.totalorder %s17, 0
    %p132 = por %p130, %p131
    %p133 = scmp.ne.s32.totalorder %s119, %s120
    %p134 = scmp.eq.s32.totalorder %s18, 1
    %p135 = por %p133, %p134
    %p137 = scmp.ne.s32.totalorder %s120, %s136
    %p138 = scmp.eq.s32.totalorder %s18, 0
    %p139 = por %p137, %p138
    %s140 = ssub.s32 %s19, %s31
    %s141 = ssub.s32 %s20, %s27
    %s142 = sor.u32 %s140, %s141
    %p143 = scmp.eq.s32.totalorder %s142, 0
    %s145 = sadd.s32 %s144, 1
    %s146 = scalar_select %p143, %s144, %s145
    %p149 = pneg %p143
    %p150 = scmp.eq.s32.totalorder %s12, 1
    %p151 = por %p149, %p150
    %p152 = scmp.ne.s32.totalorder %s144, %s147
    %p153 = scmp.eq.s32.totalorder %s12, 0
    %p154 = por %p152, %p153
    %p155 = scmp.ne.s32.totalorder %s144, %s147
    %p156 = scmp.eq.s32.totalorder %s17, 1
    %p157 = por %p155, %p156
    %p158 = scmp.ne.s32.totalorder %s147, %s148
    %p159 = scmp.eq.s32.totalorder %s17, 0
    %p160 = por %p158, %p159
    %p161 = scmp.ne.s32.totalorder %s147, %s148
    %p162 = scmp.eq.s32.totalorder %s18, 1
    %p163 = por %p161, %p162
    %p165 = scmp.ne.s32.totalorder %s148, %s164
    %p166 = scmp.eq.s32.totalorder %s18, 0
    %p167 = por %p165, %p166
    %s168 = ssub.s32 %s19, %s31
    %s169 = ssub.s32 %s20, %s27
    %s170 = sor.u32 %s168, %s169
    %p171 = scmp.eq.s32.totalorder %s170, 0
    %s173 = sadd.s32 %s172, 1
    %s174 = scalar_select %p171, %s172, %s173
    %p177 = pneg %p171
    %p178 = scmp.eq.s32.totalorder %s12, 1
    %p179 = por %p177, %p178
    %p180 = scmp.ne.s32.totalorder %s172, %s175
    %p181 = scmp.eq.s32.totalorder %s12, 0
    %p182 = por %p180, %p181
    %p183 = scmp.ne.s32.totalorder %s172, %s175
    %p184 = scmp.eq.s32.totalorder %s17, 1
    %p185 = por %p183, %p184
    %p186 = scmp.ne.s32.totalorder %s175, %s176
    %p187 = scmp.eq.s32.totalorder %s17, 0
    %p188 = por %p186, %p187
    %p189 = scmp.ne.s32.totalorder %s175, %s176
    %p190 = scmp.eq.s32.totalorder %s18, 1
    %p191 = por %p189, %p190
    %p193 = scmp.ne.s32.totalorder %s176, %s192
    %p194 = scmp.eq.s32.totalorder %s18, 0
    %p195 = por %p193, %p194
    %s196 = ssub.s32 %s19, %s31
    %p197 = scmp.eq.s32.totalorder %s196, 0
    %s199 = sadd.s32 %s198, 1
    %s200 = scalar_select %p197, %s198, %s199
    %p203 = pneg %p197
    %p204 = scmp.eq.s32.totalorder %s12, 1
    %p205 = por %p203, %p204
    %p206 = scmp.ne.s32.totalorder %s198, %s201
    %p207 = scmp.eq.s32.totalorder %s12, 0
    %p208 = por %p206, %p207
    %p209 = scmp.ne.s32.totalorder %s198, %s201
    %p210 = scmp.eq.s32.totalorder %s17, 1
    %p211 = por %p209, %p210
    %p212 = scmp.ne.s32.totalorder %s201, %s202
    %p213 = scmp.eq.s32.totalorder %s17, 0
    %p214 = por %p212, %p213
    %p215 = scmp.ne.s32.totalorder %s201, %s202
    %p216 = scmp.eq.s32.totalorder %s18, 1
    %p217 = por %p215, %p216
    %p219 = scmp.ne.s32.totalorder %s202, %s218
    %p220 = scmp.eq.s32.totalorder %s18, 0
    %p221 = por %p219, %p220
    %p222 = scmp.le.s32.totalorder 1, %s12
    %p223 = scmp.lt.s32.totalorder %s12, 3
    %p224 = pnand %p222, %p223
    %p225 = pneg %p224
    // Predicated region
    $region9: #{_lambda_.10} parent=5 // pred_check
      _
    $region10: #{_lambda_.10} parent=5 // pred_check_branch
      %227 = sbr.rel (%p224) target = $region12
    $region11: #{_lambda_.10} parent=5 // pred_region
      %s228 = ssub.s32 %s12, 1
    $region12: #{_lambda_.10} parent=5 // pred_fallthru
      _
    %p229 = scmp.lt.s32.totalorder %s12, 2
    // Predicated region
    $region13: #{_lambda_.10} parent=5 // pred_check
      %p230 = pneg %p229
    $region14: #{_lambda_.10} parent=5 // pred_check_branch
      %232 = sbr.rel (%p230) target = $region16
    $region15: #{_lambda_.10} parent=5 // pred_region
      // Predicated region
      $region17: #{_lambda_.10} parent=15 // pred_check
        %p233 = pneg %p44
      $region18: #{_lambda_.10} parent=15 // pred_check_branch
        %235 = sbr.rel (%p233) target = $region20
      $region19: #{_lambda_.10} parent=15 // pred_region
        %p236 = scmp.lt.s32.totalorder %s19, 1
        %s237 = scalar_select %p236, %s19, 1
        %s238 = smul.addr %s237, 4
        %s239 = scalar_lea.vmem %s0, %s238
      $region20: #{_lambda_.10} parent=15 // pred_fallthru
        _
      // Predicated region
      $region21: #{_lambda_.10} parent=15 // pred_check
        %p240 = pneg %p70
      $region22: #{_lambda_.10} parent=15 // pred_check_branch
        %242 = sbr.rel (%p240) target = $region24
      $region23: #{_lambda_.10} parent=15 // pred_region
        %p243 = scmp.lt.s32.totalorder %s19, 1
        %s244 = scalar_select %p243, %s19, 1
        %s245 = smul.addr %s244, 2
        %s246 = smul.addr %s245, 4
        %s247 = scalar_lea.vmem %s1, %s246
      $region24: #{_lambda_.10} parent=15 // pred_fallthru
        _
      // Predicated region
      $region25: #{_lambda_.10} parent=15 // pred_check
        %p248 = pneg %p98
      $region26: #{_lambda_.10} parent=15 // pred_check_branch
        %250 = sbr.rel (%p248) target = $region28
      $region27: #{_lambda_.10} parent=15 // pred_region
        %p251 = scmp.lt.s32.totalorder %s19, 1
        %s252 = scalar_select %p251, %s19, 1
        %p253 = scmp.lt.s32.totalorder %s20, 0
        %s254 = scalar_select %p253, %s20, 0
        %s255 = sadd.s32 %s254, %s252
        %s256 = smul.addr %s255, 4
        %s257 = scalar_lea.vmem %s2, %s256
      $region28: #{_lambda_.10} parent=15 // pred_fallthru
        _
      // Predicated region
      $region29: #{_lambda_.10} parent=15 // pred_check
        %p258 = pneg %p126
      $region30: #{_lambda_.10} parent=15 // pred_check_branch
        %260 = sbr.rel (%p258) target = $region32
      $region31: #{_lambda_.10} parent=15 // pred_region
        %p261 = scmp.lt.s32.totalorder %s19, 1
        %s262 = scalar_select %p261, %s19, 1
        %p263 = scmp.lt.s32.totalorder %s20, 0
        %s264 = scalar_select %p263, %s20, 0
        %s265 = sadd.s32 %s264, %s262
        %s266 = smul.addr %s265, 4
        %s267 = scalar_lea.vmem %s3, %s266
      $region32: #{_lambda_.10} parent=15 // pred_fallthru
        _
      // Predicated region
      $region33: #{_lambda_.10} parent=15 // pred_check
        %p268 = pneg %p154
      $region34: #{_lambda_.10} parent=15 // pred_check_branch
        %270 = sbr.rel (%p268) target = $region36
      $region35: #{_lambda_.10} parent=15 // pred_region
        %p271 = scmp.lt.s32.totalorder %s19, 1
        %s272 = scalar_select %p271, %s19, 1
        %p273 = scmp.lt.s32.totalorder %s20, 0
        %s274 = scalar_select %p273, %s20, 0
        %s275 = sadd.s32 %s274, %s272
        %s276 = smul.addr %s275, 4
        %s277 = scalar_lea.vmem %s4, %s276
      $region36: #{_lambda_.10} parent=15 // pred_fallthru
        _
      // Predicated region
      $region37: #{_lambda_.10} parent=15 // pred_check
        %p278 = pneg %p182
      $region38: #{_lambda_.10} parent=15 // pred_check_branch
        %280 = sbr.rel (%p278) target = $region40
      $region39: #{_lambda_.10} parent=15 // pred_region
        %p281 = scmp.lt.s32.totalorder %s19, 1
        %s282 = scalar_select %p281, %s19, 1
        %p283 = scmp.lt.s32.totalorder %s20, 0
        %s284 = scalar_select %p283, %s20, 0
        %s285 = sadd.s32 %s284, %s282
        %s286 = smul.addr %s285, 4
        %s287 = scalar_lea.vmem %s5, %s286
      $region40: #{_lambda_.10} parent=15 // pred_fallthru
        _
    $region16: #{_lambda_.10} parent=5 // pred_fallthru
      _
    %p288 = scmp.le.s32.totalorder 1, %s12
    %p289 = scmp.lt.s32.totalorder %s12, 3
    %p290 = pnand %p288, %p289
    %p291 = pneg %p290
    // Predicated region
    $region41: #{_lambda_.10} parent=5 // pred_check
      _
    $region42: #{_lambda_.10} parent=5 // pred_check_branch
      %293 = sbr.rel (%p290) target = $region44
    $region43: #{_lambda_.10} parent=5 // pred_region
      %s294 = ssub.s32 %s12, 1
      %p295 = scmp.lt.s32.totalorder %s21, 1
      %s296 = scalar_select %p295, %s21, 1
      %s297 = smul.addr %s296, 4
      %s298 = scalar_lea.vmem %s0, %s297
      %p299 = pneg %p50
      %p300 = pneg %p47
      %p301 = scmp.lt.s32.totalorder %s21, 1
      %s302 = scalar_select %p301, %s21, 1
      %s303 = smul.addr %s302, 2
      %s304 = smul.addr %s303, 4
      %s305 = scalar_lea.vmem %s1, %s304
      %p306 = pneg %p76
      %p307 = pneg %p73
      %p308 = scmp.lt.s32.totalorder %s21, 1
      %s309 = scalar_select %p308, %s21, 1
      %p310 = scmp.lt.s32.totalorder %s22, 0
      %s311 = scalar_select %p310, %s22, 0
      %s312 = sadd.s32 %s311, %s309
      %s313 = smul.addr %s312, 4
      %s314 = scalar_lea.vmem %s2, %s313
      %p315 = pneg %p104
      %p316 = pneg %p101
      %p317 = scmp.lt.s32.totalorder %s21, 1
      %s318 = scalar_select %p317, %s21, 1
      %p319 = scmp.lt.s32.totalorder %s22, 0
      %s320 = scalar_select %p319, %s22, 0
      %s321 = sadd.s32 %s320, %s318
      %s322 = smul.addr %s321, 4
      %s323 = scalar_lea.vmem %s3, %s322
      %p324 = pneg %p132
      %p325 = pneg %p129
      %p326 = scmp.lt.s32.totalorder %s21, 1
      %s327 = scalar_select %p326, %s21, 1
      %p328 = scmp.lt.s32.totalorder %s22, 0
      %s329 = scalar_select %p328, %s22, 0
      %s330 = sadd.s32 %s329, %s327
      %s331 = smul.addr %s330, 4
      %s332 = scalar_lea.vmem %s4, %s331
      %p333 = pneg %p160
      %p334 = pneg %p157
      %p335 = scmp.lt.s32.totalorder %s21, 1
      %s336 = scalar_select %p335, %s21, 1
      %p337 = scmp.lt.s32.totalorder %s22, 0
      %s338 = scalar_select %p337, %s22, 0
      %s339 = sadd.s32 %s338, %s336
      %s340 = smul.addr %s339, 4
      %s341 = scalar_lea.vmem %s5, %s340
      %p342 = pneg %p188
      %p343 = pneg %p185
      %p344 = pneg %p214
      %p345 = pneg %p211
      %p346 = scmp.lt.s32.totalorder %s21, 1
      %s347 = scalar_select %p346, %s21, 1
      %s348 = smul.addr %s347, 4
      %s349 = scalar_lea.vmem %s6, %s348
      %p350 = scmp.lt.s32.totalorder %s21, 1
      %s351 = scalar_select %p350, %s21, 1
      %s352 = smul.addr %s351, 4
      %s353 = scalar_lea.vmem %s0, %s352
      %p354 = scmp.lt.s32.totalorder %s21, 1
      %s355 = scalar_select %p354, %s21, 1
      %s356 = smul.addr %s355, 2
      %s357 = smul.addr %s356, 4
      %s358 = scalar_lea.vmem %s1, %s357
      %p359 = scmp.lt.s32.totalorder %s21, 1
      %s360 = scalar_select %p359, %s21, 1
      %p361 = scmp.lt.s32.totalorder %s22, 0
      %s362 = scalar_select %p361, %s22, 0
      %s363 = sadd.s32 %s362, %s360
      %s364 = smul.addr %s363, 4
      %s365 = scalar_lea.vmem %s2, %s364
      %p366 = scmp.lt.s32.totalorder %s21, 1
      %s367 = scalar_select %p366, %s21, 1
      %p368 = scmp.lt.s32.totalorder %s22, 0
      %s369 = scalar_select %p368, %s22, 0
      %s370 = sadd.s32 %s369, %s367
      %s371 = smul.addr %s370, 4
      %s372 = scalar_lea.vmem %s3, %s371
      %p373 = scmp.lt.s32.totalorder %s21, 1
      %s374 = scalar_select %p373, %s21, 1
      %p375 = scmp.lt.s32.totalorder %s22, 0
      %s376 = scalar_select %p375, %s22, 0
      %s377 = sadd.s32 %s376, %s374
      %s378 = smul.addr %s377, 4
      %s379 = scalar_lea.vmem %s4, %s378
      %p380 = scmp.lt.s32.totalorder %s21, 1
      %s381 = scalar_select %p380, %s21, 1
      %p382 = scmp.lt.s32.totalorder %s22, 0
      %s383 = scalar_select %p382, %s22, 0
      %s384 = sadd.s32 %s383, %s381
      %s385 = smul.addr %s384, 4
      %s386 = scalar_lea.vmem %s5, %s385
      %p387 = scmp.lt.s32.totalorder %s21, 1
      %s388 = scalar_select %p387, %s21, 1
      %s389 = smul.addr %s388, 4
      %s390 = scalar_lea.vmem %s6, %s389
      %p392 = scmp.eq.s32.totalorder %s22, 0
      // Predicated region
      $region45: #{_lambda_.10} parent=43 // pred_check
        %p393 = pneg %p392
      $region46: #{_lambda_.10} parent=43 // pred_check_branch
        %395 = sbr.rel (%p393) target = $region48
      $region47: #{_lambda_.10} parent=43 // pred_region
        %v396 = vld [vmem:[%s353] sm:$0xf]
        %v397 = vunpack.c.l.bf16 %v396
        %v398 = vld [vmem:[%s358] sm:$0xff]
        %v399 = vunpack.c.l.bf16 %v398
        %v400 = vunpack.c.h.bf16 %v398
        %402 = vset.pattern.permute.xlu0 0
        %403 = vperm.xlu0 %402, %v397
        %v404 = vpop.permute.xlu0 %403
        %v406 = vmul.f32 %v404, %v399
        %407 = vset.pattern.permute.xlu0 1
        %408 = vperm.xlu0 %407, %v397
        %v409 = vpop.permute.xlu0 %408
        %v411 = vmul.f32 %v409, %v399
        %413 = vrot.lane.b32.xlu0 %v411, 112
        %v414 = vpop.permute.xlu0 %413
        %v416 = vadd.f32 %v406, %v414
        %417 = vset.pattern.permute.xlu0 2
        %418 = vperm.xlu0 %417, %v397
        %v419 = vpop.permute.xlu0 %418
        %v421 = vmul.f32 %v419, %v399
        %423 = vrot.lane.b32.xlu0 %v421, 96
        %v424 = vpop.permute.xlu0 %423
        %v426 = vadd.f32 %v416, %v424
        %427 = vset.pattern.permute.xlu0 3
        %428 = vperm.xlu0 %427, %v397
        %v429 = vpop.permute.xlu0 %428
        %v431 = vmul.f32 %v429, %v399
        %433 = vrot.lane.b32.xlu0 %v431, 80
        %v434 = vpop.permute.xlu0 %433
        %v436 = vadd.f32 %v426, %v434
        %437 = vset.pattern.permute.xlu0 4
        %438 = vperm.xlu0 %437, %v397
        %v439 = vpop.permute.xlu0 %438
        %v441 = vmul.f32 %v439, %v399
        %443 = vrot.lane.b32.xlu0 %v441, 64
        %v444 = vpop.permute.xlu0 %443
        %v446 = vadd.f32 %v436, %v444
        %447 = vset.pattern.permute.xlu0 5
        %448 = vperm.xlu0 %447, %v397
        %v449 = vpop.permute.xlu0 %448
        %v451 = vmul.f32 %v449, %v399
        %453 = vrot.lane.b32.xlu0 %v451, 48
        %v454 = vpop.permute.xlu0 %453
        %v456 = vadd.f32 %v446, %v454
        %457 = vset.pattern.permute.xlu0 6
        %458 = vperm.xlu0 %457, %v397
        %v459 = vpop.permute.xlu0 %458
        %v461 = vmul.f32 %v459, %v399
        %463 = vrot.lane.b32.xlu0 %v461, 32
        %v464 = vpop.permute.xlu0 %463
        %v466 = vadd.f32 %v456, %v464
        %467 = vset.pattern.permute.xlu0 7
        %468 = vperm.xlu0 %467, %v397
        %v469 = vpop.permute.xlu0 %468
        %v471 = vmul.f32 %v469, %v399
        %473 = vrot.lane.b32.xlu0 %v471, 16
        %v474 = vpop.permute.xlu0 %473
        %v476 = vadd.f32 %v466, %v474
        %477 = vset.pattern.permute.xlu0 8
        %478 = vperm.xlu0 %477, %v397
        %v479 = vpop.permute.xlu0 %478
        %v481 = vmul.f32 %v479, %v400
        %v482 = vadd.f32 %v476, %v481
        %483 = vset.pattern.permute.xlu0 9
        %484 = vperm.xlu0 %483, %v397
        %v485 = vpop.permute.xlu0 %484
        %v487 = vmul.f32 %v485, %v400
        %489 = vrot.lane.b32.xlu0 %v487, 112
        %v490 = vpop.permute.xlu0 %489
        %v492 = vadd.f32 %v482, %v490
        %493 = vset.pattern.permute.xlu0 10
        %494 = vperm.xlu0 %493, %v397
        %v495 = vpop.permute.xlu0 %494
        %v497 = vmul.f32 %v495, %v400
        %499 = vrot.lane.b32.xlu0 %v497, 96
        %v500 = vpop.permute.xlu0 %499
        %v502 = vadd.f32 %v492, %v500
        %503 = vset.pattern.permute.xlu0 11
        %504 = vperm.xlu0 %503, %v397
        %v505 = vpop.permute.xlu0 %504
        %v507 = vmul.f32 %v505, %v400
        %509 = vrot.lane.b32.xlu0 %v507, 80
        %v510 = vpop.permute.xlu0 %509
        %v512 = vadd.f32 %v502, %v510
        %v513 = vmul.f32 %v512, 0.020833334
        %v514 = vpack.c.bf16 %v513, %v513
        %vm515 = vcmask 125952
        %516 = vst.msk [vmem:[#allocation2] sm:$0xf] %vm515, %v514
        %517 = vset.pattern.permute.xlu0 12
        %518 = vperm.xlu0 %517, %v397
        %v519 = vpop.permute.xlu0 %518
        %v521 = vmul.f32 %v519, %v399
        %522 = vset.pattern.permute.xlu0 13
        %523 = vperm.xlu0 %522, %v397
        %v524 = vpop.permute.xlu0 %523
        %v526 = vmul.f32 %v524, %v399
        %528 = vrot.lane.b32.xlu0 %v526, 112
        %v529 = vpop.permute.xlu0 %528
        %v531 = vadd.f32 %v521, %v529
        %532 = vset.pattern.permute.xlu0 14
        %533 = vperm.xlu0 %532, %v397
        %v534 = vpop.permute.xlu0 %533
        %v536 = vmul.f32 %v534, %v399
        %538 = vrot.lane.b32.xlu0 %v536, 96
        %v539 = vpop.permute.xlu0 %538
        %v541 = vadd.f32 %v531, %v539
        %542 = vset.pattern.permute.xlu0 15
        %543 = vperm.xlu0 %542, %v397
        %v544 = vpop.permute.xlu0 %543
        %v546 = vmul.f32 %v544, %v399
        %548 = vrot.lane.b32.xlu0 %v546, 80
        %v549 = vpop.permute.xlu0 %548
        %v551 = vadd.f32 %v541, %v549
        %552 = vset.pattern.permute.xlu0 16
        %553 = vperm.xlu0 %552, %v397
        %v554 = vpop.permute.xlu0 %553
        %v556 = vmul.f32 %v554, %v399
        %558 = vrot.lane.b32.xlu0 %v556, 64
        %v559 = vpop.permute.xlu0 %558
        %v561 = vadd.f32 %v551, %v559
        %562 = vset.pattern.permute.xlu0 17
        %563 = vperm.xlu0 %562, %v397
        %v564 = vpop.permute.xlu0 %563
        %v566 = vmul.f32 %v564, %v399
        %568 = vrot.lane.b32.xlu0 %v566, 48
        %v569 = vpop.permute.xlu0 %568
        %v571 = vadd.f32 %v561, %v569
        %572 = vset.pattern.permute.xlu0 18
        %573 = vperm.xlu0 %572, %v397
        %v574 = vpop.permute.xlu0 %573
        %v576 = vmul.f32 %v574, %v399
        %578 = vrot.lane.b32.xlu0 %v576, 32
        %v579 = vpop.permute.xlu0 %578
        %v581 = vadd.f32 %v571, %v579
        %582 = vset.pattern.permute.xlu0 19
        %583 = vperm.xlu0 %582, %v397
        %v584 = vpop.permute.xlu0 %583
        %v586 = vmul.f32 %v584, %v399
        %588 = vrot.lane.b32.xlu0 %v586, 16
        %v589 = vpop.permute.xlu0 %588
        %v591 = vadd.f32 %v581, %v589
        %592 = vset.pattern.permute.xlu0 20
        %593 = vperm.xlu0 %592, %v397
        %v594 = vpop.permute.xlu0 %593
        %v596 = vmul.f32 %v594, %v400
        %v597 = vadd.f32 %v591, %v596
        %598 = vset.pattern.permute.xlu0 21
        %599 = vperm.xlu0 %598, %v397
        %v600 = vpop.permute.xlu0 %599
        %v602 = vmul.f32 %v600, %v400
        %604 = vrot.lane.b32.xlu0 %v602, 112
        %v605 = vpop.permute.xlu0 %604
        %v607 = vadd.f32 %v597, %v605
        %608 = vset.pattern.permute.xlu0 22
        %609 = vperm.xlu0 %608, %v397
        %v610 = vpop.permute.xlu0 %609
        %v612 = vmul.f32 %v610, %v400
        %614 = vrot.lane.b32.xlu0 %v612, 96
        %v615 = vpop.permute.xlu0 %614
        %v617 = vadd.f32 %v607, %v615
        %618 = vset.pattern.permute.xlu0 23
        %619 = vperm.xlu0 %618, %v397
        %v620 = vpop.permute.xlu0 %619
        %v622 = vmul.f32 %v620, %v400
        %624 = vrot.lane.b32.xlu0 %v622, 80
        %v625 = vpop.permute.xlu0 %624
        %v627 = vadd.f32 %v617, %v625
        %v628 = vmul.f32 %v627, 0.020833334
        %v629 = vpack.c.bf16 %v628, %v628
        %s630 = scalar_lea.vmem [#allocation2], 4
        %631 = vst.msk [vmem:[%s630] sm:$0xf] %vm515, %v629
        %632 = vset.pattern.permute.xlu0 24
        %633 = vperm.xlu0 %632, %v397
        %v634 = vpop.permute.xlu0 %633
        %v636 = vmul.f32 %v634, %v399
        %637 = vset.pattern.permute.xlu0 25
        %638 = vperm.xlu0 %637, %v397
        %v639 = vpop.permute.xlu0 %638
        %v641 = vmul.f32 %v639, %v399
        %643 = vrot.lane.b32.xlu0 %v641, 112
        %v644 = vpop.permute.xlu0 %643
        %v646 = vadd.f32 %v636, %v644
        %647 = vset.pattern.permute.xlu0 26
        %648 = vperm.xlu0 %647, %v397
        %v649 = vpop.permute.xlu0 %648
        %v651 = vmul.f32 %v649, %v399
        %653 = vrot.lane.b32.xlu0 %v651, 96
        %v654 = vpop.permute.xlu0 %653
        %v656 = vadd.f32 %v646, %v654
        %657 = vset.pattern.permute.xlu0 27
        %658 = vperm.xlu0 %657, %v397
        %v659 = vpop.permute.xlu0 %658
        %v661 = vmul.f32 %v659, %v399
        %663 = vrot.lane.b32.xlu0 %v661, 80
        %v664 = vpop.permute.xlu0 %663
        %v666 = vadd.f32 %v656, %v664
        %667 = vset.pattern.permute.xlu0 28
        %668 = vperm.xlu0 %667, %v397
        %v669 = vpop.permute.xlu0 %668
        %v671 = vmul.f32 %v669, %v399
        %673 = vrot.lane.b32.xlu0 %v671, 64
        %v674 = vpop.permute.xlu0 %673
        %v676 = vadd.f32 %v666, %v674
        %677 = vset.pattern.permute.xlu0 29
        %678 = vperm.xlu0 %677, %v397
        %v679 = vpop.permute.xlu0 %678
        %v681 = vmul.f32 %v679, %v399
        %683 = vrot.lane.b32.xlu0 %v681, 48
        %v684 = vpop.permute.xlu0 %683
        %v686 = vadd.f32 %v676, %v684
        %687 = vset.pattern.permute.xlu0 30
        %688 = vperm.xlu0 %687, %v397
        %v689 = vpop.permute.xlu0 %688
        %v691 = vmul.f32 %v689, %v399
        %693 = vrot.lane.b32.xlu0 %v691, 32
        %v694 = vpop.permute.xlu0 %693
        %v696 = vadd.f32 %v686, %v694
        %697 = vset.pattern.permute.xlu0 31
        %698 = vperm.xlu0 %697, %v397
        %v699 = vpop.permute.xlu0 %698
        %v701 = vmul.f32 %v699, %v399
        %703 = vrot.lane.b32.xlu0 %v701, 16
        %v704 = vpop.permute.xlu0 %703
        %v706 = vadd.f32 %v696, %v704
        %707 = vset.pattern.permute.xlu0 32
        %708 = vperm.xlu0 %707, %v397
        %v709 = vpop.permute.xlu0 %708
        %v711 = vmul.f32 %v709, %v400
        %v712 = vadd.f32 %v706, %v711
        %713 = vset.pattern.permute.xlu0 33
        %714 = vperm.xlu0 %713, %v397
        %v715 = vpop.permute.xlu0 %714
        %v717 = vmul.f32 %v715, %v400
        %719 = vrot.lane.b32.xlu0 %v717, 112
        %v720 = vpop.permute.xlu0 %719
        %v722 = vadd.f32 %v712, %v720
        %723 = vset.pattern.permute.xlu0 34
        %724 = vperm.xlu0 %723, %v397
        %v725 = vpop.permute.xlu0 %724
        %v727 = vmul.f32 %v725, %v400
        %729 = vrot.lane.b32.xlu0 %v727, 96
        %v730 = vpop.permute.xlu0 %729
        %v732 = vadd.f32 %v722, %v730
        %733 = vset.pattern.permute.xlu0 35
        %734 = vperm.xlu0 %733, %v397
        %v735 = vpop.permute.xlu0 %734
        %v737 = vmul.f32 %v735, %v400
        %739 = vrot.lane.b32.xlu0 %v737, 80
        %v740 = vpop.permute.xlu0 %739
        %v742 = vadd.f32 %v732, %v740
        %v743 = vmul.f32 %v742, 0.020833334
        %v744 = vpack.c.bf16 %v743, %v743
        %s745 = scalar_lea.vmem [#allocation2], 8
        %746 = vst.msk [vmem:[%s745] sm:$0xf] %vm515, %v744
        %747 = vset.pattern.permute.xlu0 36
        %748 = vperm.xlu0 %747, %v397
        %v749 = vpop.permute.xlu0 %748
        %v751 = vmul.f32 %v749, %v399
        %752 = vset.pattern.permute.xlu0 37
        %753 = vperm.xlu0 %752, %v397
        %v754 = vpop.permute.xlu0 %753
        %v756 = vmul.f32 %v754, %v399
        %758 = vrot.lane.b32.xlu0 %v756, 112
        %v759 = vpop.permute.xlu0 %758
        %v761 = vadd.f32 %v751, %v759
        %762 = vset.pattern.permute.xlu0 38
        %763 = vperm.xlu0 %762, %v397
        %v764 = vpop.permute.xlu0 %763
        %v766 = vmul.f32 %v764, %v399
        %768 = vrot.lane.b32.xlu0 %v766, 96
        %v769 = vpop.permute.xlu0 %768
        %v771 = vadd.f32 %v761, %v769
        %772 = vset.pattern.permute.xlu0 39
        %773 = vperm.xlu0 %772, %v397
        %v774 = vpop.permute.xlu0 %773
        %v776 = vmul.f32 %v774, %v399
        %778 = vrot.lane.b32.xlu0 %v776, 80
        %v779 = vpop.permute.xlu0 %778
        %v781 = vadd.f32 %v771, %v779
        %782 = vset.pattern.permute.xlu0 40
        %783 = vperm.xlu0 %782, %v397
        %v784 = vpop.permute.xlu0 %783
        %v786 = vmul.f32 %v784, %v399
        %788 = vrot.lane.b32.xlu0 %v786, 64
        %v789 = vpop.permute.xlu0 %788
        %v791 = vadd.f32 %v781, %v789
        %792 = vset.pattern.permute.xlu0 41
        %793 = vperm.xlu0 %792, %v397
        %v794 = vpop.permute.xlu0 %793
        %v796 = vmul.f32 %v794, %v399
        %798 = vrot.lane.b32.xlu0 %v796, 48
        %v799 = vpop.permute.xlu0 %798
        %v801 = vadd.f32 %v791, %v799
        %802 = vset.pattern.permute.xlu0 42
        %803 = vperm.xlu0 %802, %v397
        %v804 = vpop.permute.xlu0 %803
        %v806 = vmul.f32 %v804, %v399
        %808 = vrot.lane.b32.xlu0 %v806, 32
        %v809 = vpop.permute.xlu0 %808
        %v811 = vadd.f32 %v801, %v809
        %812 = vset.pattern.permute.xlu0 43
        %813 = vperm.xlu0 %812, %v397
        %v814 = vpop.permute.xlu0 %813
        %v816 = vmul.f32 %v814, %v399
        %818 = vrot.lane.b32.xlu0 %v816, 16
        %v819 = vpop.permute.xlu0 %818
        %v821 = vadd.f32 %v811, %v819
        %822 = vset.pattern.permute.xlu0 44
        %823 = vperm.xlu0 %822, %v397
        %v824 = vpop.permute.xlu0 %823
        %v826 = vmul.f32 %v824, %v400
        %v827 = vadd.f32 %v821, %v826
        %828 = vset.pattern.permute.xlu0 45
        %829 = vperm.xlu0 %828, %v397
        %v830 = vpop.permute.xlu0 %829
        %v832 = vmul.f32 %v830, %v400
        %834 = vrot.lane.b32.xlu0 %v832, 112
        %v835 = vpop.permute.xlu0 %834
        %v837 = vadd.f32 %v827, %v835
        %838 = vset.pattern.permute.xlu0 46
        %839 = vperm.xlu0 %838, %v397
        %v840 = vpop.permute.xlu0 %839
        %v842 = vmul.f32 %v840, %v400
        %844 = vrot.lane.b32.xlu0 %v842, 96
        %v845 = vpop.permute.xlu0 %844
        %v847 = vadd.f32 %v837, %v845
        %848 = vset.pattern.permute.xlu0 47
        %849 = vperm.xlu0 %848, %v397
        %v850 = vpop.permute.xlu0 %849
        %v852 = vmul.f32 %v850, %v400
        %854 = vrot.lane.b32.xlu0 %v852, 80
        %v855 = vpop.permute.xlu0 %854
        %v857 = vadd.f32 %v847, %v855
        %v858 = vmul.f32 %v857, 0.020833334
        %v859 = vpack.c.bf16 %v858, %v858
        %s860 = scalar_lea.vmem [#allocation2], 12
        %861 = vst.msk [vmem:[%s860] sm:$0xf] %vm515, %v859
        %vm862 = vcmask 7168
        %863 = vst.msk [vmem:[#allocation3] sm:$0xff] %vm862, -1e+30
        %864 = vst.msk [vmem:[#allocation3 + $0x8] sm:$0xff] %vm862, -1e+30
        %865 = vst.msk [vmem:[#allocation3 + $0x10] sm:$0xff] %vm862, -1e+30
        %866 = vst.msk [vmem:[#allocation3 + $0x18] sm:$0xff] %vm862, -1e+30
        %867 = vst.msk [vmem:[#allocation4] sm:$0xff] %vm862, 0.0
        %868 = vst.msk [vmem:[#allocation4 + $0x8] sm:$0xff] %vm862, 0.0
        %869 = vst.msk [vmem:[#allocation4 + $0x10] sm:$0xff] %vm862, 0.0
        %870 = vst.msk [vmem:[#allocation4 + $0x18] sm:$0xff] %vm862, 0.0
        %vm871 = vcmask 130048
        %872 = vst.msk [vmem:[#allocation5] sm:$0xff] %vm871, 0.0
        %873 = vst.msk [vmem:[#allocation5 + $0x8] sm:$0xff] %vm871, 0.0
        %874 = vst.msk [vmem:[#allocation5 + $0x10] sm:$0xff] %vm871, 0.0
        %875 = vst.msk [vmem:[#allocation5 + $0x18] sm:$0xff] %vm871, 0.0
      $region48: #{_lambda_.10} parent=43 // pred_fallthru
        _
      %v876 = vld [vmem:[%s365] sm:$0xf]
      %v877 = vunpack.c.l.bf16 %v876
      %v878 = vld [vmem:[%s372] sm:$0xf]
      %v879 = vunpack.c.l.bf16 %v878
      %v880 = vld [vmem:[%s379] sm:$0xf]
      %v881 = vunpack.c.l.bf16 %v880
      %v882 = vld [vmem:[%s386] sm:$0xf]
      %v883 = vunpack.c.l.bf16 %v882
      %v884 = vlaneseq
      %v885 = vshrl.u32 %v884, 7
      %v886 = vlaneseq
      %v887 = vand.u32 %v886, 127
      %s888 = smul.u32 %s22, 8
      %v889 = vstv %s888
      %v890 = vadd.s32 %v887, %v889
      %vm891 = vcmp.le.s32.totalorder %v890, %v885
      %893 = vset.pattern.permute.xlu0 0
      %894 = vperm.xlu0 %893, %v877
      %v895 = vpop.permute.xlu0 %894
      %v897 = vmul.f32 %v895, %v879
      %898 = vset.pattern.permute.xlu0 1
      %899 = vperm.xlu0 %898, %v877
      %v900 = vpop.permute.xlu0 %899
      %v902 = vmul.f32 %v900, %v879
      %904 = vrot.lane.b32.xlu0 %v902, 112
      %v905 = vpop.permute.xlu0 %904
      %v907 = vadd.f32 %v897, %v905
      %v908 = vmul.f32 %v907, 0.5
      %v909 = vpack.c.bf16 %v908, %v908
      %911 = vset.pattern.permute.xlu0 0
      %912 = vperm.xlu0 %911, %v881
      %v913 = vpop.permute.xlu0 %912
      %v915 = vmul.f32 %v913, %v883
      %916 = vset.pattern.permute.xlu0 1
      %917 = vperm.xlu0 %916, %v881
      %v918 = vpop.permute.xlu0 %917
      %v920 = vmul.f32 %v918, %v883
      %922 = vrot.lane.b32.xlu0 %v920, 112
      %v923 = vpop.permute.xlu0 %922
      %v925 = vadd.f32 %v915, %v923
      %v926 = vmul.f32 %v925, 0.5
      %v927 = vpack.c.bf16 %v926, %v926
      %v928 = vld [vmem:[#allocation2] sm:$0xf]
      %vm929 = vcmask 130048
      %v931 = vsel %vm929, %v928, 0
      %v934 = vsel %vm929, %v909, 0
      %936 = vmatpush.bf16.xpose.msra.mxu0 0
      %937 = vmatpush.bf16.xpose.msra.mxu0 0
      %938 = vmatpush.bf16.xpose.msra.mxu0 0
      %939 = vmatpush.bf16.xpose.msra.mxu0 0
      %940 = vmatpush.bf16.xpose.msra.mxu0 0
      %941 = vmatpush.bf16.xpose.msra.mxu0 0
      %942 = vmatpush.bf16.xpose.msra.mxu0 0
      %943 = vmatpush.bf16.xpose.msra.mxu0 %v934
      %944 = vmatmul.bf16.gmra.mxu0 %v931
      %v945 = vpop.f32.mrf.mxu0
      %v946 = vadd.f32 0.0, %v945
      %v947 = vpop.f32.mrf.mxu0
      %948 = vdwg.mxu0
      %v949 = vsel %vm891, %v946, -1e+30
      %v950 = vld [vmem:[#allocation3] sm:$0xff]
      %vm951 = vcmask 64512
      %v952 = vsel %vm951, %v949, -inf
      %953 = vmax.xlane.f32.xlu0 %v952
      %v954 = vpop.xlane.xlu0 %953
      %v955 = vmax.f32 %v950, %v954
      %v956 = vsub.f32 %v950, %v955
      %v957 = vmul.f32 %v956, 1.442695
      %v958 = vpow.pop %v957
      %960 = vset.pattern.permute.xlu0 0
      %961 = vperm.xlu0 %960, %v955
      %v962 = vpop.permute.xlu0 %961
      %v964 = vsub.f32 %v949, %v962
      %v965 = vmul.f32 %v964, 1.442695
      %v966 = vpow.pop %v965
      %v967 = vld [vmem:[#allocation4] sm:$0xff]
      %v968 = vmul.f32 %v958, %v967
      %v969 = vsel %vm951, %v966, 0.0
      %970 = vadd.xlane.f32.xlu0 %v969
      %v971 = vpop.xlane.xlu0 %970
      %v972 = vadd.f32 %v968, %v971
      %vm973 = vcmask 7168
      %974 = vst.msk [vmem:[#allocation4] sm:$0xff] %vm973, %v972
      %v975 = vld [vmem:[#allocation5] sm:$0xff]
      %977 = vset.pattern.permute.xlu0 0
      %978 = vperm.xlu0 %977, %v958
      %v979 = vpop.permute.xlu0 %978
      %v981 = vmul.f32 %v979, %v975
      %v982 = vpack.c.bf16 %v966, %v966
      %v984 = vsel %vm951, %v982, 0
      %vm986 = vcmask 1043456
      %v988 = vsel %vm986, %v927, 0
      %990 = vmatpush.bf16.msra.mxu0 0
      %991 = vmatpush.bf16.msra.mxu0 0
      %992 = vmatpush.bf16.msra.mxu0 0
      %993 = vmatpush.bf16.msra.mxu0 0
      %994 = vmatpush.bf16.msra.mxu0 0
      %995 = vmatpush.bf16.msra.mxu0 0
      %996 = vmatpush.bf16.msra.mxu0 0
      %997 = vmatpush.bf16.msra.mxu0 %v988
      %998 = vmatmul.bf16.gmra.mxu0 %v984
      %v999 = vpop.f32.mrf.mxu0
      %v1000 = vadd.f32 0.0, %v999
      %v1001 = vpop.f32.mrf.mxu0
      %1002 = vdwg.mxu0
      %v1003 = vadd.f32 %v981, %v1000
      %1004 = vst.msk [vmem:[#allocation5] sm:$0xff] %vm929, %v1003
      %1005 = vst.msk [vmem:[#allocation3] sm:$0xff] %vm973, %v955
      %1006 = vset.pattern.permute.xlu0 2
      %1007 = vperm.xlu0 %1006, %v877
      %v1008 = vpop.permute.xlu0 %1007
      %v1010 = vmul.f32 %v1008, %v879
      %1011 = vset.pattern.permute.xlu0 3
      %1012 = vperm.xlu0 %1011, %v877
      %v1013 = vpop.permute.xlu0 %1012
      %v1015 = vmul.f32 %v1013, %v879
      %1017 = vrot.lane.b32.xlu0 %v1015, 112
      %v1018 = vpop.permute.xlu0 %1017
      %v1020 = vadd.f32 %v1010, %v1018
      %v1021 = vmul.f32 %v1020, 0.5
      %v1022 = vpack.c.bf16 %v1021, %v1021
      %1023 = vset.pattern.permute.xlu0 2
      %1024 = vperm.xlu0 %1023, %v881
      %v1025 = vpop.permute.xlu0 %1024
      %v1027 = vmul.f32 %v1025, %v883
      %1028 = vset.pattern.permute.xlu0 3
      %1029 = vperm.xlu0 %1028, %v881
      %v1030 = vpop.permute.xlu0 %1029
      %v1032 = vmul.f32 %v1030, %v883
      %1034 = vrot.lane.b32.xlu0 %v1032, 112
      %v1035 = vpop.permute.xlu0 %1034
      %v1037 = vadd.f32 %v1027, %v1035
      %v1038 = vmul.f32 %v1037, 0.5
      %v1039 = vpack.c.bf16 %v1038, %v1038
      %s1040 = scalar_lea.vmem [#allocation2], 4
      %v1041 = vld [vmem:[%s1040] sm:$0xf]
      %v1043 = vsel %vm929, %v1041, 0
      %v1046 = vsel %vm929, %v1022, 0
      %1048 = vmatpush.bf16.xpose.msra.mxu0 0
      %1049 = vmatpush.bf16.xpose.msra.mxu0 0
      %1050 = vmatpush.bf16.xpose.msra.mxu0 0
      %1051 = vmatpush.bf16.xpose.msra.mxu0 0
      %1052 = vmatpush.bf16.xpose.msra.mxu0 0
      %1053 = vmatpush.bf16.xpose.msra.mxu0 0
      %1054 = vmatpush.bf16.xpose.msra.mxu0 0
      %1055 = vmatpush.bf16.xpose.msra.mxu0 %v1046
      %1056 = vmatmul.bf16.gmra.mxu0 %v1043
      %v1057 = vpop.f32.mrf.mxu0
      %v1058 = vadd.f32 0.0, %v1057
      %v1059 = vpop.f32.mrf.mxu0
      %1060 = vdwg.mxu0
      %v1061 = vsel %vm891, %v1058, -1e+30
      %s1062 = scalar_lea.vmem [#allocation3], 8
      %v1063 = vld [vmem:[%s1062] sm:$0xff]
      %v1064 = vsel %vm951, %v1061, -inf
      %1065 = vmax.xlane.f32.xlu0 %v1064
      %v1066 = vpop.xlane.xlu0 %1065
      %v1067 = vmax.f32 %v1063, %v1066
      %v1068 = vsub.f32 %v1063, %v1067
      %v1069 = vmul.f32 %v1068, 1.442695
      %v1070 = vpow.pop %v1069
      %1072 = vset.pattern.permute.xlu0 0
      %1073 = vperm.xlu0 %1072, %v1067
      %v1074 = vpop.permute.xlu0 %1073
      %v1076 = vsub.f32 %v1061, %v1074
      %v1077 = vmul.f32 %v1076, 1.442695
      %v1078 = vpow.pop %v1077
      %s1079 = scalar_lea.vmem [#allocation4], 8
      %v1080 = vld [vmem:[%s1079] sm:$0xff]
      %v1081 = vmul.f32 %v1070, %v1080
      %v1082 = vsel %vm951, %v1078, 0.0
      %1083 = vadd.xlane.f32.xlu0 %v1082
      %v1084 = vpop.xlane.xlu0 %1083
      %v1085 = vadd.f32 %v1081, %v1084
      %1086 = vst.msk [vmem:[%s1079] sm:$0xff] %vm973, %v1085
      %s1087 = scalar_lea.vmem [#allocation5], 8
      %v1088 = vld [vmem:[%s1087] sm:$0xff]
      %1090 = vset.pattern.permute.xlu0 0
      %1091 = vperm.xlu0 %1090, %v1070
      %v1092 = vpop.permute.xlu0 %1091
      %v1094 = vmul.f32 %v1092, %v1088
      %v1095 = vpack.c.bf16 %v1078, %v1078
      %v1097 = vsel %vm951, %v1095, 0
      %v1100 = vsel %vm986, %v1039, 0
      %1102 = vmatpush.bf16.msra.mxu0 0
      %1103 = vmatpush.bf16.msra.mxu0 0
      %1104 = vmatpush.bf16.msra.mxu0 0
      %1105 = vmatpush.bf16.msra.mxu0 0
      %1106 = vmatpush.bf16.msra.mxu0 0
      %1107 = vmatpush.bf16.msra.mxu0 0
      %1108 = vmatpush.bf16.msra.mxu0 0
      %1109 = vmatpush.bf16.msra.mxu0 %v1100
      %1110 = vmatmul.bf16.gmra.mxu0 %v1097
      %v1111 = vpop.f32.mrf.mxu0
      %v1112 = vadd.f32 0.0, %v1111
      %v1113 = vpop.f32.mrf.mxu0
      %1114 = vdwg.mxu0
      %v1115 = vadd.f32 %v1094, %v1112
      %1116 = vst.msk [vmem:[%s1087] sm:$0xff] %vm929, %v1115
      %1117 = vst.msk [vmem:[%s1062] sm:$0xff] %vm973, %v1067
      %1118 = vset.pattern.permute.xlu0 4
      %1119 = vperm.xlu0 %1118, %v877
      %v1120 = vpop.permute.xlu0 %1119
      %v1122 = vmul.f32 %v1120, %v879
      %1123 = vset.pattern.permute.xlu0 5
      %1124 = vperm.xlu0 %1123, %v877
      %v1125 = vpop.permute.xlu0 %1124
      %v1127 = vmul.f32 %v1125, %v879
      %1129 = vrot.lane.b32.xlu0 %v1127, 112
      %v1130 = vpop.permute.xlu0 %1129
      %v1132 = vadd.f32 %v1122, %v1130
      %v1133 = vmul.f32 %v1132, 0.5
      %v1134 = vpack.c.bf16 %v1133, %v1133
      %1135 = vset.pattern.permute.xlu0 4
      %1136 = vperm.xlu0 %1135, %v881
      %v1137 = vpop.permute.xlu0 %1136
      %v1139 = vmul.f32 %v1137, %v883
      %1140 = vset.pattern.permute.xlu0 5
      %1141 = vperm.xlu0 %1140, %v881
      %v1142 = vpop.permute.xlu0 %1141
      %v1144 = vmul.f32 %v1142, %v883
      %1146 = vrot.lane.b32.xlu0 %v1144, 112
      %v1147 = vpop.permute.xlu0 %1146
      %v1149 = vadd.f32 %v1139, %v1147
      %v1150 = vmul.f32 %v1149, 0.5
      %v1151 = vpack.c.bf16 %v1150, %v1150
      %s1152 = scalar_lea.vmem [#allocation2], 8
      %v1153 = vld [vmem:[%s1152] sm:$0xf]
      %v1155 = vsel %vm929, %v1153, 0
      %v1158 = vsel %vm929, %v1134, 0
      %1160 = vmatpush.bf16.xpose.msra.mxu0 0
      %1161 = vmatpush.bf16.xpose.msra.mxu0 0
      %1162 = vmatpush.bf16.xpose.msra.mxu0 0
      %1163 = vmatpush.bf16.xpose.msra.mxu0 0
      %1164 = vmatpush.bf16.xpose.msra.mxu0 0
      %1165 = vmatpush.bf16.xpose.msra.mxu0 0
      %1166 = vmatpush.bf16.xpose.msra.mxu0 0
      %1167 = vmatpush.bf16.xpose.msra.mxu0 %v1158
      %1168 = vmatmul.bf16.gmra.mxu0 %v1155
      %v1169 = vpop.f32.mrf.mxu0
      %v1170 = vadd.f32 0.0, %v1169
      %v1171 = vpop.f32.mrf.mxu0
      %1172 = vdwg.mxu0
      %v1173 = vsel %vm891, %v1170, -1e+30
      %s1174 = scalar_lea.vmem [#allocation3], 16
      %v1175 = vld [vmem:[%s1174] sm:$0xff]
      %v1176 = vsel %vm951, %v1173, -inf
      %1177 = vmax.xlane.f32.xlu0 %v1176
      %v1178 = vpop.xlane.xlu0 %1177
      %v1179 = vmax.f32 %v1175, %v1178
      %v1180 = vsub.f32 %v1175, %v1179
      %v1181 = vmul.f32 %v1180, 1.442695
      %v1182 = vpow.pop %v1181
      %1184 = vset.pattern.permute.xlu0 0
      %1185 = vperm.xlu0 %1184, %v1179
      %v1186 = vpop.permute.xlu0 %1185
      %v1188 = vsub.f32 %v1173, %v1186
      %v1189 = vmul.f32 %v1188, 1.442695
      %v1190 = vpow.pop %v1189
      %s1191 = scalar_lea.vmem [#allocation4], 16
      %v1192 = vld [vmem:[%s1191] sm:$0xff]
      %v1193 = vmul.f32 %v1182, %v1192
      %v1194 = vsel %vm951, %v1190, 0.0
      %1195 = vadd.xlane.f32.xlu0 %v1194
      %v1196 = vpop.xlane.xlu0 %1195
      %v1197 = vadd.f32 %v1193, %v1196
      %1198 = vst.msk [vmem:[%s1191] sm:$0xff] %vm973, %v1197
      %s1199 = scalar_lea.vmem [#allocation5], 16
      %v1200 = vld [vmem:[%s1199] sm:$0xff]
      %1202 = vset.pattern.permute.xlu0 0
      %1203 = vperm.xlu0 %1202, %v1182
      %v1204 = vpop.permute.xlu0 %1203
      %v1206 = vmul.f32 %v1204, %v1200
      %v1207 = vpack.c.bf16 %v1190, %v1190
      %v1209 = vsel %vm951, %v1207, 0
      %v1212 = vsel %vm986, %v1151, 0
      %1214 = vmatpush.bf16.msra.mxu0 0
      %1215 = vmatpush.bf16.msra.mxu0 0
      %1216 = vmatpush.bf16.msra.mxu0 0
      %1217 = vmatpush.bf16.msra.mxu0 0
      %1218 = vmatpush.bf16.msra.mxu0 0
      %1219 = vmatpush.bf16.msra.mxu0 0
      %1220 = vmatpush.bf16.msra.mxu0 0
      %1221 = vmatpush.bf16.msra.mxu0 %v1212
      %1222 = vmatmul.bf16.gmra.mxu0 %v1209
      %v1223 = vpop.f32.mrf.mxu0
      %v1224 = vadd.f32 0.0, %v1223
      %v1225 = vpop.f32.mrf.mxu0
      %1226 = vdwg.mxu0
      %v1227 = vadd.f32 %v1206, %v1224
      %1228 = vst.msk [vmem:[%s1199] sm:$0xff] %vm929, %v1227
      %1229 = vst.msk [vmem:[%s1174] sm:$0xff] %vm973, %v1179
      %1230 = vset.pattern.permute.xlu0 6
      %1231 = vperm.xlu0 %1230, %v877
      %v1232 = vpop.permute.xlu0 %1231
      %v1234 = vmul.f32 %v1232, %v879
      %1235 = vset.pattern.permute.xlu0 7
      %1236 = vperm.xlu0 %1235, %v877
      %v1237 = vpop.permute.xlu0 %1236
      %v1239 = vmul.f32 %v1237, %v879
      %1241 = vrot.lane.b32.xlu0 %v1239, 112
      %v1242 = vpop.permute.xlu0 %1241
      %v1244 = vadd.f32 %v1234, %v1242
      %v1245 = vmul.f32 %v1244, 0.5
      %v1246 = vpack.c.bf16 %v1245, %v1245
      %1247 = vset.pattern.permute.xlu0 6
      %1248 = vperm.xlu0 %1247, %v881
      %v1249 = vpop.permute.xlu0 %1248
      %v1251 = vmul.f32 %v1249, %v883
      %1252 = vset.pattern.permute.xlu0 7
      %1253 = vperm.xlu0 %1252, %v881
      %v1254 = vpop.permute.xlu0 %1253
      %v1256 = vmul.f32 %v1254, %v883
      %1258 = vrot.lane.b32.xlu0 %v1256, 112
      %v1259 = vpop.permute.xlu0 %1258
      %v1261 = vadd.f32 %v1251, %v1259
      %v1262 = vmul.f32 %v1261, 0.5
      %v1263 = vpack.c.bf16 %v1262, %v1262
      %s1264 = scalar_lea.vmem [#allocation2], 12
      %v1265 = vld [vmem:[%s1264] sm:$0xf]
      %v1267 = vsel %vm929, %v1265, 0
      %v1270 = vsel %vm929, %v1246, 0
      %1272 = vmatpush.bf16.xpose.msra.mxu0 0
      %1273 = vmatpush.bf16.xpose.msra.mxu0 0
      %1274 = vmatpush.bf16.xpose.msra.mxu0 0
      %1275 = vmatpush.bf16.xpose.msra.mxu0 0
      %1276 = vmatpush.bf16.xpose.msra.mxu0 0
      %1277 = vmatpush.bf16.xpose.msra.mxu0 0
      %1278 = vmatpush.bf16.xpose.msra.mxu0 0
      %1279 = vmatpush.bf16.xpose.msra.mxu0 %v1270
      %1280 = vmatmul.bf16.gmra.mxu0 %v1267
      %v1281 = vpop.f32.mrf.mxu0
      %v1282 = vadd.f32 0.0, %v1281
      %v1283 = vpop.f32.mrf.mxu0
      %1284 = vdwg.mxu0
      %v1285 = vsel %vm891, %v1282, -1e+30
      %s1286 = scalar_lea.vmem [#allocation3], 24
      %v1287 = vld [vmem:[%s1286] sm:$0xff]
      %v1288 = vsel %vm951, %v1285, -inf
      %1289 = vmax.xlane.f32.xlu0 %v1288
      %v1290 = vpop.xlane.xlu0 %1289
      %v1291 = vmax.f32 %v1287, %v1290
      %v1292 = vsub.f32 %v1287, %v1291
      %v1293 = vmul.f32 %v1292, 1.442695
      %v1294 = vpow.pop %v1293
      %1296 = vset.pattern.permute.xlu0 0
      %1297 = vperm.xlu0 %1296, %v1291
      %v1298 = vpop.permute.xlu0 %1297
      %v1300 = vsub.f32 %v1285, %v1298
      %v1301 = vmul.f32 %v1300, 1.442695
      %v1302 = vpow.pop %v1301
      %s1303 = scalar_lea.vmem [#allocation4], 24
      %v1304 = vld [vmem:[%s1303] sm:$0xff]
      %v1305 = vmul.f32 %v1294, %v1304
      %v1306 = vsel %vm951, %v1302, 0.0
      %1307 = vadd.xlane.f32.xlu0 %v1306
      %v1308 = vpop.xlane.xlu0 %1307
      %v1309 = vadd.f32 %v1305, %v1308
      %1310 = vst.msk [vmem:[%s1303] sm:$0xff] %vm973, %v1309
      %s1311 = scalar_lea.vmem [#allocation5], 24
      %v1312 = vld [vmem:[%s1311] sm:$0xff]
      %1314 = vset.pattern.permute.xlu0 0
      %1315 = vperm.xlu0 %1314, %v1294
      %v1316 = vpop.permute.xlu0 %1315
      %v1318 = vmul.f32 %v1316, %v1312
      %v1319 = vpack.c.bf16 %v1302, %v1302
      %v1321 = vsel %vm951, %v1319, 0
      %v1324 = vsel %vm986, %v1263, 0
      %1326 = vmatpush.bf16.msra.mxu0 0
      %1327 = vmatpush.bf16.msra.mxu0 0
      %1328 = vmatpush.bf16.msra.mxu0 0
      %1329 = vmatpush.bf16.msra.mxu0 0
      %1330 = vmatpush.bf16.msra.mxu0 0
      %1331 = vmatpush.bf16.msra.mxu0 0
      %1332 = vmatpush.bf16.msra.mxu0 0
      %1333 = vmatpush.bf16.msra.mxu0 %v1324
      %1334 = vmatmul.bf16.gmra.mxu0 %v1321
      %v1335 = vpop.f32.mrf.mxu0
      %v1336 = vadd.f32 0.0, %v1335
      %v1337 = vpop.f32.mrf.mxu0
      %1338 = vdwg.mxu0
      %v1339 = vadd.f32 %v1318, %v1336
      %1340 = vst.msk [vmem:[%s1311] sm:$0xff] %vm929, %v1339
      %1341 = vst.msk [vmem:[%s1286] sm:$0xff] %vm973, %v1291
      // Predicated region
      $region49: #{_lambda_.10} parent=43 // pred_check
        %p1342 = pneg %p392
      $region50: #{_lambda_.10} parent=43 // pred_check_branch
        %1344 = sbr.rel (%p1342) target = $region52
      $region51: #{_lambda_.10} parent=43 // pred_region
        %v1345 = vld [vmem:[#allocation5] sm:$0xff]
        %v1346 = vld [vmem:[#allocation4] sm:$0xff]
        %v1347 = vrcp.pop %v1346
        %1349 = vset.pattern.permute.xlu0 0
        %1350 = vperm.xlu0 %1349, %v1347
        %v1351 = vpop.permute.xlu0 %1350
        %v1353 = vmul.f32 %v1345, %v1351
        %v1354 = vld [vmem:[%s1087] sm:$0xff]
        %v1355 = vld [vmem:[%s1079] sm:$0xff]
        %v1356 = vrcp.pop %v1355
        %1358 = vset.pattern.permute.xlu0 0
        %1359 = vperm.xlu0 %1358, %v1356
        %v1360 = vpop.permute.xlu0 %1359
        %v1362 = vmul.f32 %v1354, %v1360
        %v1363 = vld [vmem:[%s1199] sm:$0xff]
        %v1364 = vld [vmem:[%s1191] sm:$0xff]
        %v1365 = vrcp.pop %v1364
        %1367 = vset.pattern.permute.xlu0 0
        %1368 = vperm.xlu0 %1367, %v1365
        %v1369 = vpop.permute.xlu0 %1368
        %v1371 = vmul.f32 %v1363, %v1369
        %v1372 = vld [vmem:[%s1311] sm:$0xff]
        %v1373 = vld [vmem:[%s1303] sm:$0xff]
        %v1374 = vrcp.pop %v1373
        %1376 = vset.pattern.permute.xlu0 0
        %1377 = vperm.xlu0 %1376, %v1374
        %v1378 = vpop.permute.xlu0 %1377
        %v1380 = vmul.f32 %v1372, %v1378
        %1382 = vrot.lane.b32.xlu0 %v1362, 16
        %v1383 = vpop.permute.xlu0 %1382
        %1386 = vrot.lane.b32.xlu0 %v1371, 32
        %v1387 = vpop.permute.xlu0 %1386
        %1390 = vrot.lane.b32.xlu0 %v1380, 48
        %v1391 = vpop.permute.xlu0 %1390
        %v1393 = vsel %vm929, %v1353, %v1383
        %vm1394 = vcmask 261120
        %v1395 = vsel %vm1394, %v1393, %v1387
        %vm1396 = vcmask 392192
        %v1397 = vsel %vm1396, %v1395, %v1391
        %v1398 = vpack.c.bf16 %v1397, %v1397
        %vm1399 = vcmask 519168
        %1400 = vst.msk [vmem:[%s390] sm:$0xf] %vm1399, %v1398
      $region52: #{_lambda_.10} parent=43 // pred_fallthru
        _
      %p1401 = scmp.lt.s32.totalorder %s21, 1
      %s1402 = scalar_select %p1401, %s21, 1
      %s1403 = smul.addr %s1402, 4
      %s1404 = scalar_lea.vmem %s6, %s1403
      // Predicated region
      $region53: #{_lambda_.10} parent=43 // pred_check
        %p1405 = pneg %p211
      $region54: #{_lambda_.10} parent=43 // pred_check_branch
        %1407 = sbr.rel (%p1405) target = $region56
      $region55: #{_lambda_.10} parent=43 // pred_region
        _
      $region56: #{_lambda_.10} parent=43 // pred_fallthru
        _
    $region44: #{_lambda_.10} parent=5 // pred_fallthru
      _
    %p1408 = scmp.le.s32.totalorder 2, %s12
    // Predicated region
    $region57: #{_lambda_.10} parent=5 // pred_check
      %p1409 = pneg %p1408
    $region58: #{_lambda_.10} parent=5 // pred_check_branch
      %1411 = sbr.rel (%p1409) target = $region60
    $region59: #{_lambda_.10} parent=5 // pred_region
      %s1412 = ssub.s32 %s12, 2
      // Predicated region
      $region61: #{_lambda_.10} parent=59 // pred_check
        %p1413 = pneg %p217
      $region62: #{_lambda_.10} parent=59 // pred_check_branch
        %1415 = sbr.rel (%p1413) target = $region64
      $region63: #{_lambda_.10} parent=59 // pred_region
        %p1416 = scmp.lt.s32.totalorder %s23, 1
        %s1417 = scalar_select %p1416, %s23, 1
        %s1418 = smul.addr %s1417, 4
        %s1419 = scalar_lea.vmem %s6, %s1418
      $region64: #{_lambda_.10} parent=59 // pred_fallthru
        _
    $region60: #{_lambda_.10} parent=5 // pred_fallthru
      _
  $region6: #{_lambda_.10} parent=0 // loop_footer
    %s16 = sadd.s32 1, %s12
  $region7: #{_lambda_.10} parent=0 // loop_footer_branch
    %11 = sbr.rel target = $region3
  $region8: #{_lambda_.10} parent=0 // loop_exit
    _

</llo_original>
